<compile_context>
chip_gen: v5e
topology: v5e:2x2
jax: 0.10.0
libtpu: 0.0.40
codegen_flags: <defaults>
</compile_context>

<pallas_src>
import jax
import jax.numpy as jnp
from jax.experimental import pallas as pl
from jax.experimental.pallas import tpu as pltpu

IN_FEATURES = 2016
OUT_FEATURES = 1000

TN = 512            # output-lane tile (Nout): 2 blocks -> 2-way TC split on v7x
NOUT_PAD = 1024     # 1000 padded up to a multiple of TN (and of 128)


def _linear_kernel(x_ref, w_ref, b_ref, o_ref):
    # Single full-K GEMV tile: out = x @ W + b, f32 accumulation.
    w = w_ref[...].astype(jnp.float32)          # bf16 (HBM) -> f32 (in VMEM)
    o_ref[...] = (
        jnp.dot(x_ref[...], w, preferred_element_type=jnp.float32)
        + b_ref[...]
    )


def linear_pallas(x2d, w_pad, b_pad):
    """x2d: (N, 2016) f32, w_pad: (2016, NOUT_PAD) bf16, b_pad: (1, NOUT_PAD) f32."""
    N, K = x2d.shape
    Kw, Nout = w_pad.shape
    assert K == Kw and Nout % TN == 0

    flops = 2 * N * K * Nout
    bytes_accessed = (
        4 * x2d.size + 2 * w_pad.size + 4 * b_pad.size + 4 * N * Nout
    )

    return pl.pallas_call(
        _linear_kernel,
        out_shape=jax.ShapeDtypeStruct((N, Nout), jnp.float32),
        grid_spec=pltpu.PrefetchScalarGridSpec(
            num_scalar_prefetch=0,
            grid=(Nout // TN,),                              # Nout halves only
            in_specs=[
                pl.BlockSpec((N, K), lambda n: (0, 0)),      # x: resident
                pl.BlockSpec((K, TN), lambda n: (0, n)),     # W: full-K column tile
                pl.BlockSpec((1, TN), lambda n: (0, n)),     # bias
            ],
            out_specs=pl.BlockSpec((N, TN), lambda n: (0, n)),
        ),
        compiler_params=pltpu.CompilerParams(
            dimension_semantics=("parallel",),
            vmem_limit_bytes=12 << 20,
        ),
        cost_estimate=pl.CostEstimate(
            flops=flops, bytes_accessed=bytes_accessed, transcendentals=0
        ),
    )(x2d, w_pad, b_pad)


def prepare_params(w, b):
    """One-time prep: pad Nout to 1024 and cast W to bfloat16 (zero padding)."""
    K, Nout = w.shape
    w_pad = (
        jnp.zeros((K, NOUT_PAD), jnp.bfloat16)
        .at[:, :Nout]
        .set(w.astype(jnp.bfloat16))
    )
    b_pad = jnp.zeros((1, NOUT_PAD), jnp.float32).at[0, :Nout].set(b)
    return w_pad, b_pad


def forward(x_nchw, w_pad, b_pad):
    # x285 = x284.flatten(start_dim=1)
    N = x_nchw.shape[0]
    x2d = x_nchw.reshape(N, -1)                   # (N, 2016), no K padding needed
    # x286 = self.linear0(x285)
    out_pad = linear_pallas(x2d, w_pad, b_pad)    # (N, 1024)
    return out_pad[:, :OUT_FEATURES]              # (N, 1000)


if __name__ == "__main__":
    key = jax.random.PRNGKey(0)
    kx, kw, kb = jax.random.split(key, 3)

    # Module input: torch.randn([1, 2016, 1, 1])
    x = jax.random.normal(kx, (1, IN_FEATURES, 1, 1), dtype=jnp.float32)

    # Deterministic parameter init (PyTorch Linear-style uniform bounds),
    # stored as (in_features, out_features) so the kernel computes x @ W + b.
    bound = 1.0 / (IN_FEATURES ** 0.5)
    w = jax.random.uniform(
        kw, (IN_FEATURES, OUT_FEATURES), minval=-bound, maxval=bound,
        dtype=jnp.float32,
    )
    b = jax.random.uniform(
        kb, (OUT_FEATURES,), minval=-bound, maxval=bound, dtype=jnp.float32
    )

    w_pad, b_pad = prepare_params(w, b)

    out = forward(x, w_pad, b_pad)
    out = jax.block_until_ready(out)

    # Reference uses the same bf16-stored weights (the kernel's numerics),
    # accumulated in f32.
    w_ref = w.astype(jnp.bfloat16).astype(jnp.float32)
    ref = x.reshape(1, -1) @ w_ref + b
    assert out.shape == (1, OUT_FEATURES)
    assert jnp.allclose(out, ref, atol=1e-3, rtol=1e-3)

    print("KERNEL_OK")
</pallas_src>

<mosaic_0001>
module attributes {stable_mosaic.version = 11 : i64} {
  func.func @_linear_kernel(%arg0: i32, %arg1: memref<1x2016xf32, #tpu.memory_space<vmem>>, %arg2: memref<2016x512xbf16, #tpu.memory_space<vmem>>, %arg3: memref<1x512xf32, #tpu.memory_space<vmem>>, %arg4: memref<1x512xf32, #tpu.memory_space<vmem>>) attributes {dimension_semantics = [#tpu.dimension_semantics<parallel>], iteration_bounds = array<i64: 2>, scalar_prefetch = 0 : i64, scratch_operands = 0 : i64, tpu.core_type = #tpu.core_type<tc>, window_params = [{pipeline_mode = #tpu.pipeline_mode<synchronous>, transform_indices = @transform_0, window_bounds = array<i64: 1, 2016>}, {transform_indices = @transform_1, window_bounds = array<i64: 2016, 512>}, {transform_indices = @transform_2, window_bounds = array<i64: 1, 512>}, {transform_indices = @transform_3, window_bounds = array<i64: 1, 512>}]} {
    %c0 = arith.constant 0 : index
    %c0_0 = arith.constant 0 : index
    %0 = vector.load %arg2[%c0, %c0_0] : memref<2016x512xbf16, #tpu.memory_space<vmem>>, vector<2016x512xbf16>
    %1 = arith.extf %0 : vector<2016x512xbf16> to vector<2016x512xf32>
    %c0_1 = arith.constant 0 : index
    %c0_2 = arith.constant 0 : index
    %2 = vector.load %arg1[%c0_1, %c0_2] : memref<1x2016xf32, #tpu.memory_space<vmem>>, vector<1x2016xf32>
    %cst = arith.constant dense<0.000000e+00> : vector<1x512xf32>
    %3 = tpu.matmul %2, %1, %cst {dimension_numbers = #tpu.dot_dimension_numbers<[1], [0], [0], [1], [0, 0, 1, 1], [], []>} : vector<1x2016xf32>, vector<2016x512xf32>, vector<1x512xf32> -> vector<1x512xf32>
    %c0_3 = arith.constant 0 : index
    %c0_4 = arith.constant 0 : index
    %4 = vector.load %arg3[%c0_3, %c0_4] : memref<1x512xf32, #tpu.memory_space<vmem>>, vector<1x512xf32>
    %5 = arith.addf %3, %4 : vector<1x512xf32>
    %c0_5 = arith.constant 0 : index
    %c0_6 = arith.constant 0 : index
    %6 = vector.load %arg4[%c0_5, %c0_6] : memref<1x512xf32, #tpu.memory_space<vmem>>, vector<1x512xf32>
    tpu.vector_store %arg4[%c0_5, %c0_6], %5 {strides = array<i32>} : memref<1x512xf32, #tpu.memory_space<vmem>>, vector<1x512xf32>,
    return
  }
  func.func @transform_0(%arg0: i32) -> (i32, i32) {
    %c0_i32 = arith.constant 0 : i32
    %c0_i32_0 = arith.constant 0 : i32
    %c0_i32_1 = arith.constant 0 : i32
    return %c0_i32, %c0_i32_0 : i32, i32
  }
  func.func @transform_1(%arg0: i32) -> (i32, i32) {
    %c0_i32 = arith.constant 0 : i32
    %c0_i32_0 = arith.constant 0 : i32
    return %c0_i32, %arg0 : i32, i32
  }
  func.func @transform_2(%arg0: i32) -> (i32, i32) {
    %c0_i32 = arith.constant 0 : i32
    %c0_i32_0 = arith.constant 0 : i32
    return %c0_i32, %arg0 : i32, i32
  }
  func.func @transform_3(%arg0: i32) -> (i32, i32) {
    %c0_i32 = arith.constant 0 : i32
    %c0_i32_0 = arith.constant 0 : i32
    return %c0_i32, %arg0 : i32, i32
  }
}

</mosaic_0001>

<llo_original>
// kernel: tpu_custom_call.1
$region0: #{tpu_custom_call.1}
  #allocation0 [shape = 'u32[]', space=smem, size = 0x4, offset = 0x4, fixed_abs, tag = 'smem constant byte address 0x4 - core index']
  #allocation1 [shape = 'u32[72,128]{1,0:T(1,128)}', space=vmem, size = 0x9000, scoped, tag = 'internal scratch']
  %s0 = inlined_call_operand.hbm [shape: f32[1,2016], index: 0, kind: input, shape index: {}]
  %s1 = inlined_call_operand.hbm [shape: bf16[2016,1024], index: 1, kind: input, shape index: {}]
  %s2 = inlined_call_operand.hbm [shape: f32[1,1024], index: 2, kind: input, shape index: {}]
  %s3 = inlined_call_operand.hbm [shape: f32[1,1024], index: 3, kind: output, shape index: {}]
  %s4 = sld [smem:[#allocation0]]
  $region57: #{tpu_custom_call.1} parent=0
    _
  %s6 = ssub.s32 1, %s4
  %s7 = scalar_select 0, %s6, %s4
  $region1: #{tpu_custom_call.1} parent=0
    #allocation2 [shape = 'u8[8192]{0}', space=vmem, size = 0x2000, scoped, tag = 'input window, operand 0, single buffered']
    #allocation3 [shape = 's32[2]{0}', space=sflag, size = 0x8, scoped, tag = 'scoped memory for tpu_custom_call.1']
    #allocation4 [shape = 's32[2]{0}', space=sflag, size = 0x8, scoped, tag = 'scoped memory for tpu_custom_call.1']
    #allocation5 [shape = 'u8[4128768]{0}', space=vmem, size = 0x3f0000, scoped, tag = 'input window, operand 1']
    #allocation6 [shape = 's32[2]{0}', space=sflag, size = 0x8, scoped, tag = 'scoped memory for tpu_custom_call.1']
    #allocation7 [shape = 'u8[4096]{0}', space=vmem, size = 0x1000, scoped, tag = 'input window, operand 2']
    #allocation8 [shape = 'u8[4096]{0}', space=vmem, size = 0x1000, scoped, tag = 'output window, operand 0']
    %8 = vsyncpa [#allocation3], 0
    %9 = vsyncpa [#allocation6], 0
    %s10 = scalar_lea.sflag [#allocation6], 1
    %11 = vsyncpa %s10, 0
    %12 = vsyncpa [#allocation4], 0
    %s13 = scalar_lea.sflag [#allocation4], 1
    %14 = vsyncpa %s13, 0
    loop: start=0, step=1, limit=4
    $region2: #{tpu_custom_call.1} parent=1 // loop_pre_header
      _
    $region3: #{tpu_custom_call.1} parent=1 // loop_header
      %s16 = sphi 0, %s20
      %p17 = scmp.ge.s32.totalorder %s16, 4
      %s24 = sphi 0, %s24
      %s26 = sphi 0, %s24
      %s27 = sphi 0, %s26
      %s41 = sphi 0, %s27
      %s47 = sphi 0, %s49
      %s50 = sphi 0, %s47
      %s51 = sphi 0, %s50
      %s67 = sphi 0, %s51
      %s73 = sphi 0, %s75
      %s76 = sphi 0, %s73
      %s77 = sphi 0, %s76
      %s93 = sphi 0, %s77
      %s99 = sphi 0, %s101
      %s102 = sphi 0, %s99
      %s103 = sphi 0, %s102
      %s119 = sphi 0, %s103
    $region4: #{tpu_custom_call.1} parent=1 // loop_header_branch
      %19 = sbr.rel (%p17) target = $region8
    $region5: #{tpu_custom_call.1} parent=1 // loop_body
      %s21 = ssub.s32 %s16, 1
      %s22 = ssub.s32 %s16, 2
      %s23 = sadd.s32 %s16, 1
      %s25 = sadd.s32 %s24, 1
      %p28 = scmp.eq.s32.totalorder %s16, 1
      %p29 = scmp.ne.s32.totalorder %s24, %s26
      %p30 = scmp.eq.s32.totalorder %s16, 0
      %p31 = por %p29, %p30
      %p32 = scmp.ne.s32.totalorder %s24, %s26
      %p33 = scmp.eq.s32.totalorder %s21, 1
      %p34 = por %p32, %p33
      %p35 = scmp.ne.s32.totalorder %s26, %s27
      %p36 = scmp.eq.s32.totalorder %s21, 0
      %p37 = por %p35, %p36
      %p38 = scmp.ne.s32.totalorder %s26, %s27
      %p39 = scmp.eq.s32.totalorder %s22, 1
      %p40 = por %p38, %p39
      %p42 = scmp.ne.s32.totalorder %s27, %s41
      %p43 = scmp.eq.s32.totalorder %s22, 0
      %p44 = por %p42, %p43
      %s45 = ssub.s32 %s16, %s23
      %p46 = scmp.eq.s32.totalorder %s45, 0
      %s48 = sadd.s32 %s47, 1
      %s49 = scalar_select %p46, %s47, %s48
      %p52 = pneg %p46
      %p53 = scmp.eq.s32.totalorder %s16, 1
      %p54 = por %p52, %p53
      %p55 = scmp.ne.s32.totalorder %s47, %s50
      %p56 = scmp.eq.s32.totalorder %s16, 0
      %p57 = por %p55, %p56
      %p58 = scmp.ne.s32.totalorder %s47, %s50
      %p59 = scmp.eq.s32.totalorder %s21, 1
      %p60 = por %p58, %p59
      %p61 = scmp.ne.s32.totalorder %s50, %s51
      %p62 = scmp.eq.s32.totalorder %s21, 0
      %p63 = por %p61, %p62
      %p64 = scmp.ne.s32.totalorder %s50, %s51
      %p65 = scmp.eq.s32.totalorder %s22, 1
      %p66 = por %p64, %p65
      %p68 = scmp.ne.s32.totalorder %s51, %s67
      %p69 = scmp.eq.s32.totalorder %s22, 0
      %p70 = por %p68, %p69
      %s71 = ssub.s32 %s16, %s23
      %p72 = scmp.eq.s32.totalorder %s71, 0
      %s74 = sadd.s32 %s73, 1
      %s75 = scalar_select %p72, %s73, %s74
      %p78 = pneg %p72
      %p79 = scmp.eq.s32.totalorder %s16, 1
      %p80 = por %p78, %p79
      %p81 = scmp.ne.s32.totalorder %s73, %s76
      %p82 = scmp.eq.s32.totalorder %s16, 0
      %p83 = por %p81, %p82
      %p84 = scmp.ne.s32.totalorder %s73, %s76
      %p85 = scmp.eq.s32.totalorder %s21, 1
      %p86 = por %p84, %p85
      %p87 = scmp.ne.s32.totalorder %s76, %s77
      %p88 = scmp.eq.s32.totalorder %s21, 0
      %p89 = por %p87, %p88
      %p90 = scmp.ne.s32.totalorder %s76, %s77
      %p91 = scmp.eq.s32.totalorder %s22, 1
      %p92 = por %p90, %p91
      %p94 = scmp.ne.s32.totalorder %s77, %s93
      %p95 = scmp.eq.s32.totalorder %s22, 0
      %p96 = por %p94, %p95
      %s97 = ssub.s32 %s16, %s23
      %p98 = scmp.eq.s32.totalorder %s97, 0
      %s100 = sadd.s32 %s99, 1
      %s101 = scalar_select %p98, %s99, %s100
      %p104 = pneg %p98
      %p105 = scmp.eq.s32.totalorder %s16, 1
      %p106 = por %p104, %p105
      %p107 = scmp.ne.s32.totalorder %s99, %s102
      %p108 = scmp.eq.s32.totalorder %s16, 0
      %p109 = por %p107, %p108
      %p110 = scmp.ne.s32.totalorder %s99, %s102
      %p111 = scmp.eq.s32.totalorder %s21, 1
      %p112 = por %p110, %p111
      %p113 = scmp.ne.s32.totalorder %s102, %s103
      %p114 = scmp.eq.s32.totalorder %s21, 0
      %p115 = por %p113, %p114
      %p116 = scmp.ne.s32.totalorder %s102, %s103
      %p117 = scmp.eq.s32.totalorder %s22, 1
      %p118 = por %p116, %p117
      %p120 = scmp.ne.s32.totalorder %s103, %s119
      %p121 = scmp.eq.s32.totalorder %s22, 0
      %p122 = por %p120, %p121
      %p123 = scmp.le.s32.totalorder 1, %s16
      %p124 = scmp.lt.s32.totalorder %s16, 3
      %p125 = pnand %p123, %p124
      %p126 = pneg %p125
      // Predicated region
      $region9: #{tpu_custom_call.1} parent=5 // pred_check
        _
      $region10: #{tpu_custom_call.1} parent=5 // pred_check_branch
        %128 = sbr.rel (%p125) target = $region12
      $region11: #{tpu_custom_call.1} parent=5 // pred_region
        %s129 = ssub.s32 %s16, 1
        // Predicated region
        $region13: #{tpu_custom_call.1} parent=11 // pred_check
          %p130 = pneg %p37
        $region14: #{tpu_custom_call.1} parent=11 // pred_check_branch
          %132 = sbr.rel (%p130) target = $region16
        $region15: #{tpu_custom_call.1} parent=11 // pred_region
          %134 = vsyncadd [#allocation3], 0
          %s136 = sshll.u32 %s0, 4
          %s137 = int_to_ptr.hbm [resolvable:$true] %s136
          %s138 = sshll.u32 [#allocation2], 4
          %s139 = int_to_ptr.vmem [resolvable:$true] %s138
          %141 = dma.hbm_to_vmem [thread:$0]  %s137, 256, %s139, [#allocation3]
        $region16: #{tpu_custom_call.1} parent=11 // pred_fallthru
          _
      $region12: #{tpu_custom_call.1} parent=5 // pred_fallthru
        _
      %p142 = scmp.lt.s32.totalorder %s16, 2
      // Predicated region
      $region17: #{tpu_custom_call.1} parent=5 // pred_check
        %p143 = pneg %p142
      $region18: #{tpu_custom_call.1} parent=5 // pred_check_branch
        %145 = sbr.rel (%p143) target = $region20
      $region19: #{tpu_custom_call.1} parent=5 // pred_region
        // Predicated region
        $region21: #{tpu_custom_call.1} parent=19 // pred_check
          %p146 = pneg %p57
        $region22: #{tpu_custom_call.1} parent=19 // pred_check_branch
          %148 = sbr.rel (%p146) target = $region24
        $region23: #{tpu_custom_call.1} parent=19 // pred_region
          %s149 = sand.u32 %s16, 1
          %s150 = scalar_lea.sflag [#allocation6], %s149
          %s151 = sand.u32 %s47, 1
          %s152 = smul.addr %s151, 4032
          %s153 = scalar_lea.vmem [#allocation5], %s152
          %s154 = smul.u32 4, %s16
          %156 = vsyncadd %s150, 0
          %s157 = smul.addr %s154, 4
          %s158 = scalar_lea.hbm %s1, %s157
          %s159 = sshll.u32 %s158, 4
          %s160 = int_to_ptr.hbm [resolvable:$true] %s159
          %s161 = sshll.u32 %s153, 4
          %s162 = int_to_ptr.vmem [resolvable:$true] %s161
          %167 = dma.hbm_to_vmem [thread:$0]  %s160, 64512, %s162, %s150, 512, 256, 16
        $region24: #{tpu_custom_call.1} parent=19 // pred_fallthru
          _
        // Predicated region
        $region25: #{tpu_custom_call.1} parent=19 // pred_check
          %p168 = pneg %p83
        $region26: #{tpu_custom_call.1} parent=19 // pred_check_branch
          %170 = sbr.rel (%p168) target = $region28
        $region27: #{tpu_custom_call.1} parent=19 // pred_region
          %s171 = sand.u32 %s16, 1
          %s172 = scalar_lea.sflag [#allocation6], %s171
          %s173 = sand.u32 %s73, 1
          %s174 = smul.addr %s173, 4
          %s175 = scalar_lea.vmem [#allocation7], %s174
          %s176 = smul.u32 4, %s16
          %178 = vsyncadd %s172, 0
          %s179 = scalar_lea.hbm %s2, %s176
          %s181 = sshll.u32 %s179, 4
          %s182 = int_to_ptr.hbm [resolvable:$true] %s181
          %s183 = sshll.u32 %s175, 4
          %s184 = int_to_ptr.vmem [resolvable:$true] %s183
          %186 = dma.hbm_to_vmem [thread:$0]  %s182, 64, %s184, %s172
        $region28: #{tpu_custom_call.1} parent=19 // pred_fallthru
          _
      $region20: #{tpu_custom_call.1} parent=5 // pred_fallthru
        _
      %p187 = scmp.le.s32.totalorder 1, %s16
      %p188 = scmp.lt.s32.totalorder %s16, 3
      %p189 = pnand %p187, %p188
      %p190 = pneg %p189
      // Predicated region
      $region29: #{tpu_custom_call.1} parent=5 // pred_check
        _
      $region30: #{tpu_custom_call.1} parent=5 // pred_check_branch
        %192 = sbr.rel (%p189) target = $region32
      $region31: #{tpu_custom_call.1} parent=5 // pred_region
        %s193 = ssub.s32 %s16, 1
        // Predicated region
        $region33: #{tpu_custom_call.1} parent=31 // pred_check
          %p194 = pneg %p37
        $region34: #{tpu_custom_call.1} parent=31 // pred_check_branch
          %196 = sbr.rel (%p194) target = $region36
        $region35: #{tpu_custom_call.1} parent=31 // pred_region
          %198 = dma.done [#allocation3], 256
        $region36: #{tpu_custom_call.1} parent=31 // pred_fallthru
          _
        %s199 = sand.u32 %s21, 1
        %s200 = scalar_lea.sflag [#allocation6], %s199
        %s201 = sand.u32 %s50, 1
        %s202 = smul.addr %s201, 4032
        %s203 = scalar_lea.vmem [#allocation5], %s202
        // Predicated region
        $region37: #{tpu_custom_call.1} parent=31 // pred_check
          %p204 = pneg %p63
        $region38: #{tpu_custom_call.1} parent=31 // pred_check_branch
          %206 = sbr.rel (%p204) target = $region40
        $region39: #{tpu_custom_call.1} parent=31 // pred_region
          %208 = dma.done %s200, 64512
        $region40: #{tpu_custom_call.1} parent=31 // pred_fallthru
          _
        %s209 = sand.u32 %s21, 1
        %s210 = scalar_lea.sflag [#allocation6], %s209
        %s211 = sand.u32 %s76, 1
        %s212 = smul.addr %s211, 4
        %s213 = scalar_lea.vmem [#allocation7], %s212
        // Predicated region
        $region41: #{tpu_custom_call.1} parent=31 // pred_check
          %p214 = pneg %p89
        $region42: #{tpu_custom_call.1} parent=31 // pred_check_branch
          %216 = sbr.rel (%p214) target = $region44
        $region43: #{tpu_custom_call.1} parent=31 // pred_region
          %218 = dma.done %s210, 64
        $region44: #{tpu_custom_call.1} parent=31 // pred_fallthru
          _
        %p219 = pneg %p37
        %p220 = pneg %p34
        %s221 = sand.u32 %s21, 1
        %s222 = scalar_lea.sflag [#allocation6], %s221
        %s223 = sand.u32 %s50, 1
        %s224 = smul.addr %s223, 4032
        %s225 = scalar_lea.vmem [#allocation5], %s224
        %p226 = pneg %p63
        %p227 = pneg %p60
        %s228 = sand.u32 %s21, 1
        %s229 = scalar_lea.sflag [#allocation6], %s228
        %s230 = sand.u32 %s76, 1
        %s231 = smul.addr %s230, 4
        %s232 = scalar_lea.vmem [#allocation7], %s231
        %p233 = pneg %p89
        %p234 = pneg %p86
        %p235 = pneg %p115
        %p236 = pneg %p112
        %s237 = sand.u32 %s102, 1
        %s238 = scalar_lea.sflag [#allocation4], %s237
        %s239 = sand.u32 %s102, 1
        %s240 = smul.addr %s239, 4
        %s241 = scalar_lea.vmem [#allocation8], %s240
        %s242 = smul.u32 4, %s21
        %s243 = smul.u32 4, %s21
        %s244 = smul.u32 4, %s21
        %v245 = vld [vmem:[%s203] sm:$0xff]
        %v246 = vld [vmem:[%s203 + $0x8] sm:$0xff]
        %v247 = vld [vmem:[%s203 + $0x10] sm:$0xff]
        %v248 = vld [vmem:[%s203 + $0x18] sm:$0xff]
        %v249 = vld [vmem:[%s203 + $0x20] sm:$0xff]
        %v250 = vld [vmem:[%s203 + $0x28] sm:$0xff]
        %v251 = vld [vmem:[%s203 + $0x30] sm:$0xff]
        %v252 = vld [vmem:[%s203 + $0x38] sm:$0xff]
        %v253 = vld [vmem:[%s203 + $0x40] sm:$0xff]
        %v254 = vld [vmem:[%s203 + $0x48] sm:$0xff]
        %v255 = vld [vmem:[%s203 + $0x50] sm:$0xff]
        %v256 = vld [vmem:[%s203 + $0x58] sm:$0xff]
        %v257 = vld [vmem:[%s203 + $0x60] sm:$0xff]
        %v258 = vld [vmem:[%s203 + $0x68] sm:$0xff]
        %v259 = vld [vmem:[%s203 + $0x70] sm:$0xff]
        %v260 = vld [vmem:[%s203 + $0x78] sm:$0xff]
        %v261 = vld [vmem:[%s203 + $0x80] sm:$0xff]
        %v262 = vld [vmem:[%s203 + $0x88] sm:$0xff]
        %v263 = vld [vmem:[%s203 + $0x90] sm:$0xff]
        %v264 = vld [vmem:[%s203 + $0x98] sm:$0xff]
        %v265 = vld [vmem:[%s203 + $0xa0] sm:$0xff]
        %v266 = vld [vmem:[%s203 + $0xa8] sm:$0xff]
        %v267 = vld [vmem:[%s203 + $0xb0] sm:$0xff]
        %v268 = vld [vmem:[%s203 + $0xb8] sm:$0xff]
        %v269 = vld [vmem:[%s203 + $0xc0] sm:$0xff]
        %v270 = vld [vmem:[%s203 + $0xc8] sm:$0xff]
        %v271 = vld [vmem:[%s203 + $0xd0] sm:$0xff]
        %v272 = vld [vmem:[%s203 + $0xd8] sm:$0xff]
        %v273 = vld [vmem:[%s203 + $0xe0] sm:$0xff]
        %v274 = vld [vmem:[%s203 + $0xe8] sm:$0xff]
        %v275 = vld [vmem:[%s203 + $0xf0] sm:$0xff]
        %v276 = vld [vmem:[%s203 + $0xf8] sm:$0xff]
        %v277 = vld [vmem:[%s203 + $0x100] sm:$0xff]
        %v278 = vld [vmem:[%s203 + $0x108] sm:$0xff]
        %v279 = vld [vmem:[%s203 + $0x110] sm:$0xff]
        %v280 = vld [vmem:[%s203 + $0x118] sm:$0xff]
        %v281 = vld [vmem:[%s203 + $0x120] sm:$0xff]
        %v282 = vld [vmem:[%s203 + $0x128] sm:$0xff]
        %v283 = vld [vmem:[%s203 + $0x130] sm:$0xff]
        %v284 = vld [vmem:[%s203 + $0x138] sm:$0xff]
        %v285 = vld [vmem:[%s203 + $0x140] sm:$0xff]
        %v286 = vld [vmem:[%s203 + $0x148] sm:$0xff]
        %v287 = vld [vmem:[%s203 + $0x150] sm:$0xff]
        %v288 = vld [vmem:[%s203 + $0x158] sm:$0xff]
        %v289 = vld [vmem:[%s203 + $0x160] sm:$0xff]
        %v290 = vld [vmem:[%s203 + $0x168] sm:$0xff]
        %v291 = vld [vmem:[%s203 + $0x170] sm:$0xff]
        %v292 = vld [vmem:[%s203 + $0x178] sm:$0xff]
        %v293 = vld [vmem:[%s203 + $0x180] sm:$0xff]
        %v294 = vld [vmem:[%s203 + $0x188] sm:$0xff]
        %v295 = vld [vmem:[%s203 + $0x190] sm:$0xff]
        %v296 = vld [vmem:[%s203 + $0x198] sm:$0xff]
        %v297 = vld [vmem:[%s203 + $0x1a0] sm:$0xff]
        %v298 = vld [vmem:[%s203 + $0x1a8] sm:$0xff]
        %v299 = vld [vmem:[%s203 + $0x1b0] sm:$0xff]
        %v300 = vld [vmem:[%s203 + $0x1b8] sm:$0xff]
        %v301 = vld [vmem:[%s203 + $0x1c0] sm:$0xff]
        %v302 = vld [vmem:[%s203 + $0x1c8] sm:$0xff]
        %v303 = vld [vmem:[%s203 + $0x1d0] sm:$0xff]
        %v304 = vld [vmem:[%s203 + $0x1d8] sm:$0xff]
        %v305 = vld [vmem:[%s203 + $0x1e0] sm:$0xff]
        %v306 = vld [vmem:[%s203 + $0x1e8] sm:$0xff]
        %v307 = vld [vmem:[%s203 + $0x1f0] sm:$0xff]
        %v308 = vld [vmem:[%s203 + $0x1f8] sm:$0xff]
        %v309 = vld [vmem:[%s203 + $0x200] sm:$0xff]
        %v310 = vld [vmem:[%s203 + $0x208] sm:$0xff]
        %v311 = vld [vmem:[%s203 + $0x210] sm:$0xff]
        %v312 = vld [vmem:[%s203 + $0x218] sm:$0xff]
        %v313 = vld [vmem:[%s203 + $0x220] sm:$0xff]
        %v314 = vld [vmem:[%s203 + $0x228] sm:$0xff]
        %v315 = vld [vmem:[%s203 + $0x230] sm:$0xff]
        %v316 = vld [vmem:[%s203 + $0x238] sm:$0xff]
        %v317 = vld [vmem:[%s203 + $0x240] sm:$0xff]
        %v318 = vld [vmem:[%s203 + $0x248] sm:$0xff]
        %v319 = vld [vmem:[%s203 + $0x250] sm:$0xff]
        %v320 = vld [vmem:[%s203 + $0x258] sm:$0xff]
        %v321 = vld [vmem:[%s203 + $0x260] sm:$0xff]
        %v322 = vld [vmem:[%s203 + $0x268] sm:$0xff]
        %v323 = vld [vmem:[%s203 + $0x270] sm:$0xff]
        %v324 = vld [vmem:[%s203 + $0x278] sm:$0xff]
        %v325 = vld [vmem:[%s203 + $0x280] sm:$0xff]
        %v326 = vld [vmem:[%s203 + $0x288] sm:$0xff]
        %v327 = vld [vmem:[%s203 + $0x290] sm:$0xff]
        %v328 = vld [vmem:[%s203 + $0x298] sm:$0xff]
        %v329 = vld [vmem:[%s203 + $0x2a0] sm:$0xff]
        %v330 = vld [vmem:[%s203 + $0x2a8] sm:$0xff]
        %v331 = vld [vmem:[%s203 + $0x2b0] sm:$0xff]
        %v332 = vld [vmem:[%s203 + $0x2b8] sm:$0xff]
        %v333 = vld [vmem:[%s203 + $0x2c0] sm:$0xff]
        %v334 = vld [vmem:[%s203 + $0x2c8] sm:$0xff]
        %v335 = vld [vmem:[%s203 + $0x2d0] sm:$0xff]
        %v336 = vld [vmem:[%s203 + $0x2d8] sm:$0xff]
        %v337 = vld [vmem:[%s203 + $0x2e0] sm:$0xff]
        %v338 = vld [vmem:[%s203 + $0x2e8] sm:$0xff]
        %v339 = vld [vmem:[%s203 + $0x2f0] sm:$0xff]
        %v340 = vld [vmem:[%s203 + $0x2f8] sm:$0xff]
        %v341 = vld [vmem:[%s203 + $0x300] sm:$0xff]
        %v342 = vld [vmem:[%s203 + $0x308] sm:$0xff]
        %v343 = vld [vmem:[%s203 + $0x310] sm:$0xff]
        %v344 = vld [vmem:[%s203 + $0x318] sm:$0xff]
        %v345 = vld [vmem:[%s203 + $0x320] sm:$0xff]
        %v346 = vld [vmem:[%s203 + $0x328] sm:$0xff]
        %v347 = vld [vmem:[%s203 + $0x330] sm:$0xff]
        %v348 = vld [vmem:[%s203 + $0x338] sm:$0xff]
        %v349 = vld [vmem:[%s203 + $0x340] sm:$0xff]
        %v350 = vld [vmem:[%s203 + $0x348] sm:$0xff]
        %v351 = vld [vmem:[%s203 + $0x350] sm:$0xff]
        %v352 = vld [vmem:[%s203 + $0x358] sm:$0xff]
        %v353 = vld [vmem:[%s203 + $0x360] sm:$0xff]
        %v354 = vld [vmem:[%s203 + $0x368] sm:$0xff]
        %v355 = vld [vmem:[%s203 + $0x370] sm:$0xff]
        %v356 = vld [vmem:[%s203 + $0x378] sm:$0xff]
        %v357 = vld [vmem:[%s203 + $0x380] sm:$0xff]
        %v358 = vld [vmem:[%s203 + $0x388] sm:$0xff]
        %v359 = vld [vmem:[%s203 + $0x390] sm:$0xff]
        %v360 = vld [vmem:[%s203 + $0x398] sm:$0xff]
        %v361 = vld [vmem:[%s203 + $0x3a0] sm:$0xff]
        %v362 = vld [vmem:[%s203 + $0x3a8] sm:$0xff]
        %v363 = vld [vmem:[%s203 + $0x3b0] sm:$0xff]
        %v364 = vld [vmem:[%s203 + $0x3b8] sm:$0xff]
        %v365 = vld [vmem:[%s203 + $0x3c0] sm:$0xff]
        %v366 = vld [vmem:[%s203 + $0x3c8] sm:$0xff]
        %v367 = vld [vmem:[%s203 + $0x3d0] sm:$0xff]
        %v368 = vld [vmem:[%s203 + $0x3d8] sm:$0xff]
        %v369 = vld [vmem:[%s203 + $0x3e0] sm:$0xff]
        %v370 = vld [vmem:[%s203 + $0x3e8] sm:$0xff]
        %v371 = vld [vmem:[%s203 + $0x3f0] sm:$0xff]
        %v372 = vld [vmem:[%s203 + $0x3f8] sm:$0xff]
        %v373 = vld [vmem:[%s203 + $0x400] sm:$0xff]
        %v374 = vld [vmem:[%s203 + $0x408] sm:$0xff]
        %v375 = vld [vmem:[%s203 + $0x410] sm:$0xff]
        %v376 = vld [vmem:[%s203 + $0x418] sm:$0xff]
        %v377 = vld [vmem:[%s203 + $0x420] sm:$0xff]
        %v378 = vld [vmem:[%s203 + $0x428] sm:$0xff]
        %v379 = vld [vmem:[%s203 + $0x430] sm:$0xff]
        %v380 = vld [vmem:[%s203 + $0x438] sm:$0xff]
        %v381 = vld [vmem:[%s203 + $0x440] sm:$0xff]
        %v382 = vld [vmem:[%s203 + $0x448] sm:$0xff]
        %v383 = vld [vmem:[%s203 + $0x450] sm:$0xff]
        %v384 = vld [vmem:[%s203 + $0x458] sm:$0xff]
        %v385 = vld [vmem:[%s203 + $0x460] sm:$0xff]
        %v386 = vld [vmem:[%s203 + $0x468] sm:$0xff]
        %v387 = vld [vmem:[%s203 + $0x470] sm:$0xff]
        %v388 = vld [vmem:[%s203 + $0x478] sm:$0xff]
        %v389 = vld [vmem:[%s203 + $0x480] sm:$0xff]
        %v390 = vld [vmem:[%s203 + $0x488] sm:$0xff]
        %v391 = vld [vmem:[%s203 + $0x490] sm:$0xff]
        %v392 = vld [vmem:[%s203 + $0x498] sm:$0xff]
        %v393 = vld [vmem:[%s203 + $0x4a0] sm:$0xff]
        %v394 = vld [vmem:[%s203 + $0x4a8] sm:$0xff]
        %v395 = vld [vmem:[%s203 + $0x4b0] sm:$0xff]
        %v396 = vld [vmem:[%s203 + $0x4b8] sm:$0xff]
        %v397 = vld [vmem:[%s203 + $0x4c0] sm:$0xff]
        %v398 = vld [vmem:[%s203 + $0x4c8] sm:$0xff]
        %v399 = vld [vmem:[%s203 + $0x4d0] sm:$0xff]
        %v400 = vld [vmem:[%s203 + $0x4d8] sm:$0xff]
        %v401 = vld [vmem:[%s203 + $0x4e0] sm:$0xff]
        %v402 = vld [vmem:[%s203 + $0x4e8] sm:$0xff]
        %v403 = vld [vmem:[%s203 + $0x4f0] sm:$0xff]
        %v404 = vld [vmem:[%s203 + $0x4f8] sm:$0xff]
        %v405 = vld [vmem:[%s203 + $0x500] sm:$0xff]
        %v406 = vld [vmem:[%s203 + $0x508] sm:$0xff]
        %v407 = vld [vmem:[%s203 + $0x510] sm:$0xff]
        %v408 = vld [vmem:[%s203 + $0x518] sm:$0xff]
        %v409 = vld [vmem:[%s203 + $0x520] sm:$0xff]
        %v410 = vld [vmem:[%s203 + $0x528] sm:$0xff]
        %v411 = vld [vmem:[%s203 + $0x530] sm:$0xff]
        %v412 = vld [vmem:[%s203 + $0x538] sm:$0xff]
        %v413 = vld [vmem:[%s203 + $0x540] sm:$0xff]
        %v414 = vld [vmem:[%s203 + $0x548] sm:$0xff]
        %v415 = vld [vmem:[%s203 + $0x550] sm:$0xff]
        %v416 = vld [vmem:[%s203 + $0x558] sm:$0xff]
        %v417 = vld [vmem:[%s203 + $0x560] sm:$0xff]
        %v418 = vld [vmem:[%s203 + $0x568] sm:$0xff]
        %v419 = vld [vmem:[%s203 + $0x570] sm:$0xff]
        %v420 = vld [vmem:[%s203 + $0x578] sm:$0xff]
        %v421 = vld [vmem:[%s203 + $0x580] sm:$0xff]
        %v422 = vld [vmem:[%s203 + $0x588] sm:$0xff]
        %v423 = vld [vmem:[%s203 + $0x590] sm:$0xff]
        %v424 = vld [vmem:[%s203 + $0x598] sm:$0xff]
        %v425 = vld [vmem:[%s203 + $0x5a0] sm:$0xff]
        %v426 = vld [vmem:[%s203 + $0x5a8] sm:$0xff]
        %v427 = vld [vmem:[%s203 + $0x5b0] sm:$0xff]
        %v428 = vld [vmem:[%s203 + $0x5b8] sm:$0xff]
        %v429 = vld [vmem:[%s203 + $0x5c0] sm:$0xff]
        %v430 = vld [vmem:[%s203 + $0x5c8] sm:$0xff]
        %v431 = vld [vmem:[%s203 + $0x5d0] sm:$0xff]
        %v432 = vld [vmem:[%s203 + $0x5d8] sm:$0xff]
        %v433 = vld [vmem:[%s203 + $0x5e0] sm:$0xff]
        %v434 = vld [vmem:[%s203 + $0x5e8] sm:$0xff]
        %v435 = vld [vmem:[%s203 + $0x5f0] sm:$0xff]
        %v436 = vld [vmem:[%s203 + $0x5f8] sm:$0xff]
        %v437 = vld [vmem:[%s203 + $0x600] sm:$0xff]
        %v438 = vld [vmem:[%s203 + $0x608] sm:$0xff]
        %v439 = vld [vmem:[%s203 + $0x610] sm:$0xff]
        %v440 = vld [vmem:[%s203 + $0x618] sm:$0xff]
        %v441 = vld [vmem:[%s203 + $0x620] sm:$0xff]
        %v442 = vld [vmem:[%s203 + $0x628] sm:$0xff]
        %v443 = vld [vmem:[%s203 + $0x630] sm:$0xff]
        %v444 = vld [vmem:[%s203 + $0x638] sm:$0xff]
        %v445 = vld [vmem:[%s203 + $0x640] sm:$0xff]
        %v446 = vld [vmem:[%s203 + $0x648] sm:$0xff]
        %v447 = vld [vmem:[%s203 + $0x650] sm:$0xff]
        %v448 = vld [vmem:[%s203 + $0x658] sm:$0xff]
        %v449 = vld [vmem:[%s203 + $0x660] sm:$0xff]
        %v450 = vld [vmem:[%s203 + $0x668] sm:$0xff]
        %v451 = vld [vmem:[%s203 + $0x670] sm:$0xff]
        %v452 = vld [vmem:[%s203 + $0x678] sm:$0xff]
        %v453 = vld [vmem:[%s203 + $0x680] sm:$0xff]
        %v454 = vld [vmem:[%s203 + $0x688] sm:$0xff]
        %v455 = vld [vmem:[%s203 + $0x690] sm:$0xff]
        %v456 = vld [vmem:[%s203 + $0x698] sm:$0xff]
        %v457 = vld [vmem:[%s203 + $0x6a0] sm:$0xff]
        %v458 = vld [vmem:[%s203 + $0x6a8] sm:$0xff]
        %v459 = vld [vmem:[%s203 + $0x6b0] sm:$0xff]
        %v460 = vld [vmem:[%s203 + $0x6b8] sm:$0xff]
        %v461 = vld [vmem:[%s203 + $0x6c0] sm:$0xff]
        %v462 = vld [vmem:[%s203 + $0x6c8] sm:$0xff]
        %v463 = vld [vmem:[%s203 + $0x6d0] sm:$0xff]
        %v464 = vld [vmem:[%s203 + $0x6d8] sm:$0xff]
        %v465 = vld [vmem:[%s203 + $0x6e0] sm:$0xff]
        %v466 = vld [vmem:[%s203 + $0x6e8] sm:$0xff]
        %v467 = vld [vmem:[%s203 + $0x6f0] sm:$0xff]
        %v468 = vld [vmem:[%s203 + $0x6f8] sm:$0xff]
        %v469 = vld [vmem:[%s203 + $0x700] sm:$0xff]
        %v470 = vld [vmem:[%s203 + $0x708] sm:$0xff]
        %v471 = vld [vmem:[%s203 + $0x710] sm:$0xff]
        %v472 = vld [vmem:[%s203 + $0x718] sm:$0xff]
        %v473 = vld [vmem:[%s203 + $0x720] sm:$0xff]
        %v474 = vld [vmem:[%s203 + $0x728] sm:$0xff]
        %v475 = vld [vmem:[%s203 + $0x730] sm:$0xff]
        %v476 = vld [vmem:[%s203 + $0x738] sm:$0xff]
        %v477 = vld [vmem:[%s203 + $0x740] sm:$0xff]
        %v478 = vld [vmem:[%s203 + $0x748] sm:$0xff]
        %v479 = vld [vmem:[%s203 + $0x750] sm:$0xff]
        %v480 = vld [vmem:[%s203 + $0x758] sm:$0xff]
        %v481 = vld [vmem:[%s203 + $0x760] sm:$0xff]
        %v482 = vld [vmem:[%s203 + $0x768] sm:$0xff]
        %v483 = vld [vmem:[%s203 + $0x770] sm:$0xff]
        %v484 = vld [vmem:[%s203 + $0x778] sm:$0xff]
        %v485 = vld [vmem:[%s203 + $0x780] sm:$0xff]
        %v486 = vld [vmem:[%s203 + $0x788] sm:$0xff]
        %v487 = vld [vmem:[%s203 + $0x790] sm:$0xff]
        %v488 = vld [vmem:[%s203 + $0x798] sm:$0xff]
        %v489 = vld [vmem:[%s203 + $0x7a0] sm:$0xff]
        %v490 = vld [vmem:[%s203 + $0x7a8] sm:$0xff]
        %v491 = vld [vmem:[%s203 + $0x7b0] sm:$0xff]
        %v492 = vld [vmem:[%s203 + $0x7b8] sm:$0xff]
        %v493 = vld [vmem:[%s203 + $0x7c0] sm:$0xff]
        %v494 = vld [vmem:[%s203 + $0x7c8] sm:$0xff]
        %v495 = vld [vmem:[%s203 + $0x7d0] sm:$0xff]
        %v496 = vld [vmem:[%s203 + $0x7d8] sm:$0xff]
        %v497 = vld [vmem:[%s203 + $0x7e0] sm:$0xff]
        %v498 = vld [vmem:[%s203 + $0x7e8] sm:$0xff]
        %v499 = vld [vmem:[%s203 + $0x7f0] sm:$0xff]
        %v500 = vld [vmem:[%s203 + $0x7f8] sm:$0xff]
        %v501 = vld [vmem:[%s203 + $0x800] sm:$0xff]
        %v502 = vld [vmem:[%s203 + $0x808] sm:$0xff]
        %v503 = vld [vmem:[%s203 + $0x810] sm:$0xff]
        %v504 = vld [vmem:[%s203 + $0x818] sm:$0xff]
        %v505 = vld [vmem:[%s203 + $0x820] sm:$0xff]
        %v506 = vld [vmem:[%s203 + $0x828] sm:$0xff]
        %v507 = vld [vmem:[%s203 + $0x830] sm:$0xff]
        %v508 = vld [vmem:[%s203 + $0x838] sm:$0xff]
        %v509 = vld [vmem:[%s203 + $0x840] sm:$0xff]
        %v510 = vld [vmem:[%s203 + $0x848] sm:$0xff]
        %v511 = vld [vmem:[%s203 + $0x850] sm:$0xff]
        %v512 = vld [vmem:[%s203 + $0x858] sm:$0xff]
        %v513 = vld [vmem:[%s203 + $0x860] sm:$0xff]
        %v514 = vld [vmem:[%s203 + $0x868] sm:$0xff]
        %v515 = vld [vmem:[%s203 + $0x870] sm:$0xff]
        %v516 = vld [vmem:[%s203 + $0x878] sm:$0xff]
        %v517 = vld [vmem:[%s203 + $0x880] sm:$0xff]
        %v518 = vld [vmem:[%s203 + $0x888] sm:$0xff]
        %v519 = vld [vmem:[%s203 + $0x890] sm:$0xff]
        %v520 = vld [vmem:[%s203 + $0x898] sm:$0xff]
        %v521 = vld [vmem:[%s203 + $0x8a0] sm:$0xff]
        %v522 = vld [vmem:[%s203 + $0x8a8] sm:$0xff]
        %v523 = vld [vmem:[%s203 + $0x8b0] sm:$0xff]
        %v524 = vld [vmem:[%s203 + $0x8b8] sm:$0xff]
        %v525 = vld [vmem:[%s203 + $0x8c0] sm:$0xff]
        %v526 = vld [vmem:[%s203 + $0x8c8] sm:$0xff]
        %v527 = vld [vmem:[%s203 + $0x8d0] sm:$0xff]
        %v528 = vld [vmem:[%s203 + $0x8d8] sm:$0xff]
        %v529 = vld [vmem:[%s203 + $0x8e0] sm:$0xff]
        %v530 = vld [vmem:[%s203 + $0x8e8] sm:$0xff]
        %v531 = vld [vmem:[%s203 + $0x8f0] sm:$0xff]
        %v532 = vld [vmem:[%s203 + $0x8f8] sm:$0xff]
        %v533 = vld [vmem:[%s203 + $0x900] sm:$0xff]
        %v534 = vld [vmem:[%s203 + $0x908] sm:$0xff]
        %v535 = vld [vmem:[%s203 + $0x910] sm:$0xff]
        %v536 = vld [vmem:[%s203 + $0x918] sm:$0xff]
        %v537 = vld [vmem:[%s203 + $0x920] sm:$0xff]
        %v538 = vld [vmem:[%s203 + $0x928] sm:$0xff]
        %v539 = vld [vmem:[%s203 + $0x930] sm:$0xff]
        %v540 = vld [vmem:[%s203 + $0x938] sm:$0xff]
        %v541 = vld [vmem:[%s203 + $0x940] sm:$0xff]
        %v542 = vld [vmem:[%s203 + $0x948] sm:$0xff]
        %v543 = vld [vmem:[%s203 + $0x950] sm:$0xff]
        %v544 = vld [vmem:[%s203 + $0x958] sm:$0xff]
        %v545 = vld [vmem:[%s203 + $0x960] sm:$0xff]
        %v546 = vld [vmem:[%s203 + $0x968] sm:$0xff]
        %v547 = vld [vmem:[%s203 + $0x970] sm:$0xff]
        %v548 = vld [vmem:[%s203 + $0x978] sm:$0xff]
        %v549 = vld [vmem:[%s203 + $0x980] sm:$0xff]
        %v550 = vld [vmem:[%s203 + $0x988] sm:$0xff]
        %v551 = vld [vmem:[%s203 + $0x990] sm:$0xff]
        %v552 = vld [vmem:[%s203 + $0x998] sm:$0xff]
        %v553 = vld [vmem:[%s203 + $0x9a0] sm:$0xff]
        %v554 = vld [vmem:[%s203 + $0x9a8] sm:$0xff]
        %v555 = vld [vmem:[%s203 + $0x9b0] sm:$0xff]
        %v556 = vld [vmem:[%s203 + $0x9b8] sm:$0xff]
        %v557 = vld [vmem:[%s203 + $0x9c0] sm:$0xff]
        %v558 = vld [vmem:[%s203 + $0x9c8] sm:$0xff]
        %v559 = vld [vmem:[%s203 + $0x9d0] sm:$0xff]
        %v560 = vld [vmem:[%s203 + $0x9d8] sm:$0xff]
        %v561 = vld [vmem:[%s203 + $0x9e0] sm:$0xff]
        %v562 = vld [vmem:[%s203 + $0x9e8] sm:$0xff]
        %v563 = vld [vmem:[%s203 + $0x9f0] sm:$0xff]
        %v564 = vld [vmem:[%s203 + $0x9f8] sm:$0xff]
        %v565 = vld [vmem:[%s203 + $0xa00] sm:$0xff]
        %v566 = vld [vmem:[%s203 + $0xa08] sm:$0xff]
        %v567 = vld [vmem:[%s203 + $0xa10] sm:$0xff]
        %v568 = vld [vmem:[%s203 + $0xa18] sm:$0xff]
        %v569 = vld [vmem:[%s203 + $0xa20] sm:$0xff]
        %v570 = vld [vmem:[%s203 + $0xa28] sm:$0xff]
        %v571 = vld [vmem:[%s203 + $0xa30] sm:$0xff]
        %v572 = vld [vmem:[%s203 + $0xa38] sm:$0xff]
        %v573 = vld [vmem:[%s203 + $0xa40] sm:$0xff]
        %v574 = vld [vmem:[%s203 + $0xa48] sm:$0xff]
        %v575 = vld [vmem:[%s203 + $0xa50] sm:$0xff]
        %v576 = vld [vmem:[%s203 + $0xa58] sm:$0xff]
        %v577 = vld [vmem:[%s203 + $0xa60] sm:$0xff]
        %v578 = vld [vmem:[%s203 + $0xa68] sm:$0xff]
        %v579 = vld [vmem:[%s203 + $0xa70] sm:$0xff]
        %v580 = vld [vmem:[%s203 + $0xa78] sm:$0xff]
        %v581 = vld [vmem:[%s203 + $0xa80] sm:$0xff]
        %v582 = vld [vmem:[%s203 + $0xa88] sm:$0xff]
        %v583 = vld [vmem:[%s203 + $0xa90] sm:$0xff]
        %v584 = vld [vmem:[%s203 + $0xa98] sm:$0xff]
        %v585 = vld [vmem:[%s203 + $0xaa0] sm:$0xff]
        %v586 = vld [vmem:[%s203 + $0xaa8] sm:$0xff]
        %v587 = vld [vmem:[%s203 + $0xab0] sm:$0xff]
        %v588 = vld [vmem:[%s203 + $0xab8] sm:$0xff]
        %v589 = vld [vmem:[%s203 + $0xac0] sm:$0xff]
        %v590 = vld [vmem:[%s203 + $0xac8] sm:$0xff]
        %v591 = vld [vmem:[%s203 + $0xad0] sm:$0xff]
        %v592 = vld [vmem:[%s203 + $0xad8] sm:$0xff]
        %v593 = vld [vmem:[%s203 + $0xae0] sm:$0xff]
        %v594 = vld [vmem:[%s203 + $0xae8] sm:$0xff]
        %v595 = vld [vmem:[%s203 + $0xaf0] sm:$0xff]
        %v596 = vld [vmem:[%s203 + $0xaf8] sm:$0xff]
        %v597 = vld [vmem:[%s203 + $0xb00] sm:$0xff]
        %v598 = vld [vmem:[%s203 + $0xb08] sm:$0xff]
        %v599 = vld [vmem:[%s203 + $0xb10] sm:$0xff]
        %v600 = vld [vmem:[%s203 + $0xb18] sm:$0xff]
        %v601 = vld [vmem:[%s203 + $0xb20] sm:$0xff]
        %v602 = vld [vmem:[%s203 + $0xb28] sm:$0xff]
        %v603 = vld [vmem:[%s203 + $0xb30] sm:$0xff]
        %v604 = vld [vmem:[%s203 + $0xb38] sm:$0xff]
        %v605 = vld [vmem:[%s203 + $0xb40] sm:$0xff]
        %v606 = vld [vmem:[%s203 + $0xb48] sm:$0xff]
        %v607 = vld [vmem:[%s203 + $0xb50] sm:$0xff]
        %v608 = vld [vmem:[%s203 + $0xb58] sm:$0xff]
        %v609 = vld [vmem:[%s203 + $0xb60] sm:$0xff]
        %v610 = vld [vmem:[%s203 + $0xb68] sm:$0xff]
        %v611 = vld [vmem:[%s203 + $0xb70] sm:$0xff]
        %v612 = vld [vmem:[%s203 + $0xb78] sm:$0xff]
        %v613 = vld [vmem:[%s203 + $0xb80] sm:$0xff]
        %v614 = vld [vmem:[%s203 + $0xb88] sm:$0xff]
        %v615 = vld [vmem:[%s203 + $0xb90] sm:$0xff]
        %v616 = vld [vmem:[%s203 + $0xb98] sm:$0xff]
        %v617 = vld [vmem:[%s203 + $0xba0] sm:$0xff]
        %v618 = vld [vmem:[%s203 + $0xba8] sm:$0xff]
        %v619 = vld [vmem:[%s203 + $0xbb0] sm:$0xff]
        %v620 = vld [vmem:[%s203 + $0xbb8] sm:$0xff]
        %v621 = vld [vmem:[%s203 + $0xbc0] sm:$0xff]
        %v622 = vld [vmem:[%s203 + $0xbc8] sm:$0xff]
        %v623 = vld [vmem:[%s203 + $0xbd0] sm:$0xff]
        %v624 = vld [vmem:[%s203 + $0xbd8] sm:$0xff]
        %v625 = vld [vmem:[%s203 + $0xbe0] sm:$0xff]
        %v626 = vld [vmem:[%s203 + $0xbe8] sm:$0xff]
        %v627 = vld [vmem:[%s203 + $0xbf0] sm:$0xff]
        %v628 = vld [vmem:[%s203 + $0xbf8] sm:$0xff]
        %v629 = vld [vmem:[%s203 + $0xc00] sm:$0xff]
        %v630 = vld [vmem:[%s203 + $0xc08] sm:$0xff]
        %v631 = vld [vmem:[%s203 + $0xc10] sm:$0xff]
        %v632 = vld [vmem:[%s203 + $0xc18] sm:$0xff]
        %v633 = vld [vmem:[%s203 + $0xc20] sm:$0xff]
        %v634 = vld [vmem:[%s203 + $0xc28] sm:$0xff]
        %v635 = vld [vmem:[%s203 + $0xc30] sm:$0xff]
        %v636 = vld [vmem:[%s203 + $0xc38] sm:$0xff]
        %v637 = vld [vmem:[%s203 + $0xc40] sm:$0xff]
        %v638 = vld [vmem:[%s203 + $0xc48] sm:$0xff]
        %v639 = vld [vmem:[%s203 + $0xc50] sm:$0xff]
        %v640 = vld [vmem:[%s203 + $0xc58] sm:$0xff]
        %v641 = vld [vmem:[%s203 + $0xc60] sm:$0xff]
        %v642 = vld [vmem:[%s203 + $0xc68] sm:$0xff]
        %v643 = vld [vmem:[%s203 + $0xc70] sm:$0xff]
        %v644 = vld [vmem:[%s203 + $0xc78] sm:$0xff]
        %v645 = vld [vmem:[%s203 + $0xc80] sm:$0xff]
        %v646 = vld [vmem:[%s203 + $0xc88] sm:$0xff]
        %v647 = vld [vmem:[%s203 + $0xc90] sm:$0xff]
        %v648 = vld [vmem:[%s203 + $0xc98] sm:$0xff]
        %v649 = vld [vmem:[%s203 + $0xca0] sm:$0xff]
        %v650 = vld [vmem:[%s203 + $0xca8] sm:$0xff]
        %v651 = vld [vmem:[%s203 + $0xcb0] sm:$0xff]
        %v652 = vld [vmem:[%s203 + $0xcb8] sm:$0xff]
        %v653 = vld [vmem:[%s203 + $0xcc0] sm:$0xff]
        %v654 = vld [vmem:[%s203 + $0xcc8] sm:$0xff]
        %v655 = vld [vmem:[%s203 + $0xcd0] sm:$0xff]
        %v656 = vld [vmem:[%s203 + $0xcd8] sm:$0xff]
        %v657 = vld [vmem:[%s203 + $0xce0] sm:$0xff]
        %v658 = vld [vmem:[%s203 + $0xce8] sm:$0xff]
        %v659 = vld [vmem:[%s203 + $0xcf0] sm:$0xff]
        %v660 = vld [vmem:[%s203 + $0xcf8] sm:$0xff]
        %v661 = vld [vmem:[%s203 + $0xd00] sm:$0xff]
        %v662 = vld [vmem:[%s203 + $0xd08] sm:$0xff]
        %v663 = vld [vmem:[%s203 + $0xd10] sm:$0xff]
        %v664 = vld [vmem:[%s203 + $0xd18] sm:$0xff]
        %v665 = vld [vmem:[%s203 + $0xd20] sm:$0xff]
        %v666 = vld [vmem:[%s203 + $0xd28] sm:$0xff]
        %v667 = vld [vmem:[%s203 + $0xd30] sm:$0xff]
        %v668 = vld [vmem:[%s203 + $0xd38] sm:$0xff]
        %v669 = vld [vmem:[%s203 + $0xd40] sm:$0xff]
        %v670 = vld [vmem:[%s203 + $0xd48] sm:$0xff]
        %v671 = vld [vmem:[%s203 + $0xd50] sm:$0xff]
        %v672 = vld [vmem:[%s203 + $0xd58] sm:$0xff]
        %v673 = vld [vmem:[%s203 + $0xd60] sm:$0xff]
        %v674 = vld [vmem:[%s203 + $0xd68] sm:$0xff]
        %v675 = vld [vmem:[%s203 + $0xd70] sm:$0xff]
        %v676 = vld [vmem:[%s203 + $0xd78] sm:$0xff]
        %v677 = vld [vmem:[%s203 + $0xd80] sm:$0xff]
        %v678 = vld [vmem:[%s203 + $0xd88] sm:$0xff]
        %v679 = vld [vmem:[%s203 + $0xd90] sm:$0xff]
        %v680 = vld [vmem:[%s203 + $0xd98] sm:$0xff]
        %v681 = vld [vmem:[%s203 + $0xda0] sm:$0xff]
        %v682 = vld [vmem:[%s203 + $0xda8] sm:$0xff]
        %v683 = vld [vmem:[%s203 + $0xdb0] sm:$0xff]
        %v684 = vld [vmem:[%s203 + $0xdb8] sm:$0xff]
        %v685 = vld [vmem:[%s203 + $0xdc0] sm:$0xff]
        %v686 = vld [vmem:[%s203 + $0xdc8] sm:$0xff]
        %v687 = vld [vmem:[%s203 + $0xdd0] sm:$0xff]
        %v688 = vld [vmem:[%s203 + $0xdd8] sm:$0xff]
        %v689 = vld [vmem:[%s203 + $0xde0] sm:$0xff]
        %v690 = vld [vmem:[%s203 + $0xde8] sm:$0xff]
        %v691 = vld [vmem:[%s203 + $0xdf0] sm:$0xff]
        %v692 = vld [vmem:[%s203 + $0xdf8] sm:$0xff]
        %v693 = vld [vmem:[%s203 + $0xe00] sm:$0xff]
        %v694 = vld [vmem:[%s203 + $0xe08] sm:$0xff]
        %v695 = vld [vmem:[%s203 + $0xe10] sm:$0xff]
        %v696 = vld [vmem:[%s203 + $0xe18] sm:$0xff]
        %v697 = vld [vmem:[%s203 + $0xe20] sm:$0xff]
        %v698 = vld [vmem:[%s203 + $0xe28] sm:$0xff]
        %v699 = vld [vmem:[%s203 + $0xe30] sm:$0xff]
        %v700 = vld [vmem:[%s203 + $0xe38] sm:$0xff]
        %v701 = vld [vmem:[%s203 + $0xe40] sm:$0xff]
        %v702 = vld [vmem:[%s203 + $0xe48] sm:$0xff]
        %v703 = vld [vmem:[%s203 + $0xe50] sm:$0xff]
        %v704 = vld [vmem:[%s203 + $0xe58] sm:$0xff]
        %v705 = vld [vmem:[%s203 + $0xe60] sm:$0xff]
        %v706 = vld [vmem:[%s203 + $0xe68] sm:$0xff]
        %v707 = vld [vmem:[%s203 + $0xe70] sm:$0xff]
        %v708 = vld [vmem:[%s203 + $0xe78] sm:$0xff]
        %v709 = vld [vmem:[%s203 + $0xe80] sm:$0xff]
        %v710 = vld [vmem:[%s203 + $0xe88] sm:$0xff]
        %v711 = vld [vmem:[%s203 + $0xe90] sm:$0xff]
        %v712 = vld [vmem:[%s203 + $0xe98] sm:$0xff]
        %v713 = vld [vmem:[%s203 + $0xea0] sm:$0xff]
        %v714 = vld [vmem:[%s203 + $0xea8] sm:$0xff]
        %v715 = vld [vmem:[%s203 + $0xeb0] sm:$0xff]
        %v716 = vld [vmem:[%s203 + $0xeb8] sm:$0xff]
        %v717 = vld [vmem:[%s203 + $0xec0] sm:$0xff]
        %v718 = vld [vmem:[%s203 + $0xec8] sm:$0xff]
        %v719 = vld [vmem:[%s203 + $0xed0] sm:$0xff]
        %v720 = vld [vmem:[%s203 + $0xed8] sm:$0xff]
        %v721 = vld [vmem:[%s203 + $0xee0] sm:$0xff]
        %v722 = vld [vmem:[%s203 + $0xee8] sm:$0xff]
        %v723 = vld [vmem:[%s203 + $0xef0] sm:$0xff]
        %v724 = vld [vmem:[%s203 + $0xef8] sm:$0xff]
        %v725 = vld [vmem:[%s203 + $0xf00] sm:$0xff]
        %v726 = vld [vmem:[%s203 + $0xf08] sm:$0xff]
        %v727 = vld [vmem:[%s203 + $0xf10] sm:$0xff]
        %v728 = vld [vmem:[%s203 + $0xf18] sm:$0xff]
        %v729 = vld [vmem:[%s203 + $0xf20] sm:$0xff]
        %v730 = vld [vmem:[%s203 + $0xf28] sm:$0xff]
        %v731 = vld [vmem:[%s203 + $0xf30] sm:$0xff]
        %v732 = vld [vmem:[%s203 + $0xf38] sm:$0xff]
        %v733 = vld [vmem:[%s203 + $0xf40] sm:$0xff]
        %v734 = vld [vmem:[%s203 + $0xf48] sm:$0xff]
        %v735 = vld [vmem:[%s203 + $0xf50] sm:$0xff]
        %v736 = vld [vmem:[%s203 + $0xf58] sm:$0xff]
        %v737 = vld [vmem:[%s203 + $0xf60] sm:$0xff]
        %v738 = vld [vmem:[%s203 + $0xf68] sm:$0xff]
        %v739 = vld [vmem:[%s203 + $0xf70] sm:$0xff]
        %v740 = vld [vmem:[%s203 + $0xf78] sm:$0xff]
        %v741 = vld [vmem:[%s203 + $0xf80] sm:$0xff]
        %v742 = vld [vmem:[%s203 + $0xf88] sm:$0xff]
        %v743 = vld [vmem:[%s203 + $0xf90] sm:$0xff]
        %v744 = vld [vmem:[%s203 + $0xf98] sm:$0xff]
        %v745 = vld [vmem:[%s203 + $0xfa0] sm:$0xff]
        %v746 = vld [vmem:[%s203 + $0xfa8] sm:$0xff]
        %v747 = vld [vmem:[%s203 + $0xfb0] sm:$0xff]
        %v748 = vld [vmem:[%s203 + $0xfb8] sm:$0xff]
        %v749 = vunpack.c.l.bf16 %v245
        %v750 = vunpack.c.h.bf16 %v245
        %v751 = vunpack.c.l.bf16 %v246
        %v752 = vunpack.c.h.bf16 %v246
        %v753 = vunpack.c.l.bf16 %v247
        %v754 = vunpack.c.h.bf16 %v247
        %v755 = vunpack.c.l.bf16 %v248
        %v756 = vunpack.c.h.bf16 %v248
        %v757 = vunpack.c.l.bf16 %v249
        %v758 = vunpack.c.h.bf16 %v249
        %v759 = vunpack.c.l.bf16 %v250
        %v760 = vunpack.c.h.bf16 %v250
        %v761 = vunpack.c.l.bf16 %v251
        %v762 = vunpack.c.h.bf16 %v251
        %v763 = vunpack.c.l.bf16 %v252
        %v764 = vunpack.c.h.bf16 %v252
        %v765 = vunpack.c.l.bf16 %v253
        %v766 = vunpack.c.h.bf16 %v253
        %v767 = vunpack.c.l.bf16 %v254
        %v768 = vunpack.c.h.bf16 %v254
        %v769 = vunpack.c.l.bf16 %v255
        %v770 = vunpack.c.h.bf16 %v255
        %v771 = vunpack.c.l.bf16 %v256
        %v772 = vunpack.c.h.bf16 %v256
        %v773 = vunpack.c.l.bf16 %v257
        %v774 = vunpack.c.h.bf16 %v257
        %v775 = vunpack.c.l.bf16 %v258
        %v776 = vunpack.c.h.bf16 %v258
        %v777 = vunpack.c.l.bf16 %v259
        %v778 = vunpack.c.h.bf16 %v259
        %v779 = vunpack.c.l.bf16 %v260
        %v780 = vunpack.c.h.bf16 %v260
        %v781 = vunpack.c.l.bf16 %v261
        %v782 = vunpack.c.h.bf16 %v261
        %v783 = vunpack.c.l.bf16 %v262
        %v784 = vunpack.c.h.bf16 %v262
        %v785 = vunpack.c.l.bf16 %v263
        %v786 = vunpack.c.h.bf16 %v263
        %v787 = vunpack.c.l.bf16 %v264
        %v788 = vunpack.c.h.bf16 %v264
        %v789 = vunpack.c.l.bf16 %v265
        %v790 = vunpack.c.h.bf16 %v265
        %v791 = vunpack.c.l.bf16 %v266
        %v792 = vunpack.c.h.bf16 %v266
        %v793 = vunpack.c.l.bf16 %v267
        %v794 = vunpack.c.h.bf16 %v267
        %v795 = vunpack.c.l.bf16 %v268
        %v796 = vunpack.c.h.bf16 %v268
        %v797 = vunpack.c.l.bf16 %v269
        %v798 = vunpack.c.h.bf16 %v269
        %v799 = vunpack.c.l.bf16 %v270
        %v800 = vunpack.c.h.bf16 %v270
        %v801 = vunpack.c.l.bf16 %v271
        %v802 = vunpack.c.h.bf16 %v271
        %v803 = vunpack.c.l.bf16 %v272
        %v804 = vunpack.c.h.bf16 %v272
        %v805 = vunpack.c.l.bf16 %v273
        %v806 = vunpack.c.h.bf16 %v273
        %v807 = vunpack.c.l.bf16 %v274
        %v808 = vunpack.c.h.bf16 %v274
        %v809 = vunpack.c.l.bf16 %v275
        %v810 = vunpack.c.h.bf16 %v275
        %v811 = vunpack.c.l.bf16 %v276
        %v812 = vunpack.c.h.bf16 %v276
        %v813 = vunpack.c.l.bf16 %v277
        %v814 = vunpack.c.h.bf16 %v277
        %v815 = vunpack.c.l.bf16 %v278
        %v816 = vunpack.c.h.bf16 %v278
        %v817 = vunpack.c.l.bf16 %v279
        %v818 = vunpack.c.h.bf16 %v279
        %v819 = vunpack.c.l.bf16 %v280
        %v820 = vunpack.c.h.bf16 %v280
        %v821 = vunpack.c.l.bf16 %v281
        %v822 = vunpack.c.h.bf16 %v281
        %v823 = vunpack.c.l.bf16 %v282
        %v824 = vunpack.c.h.bf16 %v282
        %v825 = vunpack.c.l.bf16 %v283
        %v826 = vunpack.c.h.bf16 %v283
        %v827 = vunpack.c.l.bf16 %v284
        %v828 = vunpack.c.h.bf16 %v284
        %v829 = vunpack.c.l.bf16 %v285
        %v830 = vunpack.c.h.bf16 %v285
        %v831 = vunpack.c.l.bf16 %v286
        %v832 = vunpack.c.h.bf16 %v286
        %v833 = vunpack.c.l.bf16 %v287
        %v834 = vunpack.c.h.bf16 %v287
        %v835 = vunpack.c.l.bf16 %v288
        %v836 = vunpack.c.h.bf16 %v288
        %v837 = vunpack.c.l.bf16 %v289
        %v838 = vunpack.c.h.bf16 %v289
        %v839 = vunpack.c.l.bf16 %v290
        %v840 = vunpack.c.h.bf16 %v290
        %v841 = vunpack.c.l.bf16 %v291
        %v842 = vunpack.c.h.bf16 %v291
        %v843 = vunpack.c.l.bf16 %v292
        %v844 = vunpack.c.h.bf16 %v292
        %v845 = vunpack.c.l.bf16 %v293
        %v846 = vunpack.c.h.bf16 %v293
        %v847 = vunpack.c.l.bf16 %v294
        %v848 = vunpack.c.h.bf16 %v294
        %v849 = vunpack.c.l.bf16 %v295
        %v850 = vunpack.c.h.bf16 %v295
        %v851 = vunpack.c.l.bf16 %v296
        %v852 = vunpack.c.h.bf16 %v296
        %v853 = vunpack.c.l.bf16 %v297
        %v854 = vunpack.c.h.bf16 %v297
        %v855 = vunpack.c.l.bf16 %v298
        %v856 = vunpack.c.h.bf16 %v298
        %v857 = vunpack.c.l.bf16 %v299
        %v858 = vunpack.c.h.bf16 %v299
        %v859 = vunpack.c.l.bf16 %v300
        %v860 = vunpack.c.h.bf16 %v300
        %v861 = vunpack.c.l.bf16 %v301
        %v862 = vunpack.c.h.bf16 %v301
        %v863 = vunpack.c.l.bf16 %v302
        %v864 = vunpack.c.h.bf16 %v302
        %v865 = vunpack.c.l.bf16 %v303
        %v866 = vunpack.c.h.bf16 %v303
        %v867 = vunpack.c.l.bf16 %v304
        %v868 = vunpack.c.h.bf16 %v304
        %v869 = vunpack.c.l.bf16 %v305
        %v870 = vunpack.c.h.bf16 %v305
        %v871 = vunpack.c.l.bf16 %v306
        %v872 = vunpack.c.h.bf16 %v306
        %v873 = vunpack.c.l.bf16 %v307
        %v874 = vunpack.c.h.bf16 %v307
        %v875 = vunpack.c.l.bf16 %v308
        %v876 = vunpack.c.h.bf16 %v308
        %v877 = vunpack.c.l.bf16 %v309
        %v878 = vunpack.c.h.bf16 %v309
        %v879 = vunpack.c.l.bf16 %v310
        %v880 = vunpack.c.h.bf16 %v310
        %v881 = vunpack.c.l.bf16 %v311
        %v882 = vunpack.c.h.bf16 %v311
        %v883 = vunpack.c.l.bf16 %v312
        %v884 = vunpack.c.h.bf16 %v312
        %v885 = vunpack.c.l.bf16 %v313
        %v886 = vunpack.c.h.bf16 %v313
        %v887 = vunpack.c.l.bf16 %v314
        %v888 = vunpack.c.h.bf16 %v314
        %v889 = vunpack.c.l.bf16 %v315
        %v890 = vunpack.c.h.bf16 %v315
        %v891 = vunpack.c.l.bf16 %v316
        %v892 = vunpack.c.h.bf16 %v316
        %v893 = vunpack.c.l.bf16 %v317
        %v894 = vunpack.c.h.bf16 %v317
        %v895 = vunpack.c.l.bf16 %v318
        %v896 = vunpack.c.h.bf16 %v318
        %v897 = vunpack.c.l.bf16 %v319
        %v898 = vunpack.c.h.bf16 %v319
        %v899 = vunpack.c.l.bf16 %v320
        %v900 = vunpack.c.h.bf16 %v320
        %v901 = vunpack.c.l.bf16 %v321
        %v902 = vunpack.c.h.bf16 %v321
        %v903 = vunpack.c.l.bf16 %v322
        %v904 = vunpack.c.h.bf16 %v322
        %v905 = vunpack.c.l.bf16 %v323
        %v906 = vunpack.c.h.bf16 %v323
        %v907 = vunpack.c.l.bf16 %v324
        %v908 = vunpack.c.h.bf16 %v324
        %v909 = vunpack.c.l.bf16 %v325
        %v910 = vunpack.c.h.bf16 %v325
        %v911 = vunpack.c.l.bf16 %v326
        %v912 = vunpack.c.h.bf16 %v326
        %v913 = vunpack.c.l.bf16 %v327
        %v914 = vunpack.c.h.bf16 %v327
        %v915 = vunpack.c.l.bf16 %v328
        %v916 = vunpack.c.h.bf16 %v328
        %v917 = vunpack.c.l.bf16 %v329
        %v918 = vunpack.c.h.bf16 %v329
        %v919 = vunpack.c.l.bf16 %v330
        %v920 = vunpack.c.h.bf16 %v330
        %v921 = vunpack.c.l.bf16 %v331
        %v922 = vunpack.c.h.bf16 %v331
        %v923 = vunpack.c.l.bf16 %v332
        %v924 = vunpack.c.h.bf16 %v332
        %v925 = vunpack.c.l.bf16 %v333
        %v926 = vunpack.c.h.bf16 %v333
        %v927 = vunpack.c.l.bf16 %v334
        %v928 = vunpack.c.h.bf16 %v334
        %v929 = vunpack.c.l.bf16 %v335
        %v930 = vunpack.c.h.bf16 %v335
        %v931 = vunpack.c.l.bf16 %v336
        %v932 = vunpack.c.h.bf16 %v336
        %v933 = vunpack.c.l.bf16 %v337
        %v934 = vunpack.c.h.bf16 %v337
        %v935 = vunpack.c.l.bf16 %v338
        %v936 = vunpack.c.h.bf16 %v338
        %v937 = vunpack.c.l.bf16 %v339
        %v938 = vunpack.c.h.bf16 %v339
        %v939 = vunpack.c.l.bf16 %v340
        %v940 = vunpack.c.h.bf16 %v340
        %v941 = vunpack.c.l.bf16 %v341
        %v942 = vunpack.c.h.bf16 %v341
        %v943 = vunpack.c.l.bf16 %v342
        %v944 = vunpack.c.h.bf16 %v342
        %v945 = vunpack.c.l.bf16 %v343
        %v946 = vunpack.c.h.bf16 %v343
        %v947 = vunpack.c.l.bf16 %v344
        %v948 = vunpack.c.h.bf16 %v344
        %v949 = vunpack.c.l.bf16 %v345
        %v950 = vunpack.c.h.bf16 %v345
        %v951 = vunpack.c.l.bf16 %v346
        %v952 = vunpack.c.h.bf16 %v346
        %v953 = vunpack.c.l.bf16 %v347
        %v954 = vunpack.c.h.bf16 %v347
        %v955 = vunpack.c.l.bf16 %v348
        %v956 = vunpack.c.h.bf16 %v348
        %v957 = vunpack.c.l.bf16 %v349
        %v958 = vunpack.c.h.bf16 %v349
        %v959 = vunpack.c.l.bf16 %v350
        %v960 = vunpack.c.h.bf16 %v350
        %v961 = vunpack.c.l.bf16 %v351
        %v962 = vunpack.c.h.bf16 %v351
        %v963 = vunpack.c.l.bf16 %v352
        %v964 = vunpack.c.h.bf16 %v352
        %v965 = vunpack.c.l.bf16 %v353
        %v966 = vunpack.c.h.bf16 %v353
        %v967 = vunpack.c.l.bf16 %v354
        %v968 = vunpack.c.h.bf16 %v354
        %v969 = vunpack.c.l.bf16 %v355
        %v970 = vunpack.c.h.bf16 %v355
        %v971 = vunpack.c.l.bf16 %v356
        %v972 = vunpack.c.h.bf16 %v356
        %v973 = vunpack.c.l.bf16 %v357
        %v974 = vunpack.c.h.bf16 %v357
        %v975 = vunpack.c.l.bf16 %v358
        %v976 = vunpack.c.h.bf16 %v358
        %v977 = vunpack.c.l.bf16 %v359
        %v978 = vunpack.c.h.bf16 %v359
        %v979 = vunpack.c.l.bf16 %v360
        %v980 = vunpack.c.h.bf16 %v360
        %v981 = vunpack.c.l.bf16 %v361
        %v982 = vunpack.c.h.bf16 %v361
        %v983 = vunpack.c.l.bf16 %v362
        %v984 = vunpack.c.h.bf16 %v362
        %v985 = vunpack.c.l.bf16 %v363
        %v986 = vunpack.c.h.bf16 %v363
        %v987 = vunpack.c.l.bf16 %v364
        %v988 = vunpack.c.h.bf16 %v364
        %v989 = vunpack.c.l.bf16 %v365
        %v990 = vunpack.c.h.bf16 %v365
        %v991 = vunpack.c.l.bf16 %v366
        %v992 = vunpack.c.h.bf16 %v366
        %v993 = vunpack.c.l.bf16 %v367
        %v994 = vunpack.c.h.bf16 %v367
        %v995 = vunpack.c.l.bf16 %v368
        %v996 = vunpack.c.h.bf16 %v368
        %v997 = vunpack.c.l.bf16 %v369
        %v998 = vunpack.c.h.bf16 %v369
        %v999 = vunpack.c.l.bf16 %v370
        %v1000 = vunpack.c.h.bf16 %v370
        %v1001 = vunpack.c.l.bf16 %v371
        %v1002 = vunpack.c.h.bf16 %v371
        %v1003 = vunpack.c.l.bf16 %v372
        %v1004 = vunpack.c.h.bf16 %v372
        %v1005 = vunpack.c.l.bf16 %v373
        %v1006 = vunpack.c.h.bf16 %v373
        %v1007 = vunpack.c.l.bf16 %v374
        %v1008 = vunpack.c.h.bf16 %v374
        %v1009 = vunpack.c.l.bf16 %v375
        %v1010 = vunpack.c.h.bf16 %v375
        %v1011 = vunpack.c.l.bf16 %v376
        %v1012 = vunpack.c.h.bf16 %v376
        %v1013 = vunpack.c.l.bf16 %v377
        %v1014 = vunpack.c.h.bf16 %v377
        %v1015 = vunpack.c.l.bf16 %v378
        %v1016 = vunpack.c.h.bf16 %v378
        %v1017 = vunpack.c.l.bf16 %v379
        %v1018 = vunpack.c.h.bf16 %v379
        %v1019 = vunpack.c.l.bf16 %v380
        %v1020 = vunpack.c.h.bf16 %v380
        %v1021 = vunpack.c.l.bf16 %v381
        %v1022 = vunpack.c.h.bf16 %v381
        %v1023 = vunpack.c.l.bf16 %v382
        %v1024 = vunpack.c.h.bf16 %v382
        %v1025 = vunpack.c.l.bf16 %v383
        %v1026 = vunpack.c.h.bf16 %v383
        %v1027 = vunpack.c.l.bf16 %v384
        %v1028 = vunpack.c.h.bf16 %v384
        %v1029 = vunpack.c.l.bf16 %v385
        %v1030 = vunpack.c.h.bf16 %v385
        %v1031 = vunpack.c.l.bf16 %v386
        %v1032 = vunpack.c.h.bf16 %v386
        %v1033 = vunpack.c.l.bf16 %v387
        %v1034 = vunpack.c.h.bf16 %v387
        %v1035 = vunpack.c.l.bf16 %v388
        %v1036 = vunpack.c.h.bf16 %v388
        %v1037 = vunpack.c.l.bf16 %v389
        %v1038 = vunpack.c.h.bf16 %v389
        %v1039 = vunpack.c.l.bf16 %v390
        %v1040 = vunpack.c.h.bf16 %v390
        %v1041 = vunpack.c.l.bf16 %v391
        %v1042 = vunpack.c.h.bf16 %v391
        %v1043 = vunpack.c.l.bf16 %v392
        %v1044 = vunpack.c.h.bf16 %v392
        %v1045 = vunpack.c.l.bf16 %v393
        %v1046 = vunpack.c.h.bf16 %v393
        %v1047 = vunpack.c.l.bf16 %v394
        %v1048 = vunpack.c.h.bf16 %v394
        %v1049 = vunpack.c.l.bf16 %v395
        %v1050 = vunpack.c.h.bf16 %v395
        %v1051 = vunpack.c.l.bf16 %v396
        %v1052 = vunpack.c.h.bf16 %v396
        %v1053 = vunpack.c.l.bf16 %v397
        %v1054 = vunpack.c.h.bf16 %v397
        %v1055 = vunpack.c.l.bf16 %v398
        %v1056 = vunpack.c.h.bf16 %v398
        %v1057 = vunpack.c.l.bf16 %v399
        %v1058 = vunpack.c.h.bf16 %v399
        %v1059 = vunpack.c.l.bf16 %v400
        %v1060 = vunpack.c.h.bf16 %v400
        %v1061 = vunpack.c.l.bf16 %v401
        %v1062 = vunpack.c.h.bf16 %v401
        %v1063 = vunpack.c.l.bf16 %v402
        %v1064 = vunpack.c.h.bf16 %v402
        %v1065 = vunpack.c.l.bf16 %v403
        %v1066 = vunpack.c.h.bf16 %v403
        %v1067 = vunpack.c.l.bf16 %v404
        %v1068 = vunpack.c.h.bf16 %v404
        %v1069 = vunpack.c.l.bf16 %v405
        %v1070 = vunpack.c.h.bf16 %v405
        %v1071 = vunpack.c.l.bf16 %v406
        %v1072 = vunpack.c.h.bf16 %v406
        %v1073 = vunpack.c.l.bf16 %v407
        %v1074 = vunpack.c.h.bf16 %v407
        %v1075 = vunpack.c.l.bf16 %v408
        %v1076 = vunpack.c.h.bf16 %v408
        %v1077 = vunpack.c.l.bf16 %v409
        %v1078 = vunpack.c.h.bf16 %v409
        %v1079 = vunpack.c.l.bf16 %v410
        %v1080 = vunpack.c.h.bf16 %v410
        %v1081 = vunpack.c.l.bf16 %v411
        %v1082 = vunpack.c.h.bf16 %v411
        %v1083 = vunpack.c.l.bf16 %v412
        %v1084 = vunpack.c.h.bf16 %v412
        %v1085 = vunpack.c.l.bf16 %v413
        %v1086 = vunpack.c.h.bf16 %v413
        %v1087 = vunpack.c.l.bf16 %v414
        %v1088 = vunpack.c.h.bf16 %v414
        %v1089 = vunpack.c.l.bf16 %v415
        %v1090 = vunpack.c.h.bf16 %v415
        %v1091 = vunpack.c.l.bf16 %v416
        %v1092 = vunpack.c.h.bf16 %v416
        %v1093 = vunpack.c.l.bf16 %v417
        %v1094 = vunpack.c.h.bf16 %v417
        %v1095 = vunpack.c.l.bf16 %v418
        %v1096 = vunpack.c.h.bf16 %v418
        %v1097 = vunpack.c.l.bf16 %v419
        %v1098 = vunpack.c.h.bf16 %v419
        %v1099 = vunpack.c.l.bf16 %v420
        %v1100 = vunpack.c.h.bf16 %v420
        %v1101 = vunpack.c.l.bf16 %v421
        %v1102 = vunpack.c.h.bf16 %v421
        %v1103 = vunpack.c.l.bf16 %v422
        %v1104 = vunpack.c.h.bf16 %v422
        %v1105 = vunpack.c.l.bf16 %v423
        %v1106 = vunpack.c.h.bf16 %v423
        %v1107 = vunpack.c.l.bf16 %v424
        %v1108 = vunpack.c.h.bf16 %v424
        %v1109 = vunpack.c.l.bf16 %v425
        %v1110 = vunpack.c.h.bf16 %v425
        %v1111 = vunpack.c.l.bf16 %v426
        %v1112 = vunpack.c.h.bf16 %v426
        %v1113 = vunpack.c.l.bf16 %v427
        %v1114 = vunpack.c.h.bf16 %v427
        %v1115 = vunpack.c.l.bf16 %v428
        %v1116 = vunpack.c.h.bf16 %v428
        %v1117 = vunpack.c.l.bf16 %v429
        %v1118 = vunpack.c.h.bf16 %v429
        %v1119 = vunpack.c.l.bf16 %v430
        %v1120 = vunpack.c.h.bf16 %v430
        %v1121 = vunpack.c.l.bf16 %v431
        %v1122 = vunpack.c.h.bf16 %v431
        %v1123 = vunpack.c.l.bf16 %v432
        %v1124 = vunpack.c.h.bf16 %v432
        %v1125 = vunpack.c.l.bf16 %v433
        %v1126 = vunpack.c.h.bf16 %v433
        %v1127 = vunpack.c.l.bf16 %v434
        %v1128 = vunpack.c.h.bf16 %v434
        %v1129 = vunpack.c.l.bf16 %v435
        %v1130 = vunpack.c.h.bf16 %v435
        %v1131 = vunpack.c.l.bf16 %v436
        %v1132 = vunpack.c.h.bf16 %v436
        %v1133 = vunpack.c.l.bf16 %v437
        %v1134 = vunpack.c.h.bf16 %v437
        %v1135 = vunpack.c.l.bf16 %v438
        %v1136 = vunpack.c.h.bf16 %v438
        %v1137 = vunpack.c.l.bf16 %v439
        %v1138 = vunpack.c.h.bf16 %v439
        %v1139 = vunpack.c.l.bf16 %v440
        %v1140 = vunpack.c.h.bf16 %v440
        %v1141 = vunpack.c.l.bf16 %v441
        %v1142 = vunpack.c.h.bf16 %v441
        %v1143 = vunpack.c.l.bf16 %v442
        %v1144 = vunpack.c.h.bf16 %v442
        %v1145 = vunpack.c.l.bf16 %v443
        %v1146 = vunpack.c.h.bf16 %v443
        %v1147 = vunpack.c.l.bf16 %v444
        %v1148 = vunpack.c.h.bf16 %v444
        %v1149 = vunpack.c.l.bf16 %v445
        %v1150 = vunpack.c.h.bf16 %v445
        %v1151 = vunpack.c.l.bf16 %v446
        %v1152 = vunpack.c.h.bf16 %v446
        %v1153 = vunpack.c.l.bf16 %v447
        %v1154 = vunpack.c.h.bf16 %v447
        %v1155 = vunpack.c.l.bf16 %v448
        %v1156 = vunpack.c.h.bf16 %v448
        %v1157 = vunpack.c.l.bf16 %v449
        %v1158 = vunpack.c.h.bf16 %v449
        %v1159 = vunpack.c.l.bf16 %v450
        %v1160 = vunpack.c.h.bf16 %v450
        %v1161 = vunpack.c.l.bf16 %v451
        %v1162 = vunpack.c.h.bf16 %v451
        %v1163 = vunpack.c.l.bf16 %v452
        %v1164 = vunpack.c.h.bf16 %v452
        %v1165 = vunpack.c.l.bf16 %v453
        %v1166 = vunpack.c.h.bf16 %v453
        %v1167 = vunpack.c.l.bf16 %v454
        %v1168 = vunpack.c.h.bf16 %v454
        %v1169 = vunpack.c.l.bf16 %v455
        %v1170 = vunpack.c.h.bf16 %v455
        %v1171 = vunpack.c.l.bf16 %v456
        %v1172 = vunpack.c.h.bf16 %v456
        %v1173 = vunpack.c.l.bf16 %v457
        %v1174 = vunpack.c.h.bf16 %v457
        %v1175 = vunpack.c.l.bf16 %v458
        %v1176 = vunpack.c.h.bf16 %v458
        %v1177 = vunpack.c.l.bf16 %v459
        %v1178 = vunpack.c.h.bf16 %v459
        %v1179 = vunpack.c.l.bf16 %v460
        %v1180 = vunpack.c.h.bf16 %v460
        %v1181 = vunpack.c.l.bf16 %v461
        %v1182 = vunpack.c.h.bf16 %v461
        %v1183 = vunpack.c.l.bf16 %v462
        %v1184 = vunpack.c.h.bf16 %v462
        %v1185 = vunpack.c.l.bf16 %v463
        %v1186 = vunpack.c.h.bf16 %v463
        %v1187 = vunpack.c.l.bf16 %v464
        %v1188 = vunpack.c.h.bf16 %v464
        %v1189 = vunpack.c.l.bf16 %v465
        %v1190 = vunpack.c.h.bf16 %v465
        %v1191 = vunpack.c.l.bf16 %v466
        %v1192 = vunpack.c.h.bf16 %v466
        %v1193 = vunpack.c.l.bf16 %v467
        %v1194 = vunpack.c.h.bf16 %v467
        %v1195 = vunpack.c.l.bf16 %v468
        %v1196 = vunpack.c.h.bf16 %v468
        %v1197 = vunpack.c.l.bf16 %v469
        %v1198 = vunpack.c.h.bf16 %v469
        %v1199 = vunpack.c.l.bf16 %v470
        %v1200 = vunpack.c.h.bf16 %v470
        %v1201 = vunpack.c.l.bf16 %v471
        %v1202 = vunpack.c.h.bf16 %v471
        %v1203 = vunpack.c.l.bf16 %v472
        %v1204 = vunpack.c.h.bf16 %v472
        %v1205 = vunpack.c.l.bf16 %v473
        %v1206 = vunpack.c.h.bf16 %v473
        %v1207 = vunpack.c.l.bf16 %v474
        %v1208 = vunpack.c.h.bf16 %v474
        %v1209 = vunpack.c.l.bf16 %v475
        %v1210 = vunpack.c.h.bf16 %v475
        %v1211 = vunpack.c.l.bf16 %v476
        %v1212 = vunpack.c.h.bf16 %v476
        %v1213 = vunpack.c.l.bf16 %v477
        %v1214 = vunpack.c.h.bf16 %v477
        %v1215 = vunpack.c.l.bf16 %v478
        %v1216 = vunpack.c.h.bf16 %v478
        %v1217 = vunpack.c.l.bf16 %v479
        %v1218 = vunpack.c.h.bf16 %v479
        %v1219 = vunpack.c.l.bf16 %v480
        %v1220 = vunpack.c.h.bf16 %v480
        %v1221 = vunpack.c.l.bf16 %v481
        %v1222 = vunpack.c.h.bf16 %v481
        %v1223 = vunpack.c.l.bf16 %v482
        %v1224 = vunpack.c.h.bf16 %v482
        %v1225 = vunpack.c.l.bf16 %v483
        %v1226 = vunpack.c.h.bf16 %v483
        %v1227 = vunpack.c.l.bf16 %v484
        %v1228 = vunpack.c.h.bf16 %v484
        %v1229 = vunpack.c.l.bf16 %v485
        %v1230 = vunpack.c.h.bf16 %v485
        %v1231 = vunpack.c.l.bf16 %v486
        %v1232 = vunpack.c.h.bf16 %v486
        %v1233 = vunpack.c.l.bf16 %v487
        %v1234 = vunpack.c.h.bf16 %v487
        %v1235 = vunpack.c.l.bf16 %v488
        %v1236 = vunpack.c.h.bf16 %v488
        %v1237 = vunpack.c.l.bf16 %v489
        %v1238 = vunpack.c.h.bf16 %v489
        %v1239 = vunpack.c.l.bf16 %v490
        %v1240 = vunpack.c.h.bf16 %v490
        %v1241 = vunpack.c.l.bf16 %v491
        %v1242 = vunpack.c.h.bf16 %v491
        %v1243 = vunpack.c.l.bf16 %v492
        %v1244 = vunpack.c.h.bf16 %v492
        %v1245 = vunpack.c.l.bf16 %v493
        %v1246 = vunpack.c.h.bf16 %v493
        %v1247 = vunpack.c.l.bf16 %v494
        %v1248 = vunpack.c.h.bf16 %v494
        %v1249 = vunpack.c.l.bf16 %v495
        %v1250 = vunpack.c.h.bf16 %v495
        %v1251 = vunpack.c.l.bf16 %v496
        %v1252 = vunpack.c.h.bf16 %v496
        %v1253 = vunpack.c.l.bf16 %v497
        %v1254 = vunpack.c.h.bf16 %v497
        %v1255 = vunpack.c.l.bf16 %v498
        %v1256 = vunpack.c.h.bf16 %v498
        %v1257 = vunpack.c.l.bf16 %v499
        %v1258 = vunpack.c.h.bf16 %v499
        %v1259 = vunpack.c.l.bf16 %v500
        %v1260 = vunpack.c.h.bf16 %v500
        %v1261 = vunpack.c.l.bf16 %v501
        %v1262 = vunpack.c.h.bf16 %v501
        %v1263 = vunpack.c.l.bf16 %v502
        %v1264 = vunpack.c.h.bf16 %v502
        %v1265 = vunpack.c.l.bf16 %v503
        %v1266 = vunpack.c.h.bf16 %v503
        %v1267 = vunpack.c.l.bf16 %v504
        %v1268 = vunpack.c.h.bf16 %v504
        %v1269 = vunpack.c.l.bf16 %v505
        %v1270 = vunpack.c.h.bf16 %v505
        %v1271 = vunpack.c.l.bf16 %v506
        %v1272 = vunpack.c.h.bf16 %v506
        %v1273 = vunpack.c.l.bf16 %v507
        %v1274 = vunpack.c.h.bf16 %v507
        %v1275 = vunpack.c.l.bf16 %v508
        %v1276 = vunpack.c.h.bf16 %v508
        %v1277 = vunpack.c.l.bf16 %v509
        %v1278 = vunpack.c.h.bf16 %v509
        %v1279 = vunpack.c.l.bf16 %v510
        %v1280 = vunpack.c.h.bf16 %v510
        %v1281 = vunpack.c.l.bf16 %v511
        %v1282 = vunpack.c.h.bf16 %v511
        %v1283 = vunpack.c.l.bf16 %v512
        %v1284 = vunpack.c.h.bf16 %v512
        %v1285 = vunpack.c.l.bf16 %v513
        %v1286 = vunpack.c.h.bf16 %v513
        %v1287 = vunpack.c.l.bf16 %v514
        %v1288 = vunpack.c.h.bf16 %v514
        %v1289 = vunpack.c.l.bf16 %v515
        %v1290 = vunpack.c.h.bf16 %v515
        %v1291 = vunpack.c.l.bf16 %v516
        %v1292 = vunpack.c.h.bf16 %v516
        %v1293 = vunpack.c.l.bf16 %v517
        %v1294 = vunpack.c.h.bf16 %v517
        %v1295 = vunpack.c.l.bf16 %v518
        %v1296 = vunpack.c.h.bf16 %v518
        %v1297 = vunpack.c.l.bf16 %v519
        %v1298 = vunpack.c.h.bf16 %v519
        %v1299 = vunpack.c.l.bf16 %v520
        %v1300 = vunpack.c.h.bf16 %v520
        %v1301 = vunpack.c.l.bf16 %v521
        %v1302 = vunpack.c.h.bf16 %v521
        %v1303 = vunpack.c.l.bf16 %v522
        %v1304 = vunpack.c.h.bf16 %v522
        %v1305 = vunpack.c.l.bf16 %v523
        %v1306 = vunpack.c.h.bf16 %v523
        %v1307 = vunpack.c.l.bf16 %v524
        %v1308 = vunpack.c.h.bf16 %v524
        %v1309 = vunpack.c.l.bf16 %v525
        %v1310 = vunpack.c.h.bf16 %v525
        %v1311 = vunpack.c.l.bf16 %v526
        %v1312 = vunpack.c.h.bf16 %v526
        %v1313 = vunpack.c.l.bf16 %v527
        %v1314 = vunpack.c.h.bf16 %v527
        %v1315 = vunpack.c.l.bf16 %v528
        %v1316 = vunpack.c.h.bf16 %v528
        %v1317 = vunpack.c.l.bf16 %v529
        %v1318 = vunpack.c.h.bf16 %v529
        %v1319 = vunpack.c.l.bf16 %v530
        %v1320 = vunpack.c.h.bf16 %v530
        %v1321 = vunpack.c.l.bf16 %v531
        %v1322 = vunpack.c.h.bf16 %v531
        %v1323 = vunpack.c.l.bf16 %v532
        %v1324 = vunpack.c.h.bf16 %v532
        %v1325 = vunpack.c.l.bf16 %v533
        %v1326 = vunpack.c.h.bf16 %v533
        %v1327 = vunpack.c.l.bf16 %v534
        %v1328 = vunpack.c.h.bf16 %v534
        %v1329 = vunpack.c.l.bf16 %v535
        %v1330 = vunpack.c.h.bf16 %v535
        %v1331 = vunpack.c.l.bf16 %v536
        %v1332 = vunpack.c.h.bf16 %v536
        %v1333 = vunpack.c.l.bf16 %v537
        %v1334 = vunpack.c.h.bf16 %v537
        %v1335 = vunpack.c.l.bf16 %v538
        %v1336 = vunpack.c.h.bf16 %v538
        %v1337 = vunpack.c.l.bf16 %v539
        %v1338 = vunpack.c.h.bf16 %v539
        %v1339 = vunpack.c.l.bf16 %v540
        %v1340 = vunpack.c.h.bf16 %v540
        %v1341 = vunpack.c.l.bf16 %v541
        %v1342 = vunpack.c.h.bf16 %v541
        %v1343 = vunpack.c.l.bf16 %v542
        %v1344 = vunpack.c.h.bf16 %v542
        %v1345 = vunpack.c.l.bf16 %v543
        %v1346 = vunpack.c.h.bf16 %v543
        %v1347 = vunpack.c.l.bf16 %v544
        %v1348 = vunpack.c.h.bf16 %v544
        %v1349 = vunpack.c.l.bf16 %v545
        %v1350 = vunpack.c.h.bf16 %v545
        %v1351 = vunpack.c.l.bf16 %v546
        %v1352 = vunpack.c.h.bf16 %v546
        %v1353 = vunpack.c.l.bf16 %v547
        %v1354 = vunpack.c.h.bf16 %v547
        %v1355 = vunpack.c.l.bf16 %v548
        %v1356 = vunpack.c.h.bf16 %v548
        %v1357 = vunpack.c.l.bf16 %v549
        %v1358 = vunpack.c.h.bf16 %v549
        %v1359 = vunpack.c.l.bf16 %v550
        %v1360 = vunpack.c.h.bf16 %v550
        %v1361 = vunpack.c.l.bf16 %v551
        %v1362 = vunpack.c.h.bf16 %v551
        %v1363 = vunpack.c.l.bf16 %v552
        %v1364 = vunpack.c.h.bf16 %v552
        %v1365 = vunpack.c.l.bf16 %v553
        %v1366 = vunpack.c.h.bf16 %v553
        %v1367 = vunpack.c.l.bf16 %v554
        %v1368 = vunpack.c.h.bf16 %v554
        %v1369 = vunpack.c.l.bf16 %v555
        %v1370 = vunpack.c.h.bf16 %v555
        %v1371 = vunpack.c.l.bf16 %v556
        %v1372 = vunpack.c.h.bf16 %v556
        %v1373 = vunpack.c.l.bf16 %v557
        %v1374 = vunpack.c.h.bf16 %v557
        %v1375 = vunpack.c.l.bf16 %v558
        %v1376 = vunpack.c.h.bf16 %v558
        %v1377 = vunpack.c.l.bf16 %v559
        %v1378 = vunpack.c.h.bf16 %v559
        %v1379 = vunpack.c.l.bf16 %v560
        %v1380 = vunpack.c.h.bf16 %v560
        %v1381 = vunpack.c.l.bf16 %v561
        %v1382 = vunpack.c.h.bf16 %v561
        %v1383 = vunpack.c.l.bf16 %v562
        %v1384 = vunpack.c.h.bf16 %v562
        %v1385 = vunpack.c.l.bf16 %v563
        %v1386 = vunpack.c.h.bf16 %v563
        %v1387 = vunpack.c.l.bf16 %v564
        %v1388 = vunpack.c.h.bf16 %v564
        %v1389 = vunpack.c.l.bf16 %v565
        %v1390 = vunpack.c.h.bf16 %v565
        %v1391 = vunpack.c.l.bf16 %v566
        %v1392 = vunpack.c.h.bf16 %v566
        %v1393 = vunpack.c.l.bf16 %v567
        %v1394 = vunpack.c.h.bf16 %v567
        %v1395 = vunpack.c.l.bf16 %v568
        %v1396 = vunpack.c.h.bf16 %v568
        %v1397 = vunpack.c.l.bf16 %v569
        %v1398 = vunpack.c.h.bf16 %v569
        %v1399 = vunpack.c.l.bf16 %v570
        %v1400 = vunpack.c.h.bf16 %v570
        %v1401 = vunpack.c.l.bf16 %v571
        %v1402 = vunpack.c.h.bf16 %v571
        %v1403 = vunpack.c.l.bf16 %v572
        %v1404 = vunpack.c.h.bf16 %v572
        %v1405 = vunpack.c.l.bf16 %v573
        %v1406 = vunpack.c.h.bf16 %v573
        %v1407 = vunpack.c.l.bf16 %v574
        %v1408 = vunpack.c.h.bf16 %v574
        %v1409 = vunpack.c.l.bf16 %v575
        %v1410 = vunpack.c.h.bf16 %v575
        %v1411 = vunpack.c.l.bf16 %v576
        %v1412 = vunpack.c.h.bf16 %v576
        %v1413 = vunpack.c.l.bf16 %v577
        %v1414 = vunpack.c.h.bf16 %v577
        %v1415 = vunpack.c.l.bf16 %v578
        %v1416 = vunpack.c.h.bf16 %v578
        %v1417 = vunpack.c.l.bf16 %v579
        %v1418 = vunpack.c.h.bf16 %v579
        %v1419 = vunpack.c.l.bf16 %v580
        %v1420 = vunpack.c.h.bf16 %v580
        %v1421 = vunpack.c.l.bf16 %v581
        %v1422 = vunpack.c.h.bf16 %v581
        %v1423 = vunpack.c.l.bf16 %v582
        %v1424 = vunpack.c.h.bf16 %v582
        %v1425 = vunpack.c.l.bf16 %v583
        %v1426 = vunpack.c.h.bf16 %v583
        %v1427 = vunpack.c.l.bf16 %v584
        %v1428 = vunpack.c.h.bf16 %v584
        %v1429 = vunpack.c.l.bf16 %v585
        %v1430 = vunpack.c.h.bf16 %v585
        %v1431 = vunpack.c.l.bf16 %v586
        %v1432 = vunpack.c.h.bf16 %v586
        %v1433 = vunpack.c.l.bf16 %v587
        %v1434 = vunpack.c.h.bf16 %v587
        %v1435 = vunpack.c.l.bf16 %v588
        %v1436 = vunpack.c.h.bf16 %v588
        %v1437 = vunpack.c.l.bf16 %v589
        %v1438 = vunpack.c.h.bf16 %v589
        %v1439 = vunpack.c.l.bf16 %v590
        %v1440 = vunpack.c.h.bf16 %v590
        %v1441 = vunpack.c.l.bf16 %v591
        %v1442 = vunpack.c.h.bf16 %v591
        %v1443 = vunpack.c.l.bf16 %v592
        %v1444 = vunpack.c.h.bf16 %v592
        %v1445 = vunpack.c.l.bf16 %v593
        %v1446 = vunpack.c.h.bf16 %v593
        %v1447 = vunpack.c.l.bf16 %v594
        %v1448 = vunpack.c.h.bf16 %v594
        %v1449 = vunpack.c.l.bf16 %v595
        %v1450 = vunpack.c.h.bf16 %v595
        %v1451 = vunpack.c.l.bf16 %v596
        %v1452 = vunpack.c.h.bf16 %v596
        %v1453 = vunpack.c.l.bf16 %v597
        %v1454 = vunpack.c.h.bf16 %v597
        %v1455 = vunpack.c.l.bf16 %v598
        %v1456 = vunpack.c.h.bf16 %v598
        %v1457 = vunpack.c.l.bf16 %v599
        %v1458 = vunpack.c.h.bf16 %v599
        %v1459 = vunpack.c.l.bf16 %v600
        %v1460 = vunpack.c.h.bf16 %v600
        %v1461 = vunpack.c.l.bf16 %v601
        %v1462 = vunpack.c.h.bf16 %v601
        %v1463 = vunpack.c.l.bf16 %v602
        %v1464 = vunpack.c.h.bf16 %v602
        %v1465 = vunpack.c.l.bf16 %v603
        %v1466 = vunpack.c.h.bf16 %v603
        %v1467 = vunpack.c.l.bf16 %v604
        %v1468 = vunpack.c.h.bf16 %v604
        %v1469 = vunpack.c.l.bf16 %v605
        %v1470 = vunpack.c.h.bf16 %v605
        %v1471 = vunpack.c.l.bf16 %v606
        %v1472 = vunpack.c.h.bf16 %v606
        %v1473 = vunpack.c.l.bf16 %v607
        %v1474 = vunpack.c.h.bf16 %v607
        %v1475 = vunpack.c.l.bf16 %v608
        %v1476 = vunpack.c.h.bf16 %v608
        %v1477 = vunpack.c.l.bf16 %v609
        %v1478 = vunpack.c.h.bf16 %v609
        %v1479 = vunpack.c.l.bf16 %v610
        %v1480 = vunpack.c.h.bf16 %v610
        %v1481 = vunpack.c.l.bf16 %v611
        %v1482 = vunpack.c.h.bf16 %v611
        %v1483 = vunpack.c.l.bf16 %v612
        %v1484 = vunpack.c.h.bf16 %v612
        %v1485 = vunpack.c.l.bf16 %v613
        %v1486 = vunpack.c.h.bf16 %v613
        %v1487 = vunpack.c.l.bf16 %v614
        %v1488 = vunpack.c.h.bf16 %v614
        %v1489 = vunpack.c.l.bf16 %v615
        %v1490 = vunpack.c.h.bf16 %v615
        %v1491 = vunpack.c.l.bf16 %v616
        %v1492 = vunpack.c.h.bf16 %v616
        %v1493 = vunpack.c.l.bf16 %v617
        %v1494 = vunpack.c.h.bf16 %v617
        %v1495 = vunpack.c.l.bf16 %v618
        %v1496 = vunpack.c.h.bf16 %v618
        %v1497 = vunpack.c.l.bf16 %v619
        %v1498 = vunpack.c.h.bf16 %v619
        %v1499 = vunpack.c.l.bf16 %v620
        %v1500 = vunpack.c.h.bf16 %v620
        %v1501 = vunpack.c.l.bf16 %v621
        %v1502 = vunpack.c.h.bf16 %v621
        %v1503 = vunpack.c.l.bf16 %v622
        %v1504 = vunpack.c.h.bf16 %v622
        %v1505 = vunpack.c.l.bf16 %v623
        %v1506 = vunpack.c.h.bf16 %v623
        %v1507 = vunpack.c.l.bf16 %v624
        %v1508 = vunpack.c.h.bf16 %v624
        %v1509 = vunpack.c.l.bf16 %v625
        %v1510 = vunpack.c.h.bf16 %v625
        %v1511 = vunpack.c.l.bf16 %v626
        %v1512 = vunpack.c.h.bf16 %v626
        %v1513 = vunpack.c.l.bf16 %v627
        %v1514 = vunpack.c.h.bf16 %v627
        %v1515 = vunpack.c.l.bf16 %v628
        %v1516 = vunpack.c.h.bf16 %v628
        %v1517 = vunpack.c.l.bf16 %v629
        %v1518 = vunpack.c.h.bf16 %v629
        %v1519 = vunpack.c.l.bf16 %v630
        %v1520 = vunpack.c.h.bf16 %v630
        %v1521 = vunpack.c.l.bf16 %v631
        %v1522 = vunpack.c.h.bf16 %v631
        %v1523 = vunpack.c.l.bf16 %v632
        %v1524 = vunpack.c.h.bf16 %v632
        %v1525 = vunpack.c.l.bf16 %v633
        %v1526 = vunpack.c.h.bf16 %v633
        %v1527 = vunpack.c.l.bf16 %v634
        %v1528 = vunpack.c.h.bf16 %v634
        %v1529 = vunpack.c.l.bf16 %v635
        %v1530 = vunpack.c.h.bf16 %v635
        %v1531 = vunpack.c.l.bf16 %v636
        %v1532 = vunpack.c.h.bf16 %v636
        %v1533 = vunpack.c.l.bf16 %v637
        %v1534 = vunpack.c.h.bf16 %v637
        %v1535 = vunpack.c.l.bf16 %v638
        %v1536 = vunpack.c.h.bf16 %v638
        %v1537 = vunpack.c.l.bf16 %v639
        %v1538 = vunpack.c.h.bf16 %v639
        %v1539 = vunpack.c.l.bf16 %v640
        %v1540 = vunpack.c.h.bf16 %v640
        %v1541 = vunpack.c.l.bf16 %v641
        %v1542 = vunpack.c.h.bf16 %v641
        %v1543 = vunpack.c.l.bf16 %v642
        %v1544 = vunpack.c.h.bf16 %v642
        %v1545 = vunpack.c.l.bf16 %v643
        %v1546 = vunpack.c.h.bf16 %v643
        %v1547 = vunpack.c.l.bf16 %v644
        %v1548 = vunpack.c.h.bf16 %v644
        %v1549 = vunpack.c.l.bf16 %v645
        %v1550 = vunpack.c.h.bf16 %v645
        %v1551 = vunpack.c.l.bf16 %v646
        %v1552 = vunpack.c.h.bf16 %v646
        %v1553 = vunpack.c.l.bf16 %v647
        %v1554 = vunpack.c.h.bf16 %v647
        %v1555 = vunpack.c.l.bf16 %v648
        %v1556 = vunpack.c.h.bf16 %v648
        %v1557 = vunpack.c.l.bf16 %v649
        %v1558 = vunpack.c.h.bf16 %v649
        %v1559 = vunpack.c.l.bf16 %v650
        %v1560 = vunpack.c.h.bf16 %v650
        %v1561 = vunpack.c.l.bf16 %v651
        %v1562 = vunpack.c.h.bf16 %v651
        %v1563 = vunpack.c.l.bf16 %v652
        %v1564 = vunpack.c.h.bf16 %v652
        %v1565 = vunpack.c.l.bf16 %v653
        %v1566 = vunpack.c.h.bf16 %v653
        %v1567 = vunpack.c.l.bf16 %v654
        %v1568 = vunpack.c.h.bf16 %v654
        %v1569 = vunpack.c.l.bf16 %v655
        %v1570 = vunpack.c.h.bf16 %v655
        %v1571 = vunpack.c.l.bf16 %v656
        %v1572 = vunpack.c.h.bf16 %v656
        %v1573 = vunpack.c.l.bf16 %v657
        %v1574 = vunpack.c.h.bf16 %v657
        %v1575 = vunpack.c.l.bf16 %v658
        %v1576 = vunpack.c.h.bf16 %v658
        %v1577 = vunpack.c.l.bf16 %v659
        %v1578 = vunpack.c.h.bf16 %v659
        %v1579 = vunpack.c.l.bf16 %v660
        %v1580 = vunpack.c.h.bf16 %v660
        %v1581 = vunpack.c.l.bf16 %v661
        %v1582 = vunpack.c.h.bf16 %v661
        %v1583 = vunpack.c.l.bf16 %v662
        %v1584 = vunpack.c.h.bf16 %v662
        %v1585 = vunpack.c.l.bf16 %v663
        %v1586 = vunpack.c.h.bf16 %v663
        %v1587 = vunpack.c.l.bf16 %v664
        %v1588 = vunpack.c.h.bf16 %v664
        %v1589 = vunpack.c.l.bf16 %v665
        %v1590 = vunpack.c.h.bf16 %v665
        %v1591 = vunpack.c.l.bf16 %v666
        %v1592 = vunpack.c.h.bf16 %v666
        %v1593 = vunpack.c.l.bf16 %v667
        %v1594 = vunpack.c.h.bf16 %v667
        %v1595 = vunpack.c.l.bf16 %v668
        %v1596 = vunpack.c.h.bf16 %v668
        %v1597 = vunpack.c.l.bf16 %v669
        %v1598 = vunpack.c.h.bf16 %v669
        %v1599 = vunpack.c.l.bf16 %v670
        %v1600 = vunpack.c.h.bf16 %v670
        %v1601 = vunpack.c.l.bf16 %v671
        %v1602 = vunpack.c.h.bf16 %v671
        %v1603 = vunpack.c.l.bf16 %v672
        %v1604 = vunpack.c.h.bf16 %v672
        %v1605 = vunpack.c.l.bf16 %v673
        %v1606 = vunpack.c.h.bf16 %v673
        %v1607 = vunpack.c.l.bf16 %v674
        %v1608 = vunpack.c.h.bf16 %v674
        %v1609 = vunpack.c.l.bf16 %v675
        %v1610 = vunpack.c.h.bf16 %v675
        %v1611 = vunpack.c.l.bf16 %v676
        %v1612 = vunpack.c.h.bf16 %v676
        %v1613 = vunpack.c.l.bf16 %v677
        %v1614 = vunpack.c.h.bf16 %v677
        %v1615 = vunpack.c.l.bf16 %v678
        %v1616 = vunpack.c.h.bf16 %v678
        %v1617 = vunpack.c.l.bf16 %v679
        %v1618 = vunpack.c.h.bf16 %v679
        %v1619 = vunpack.c.l.bf16 %v680
        %v1620 = vunpack.c.h.bf16 %v680
        %v1621 = vunpack.c.l.bf16 %v681
        %v1622 = vunpack.c.h.bf16 %v681
        %v1623 = vunpack.c.l.bf16 %v682
        %v1624 = vunpack.c.h.bf16 %v682
        %v1625 = vunpack.c.l.bf16 %v683
        %v1626 = vunpack.c.h.bf16 %v683
        %v1627 = vunpack.c.l.bf16 %v684
        %v1628 = vunpack.c.h.bf16 %v684
        %v1629 = vunpack.c.l.bf16 %v685
        %v1630 = vunpack.c.h.bf16 %v685
        %v1631 = vunpack.c.l.bf16 %v686
        %v1632 = vunpack.c.h.bf16 %v686
        %v1633 = vunpack.c.l.bf16 %v687
        %v1634 = vunpack.c.h.bf16 %v687
        %v1635 = vunpack.c.l.bf16 %v688
        %v1636 = vunpack.c.h.bf16 %v688
        %v1637 = vunpack.c.l.bf16 %v689
        %v1638 = vunpack.c.h.bf16 %v689
        %v1639 = vunpack.c.l.bf16 %v690
        %v1640 = vunpack.c.h.bf16 %v690
        %v1641 = vunpack.c.l.bf16 %v691
        %v1642 = vunpack.c.h.bf16 %v691
        %v1643 = vunpack.c.l.bf16 %v692
        %v1644 = vunpack.c.h.bf16 %v692
        %v1645 = vunpack.c.l.bf16 %v693
        %v1646 = vunpack.c.h.bf16 %v693
        %v1647 = vunpack.c.l.bf16 %v694
        %v1648 = vunpack.c.h.bf16 %v694
        %v1649 = vunpack.c.l.bf16 %v695
        %v1650 = vunpack.c.h.bf16 %v695
        %v1651 = vunpack.c.l.bf16 %v696
        %v1652 = vunpack.c.h.bf16 %v696
        %v1653 = vunpack.c.l.bf16 %v697
        %v1654 = vunpack.c.h.bf16 %v697
        %v1655 = vunpack.c.l.bf16 %v698
        %v1656 = vunpack.c.h.bf16 %v698
        %v1657 = vunpack.c.l.bf16 %v699
        %v1658 = vunpack.c.h.bf16 %v699
        %v1659 = vunpack.c.l.bf16 %v700
        %v1660 = vunpack.c.h.bf16 %v700
        %v1661 = vunpack.c.l.bf16 %v701
        %v1662 = vunpack.c.h.bf16 %v701
        %v1663 = vunpack.c.l.bf16 %v702
        %v1664 = vunpack.c.h.bf16 %v702
        %v1665 = vunpack.c.l.bf16 %v703
        %v1666 = vunpack.c.h.bf16 %v703
        %v1667 = vunpack.c.l.bf16 %v704
        %v1668 = vunpack.c.h.bf16 %v704
        %v1669 = vunpack.c.l.bf16 %v705
        %v1670 = vunpack.c.h.bf16 %v705
        %v1671 = vunpack.c.l.bf16 %v706
        %v1672 = vunpack.c.h.bf16 %v706
        %v1673 = vunpack.c.l.bf16 %v707
        %v1674 = vunpack.c.h.bf16 %v707
        %v1675 = vunpack.c.l.bf16 %v708
        %v1676 = vunpack.c.h.bf16 %v708
        %v1677 = vunpack.c.l.bf16 %v709
        %v1678 = vunpack.c.h.bf16 %v709
        %v1679 = vunpack.c.l.bf16 %v710
        %v1680 = vunpack.c.h.bf16 %v710
        %v1681 = vunpack.c.l.bf16 %v711
        %v1682 = vunpack.c.h.bf16 %v711
        %v1683 = vunpack.c.l.bf16 %v712
        %v1684 = vunpack.c.h.bf16 %v712
        %v1685 = vunpack.c.l.bf16 %v713
        %v1686 = vunpack.c.h.bf16 %v713
        %v1687 = vunpack.c.l.bf16 %v714
        %v1688 = vunpack.c.h.bf16 %v714
        %v1689 = vunpack.c.l.bf16 %v715
        %v1690 = vunpack.c.h.bf16 %v715
        %v1691 = vunpack.c.l.bf16 %v716
        %v1692 = vunpack.c.h.bf16 %v716
        %v1693 = vunpack.c.l.bf16 %v717
        %v1694 = vunpack.c.h.bf16 %v717
        %v1695 = vunpack.c.l.bf16 %v718
        %v1696 = vunpack.c.h.bf16 %v718
        %v1697 = vunpack.c.l.bf16 %v719
        %v1698 = vunpack.c.h.bf16 %v719
        %v1699 = vunpack.c.l.bf16 %v720
        %v1700 = vunpack.c.h.bf16 %v720
        %v1701 = vunpack.c.l.bf16 %v721
        %v1702 = vunpack.c.h.bf16 %v721
        %v1703 = vunpack.c.l.bf16 %v722
        %v1704 = vunpack.c.h.bf16 %v722
        %v1705 = vunpack.c.l.bf16 %v723
        %v1706 = vunpack.c.h.bf16 %v723
        %v1707 = vunpack.c.l.bf16 %v724
        %v1708 = vunpack.c.h.bf16 %v724
        %v1709 = vunpack.c.l.bf16 %v725
        %v1710 = vunpack.c.h.bf16 %v725
        %v1711 = vunpack.c.l.bf16 %v726
        %v1712 = vunpack.c.h.bf16 %v726
        %v1713 = vunpack.c.l.bf16 %v727
        %v1714 = vunpack.c.h.bf16 %v727
        %v1715 = vunpack.c.l.bf16 %v728
        %v1716 = vunpack.c.h.bf16 %v728
        %v1717 = vunpack.c.l.bf16 %v729
        %v1718 = vunpack.c.h.bf16 %v729
        %v1719 = vunpack.c.l.bf16 %v730
        %v1720 = vunpack.c.h.bf16 %v730
        %v1721 = vunpack.c.l.bf16 %v731
        %v1722 = vunpack.c.h.bf16 %v731
        %v1723 = vunpack.c.l.bf16 %v732
        %v1724 = vunpack.c.h.bf16 %v732
        %v1725 = vunpack.c.l.bf16 %v733
        %v1726 = vunpack.c.h.bf16 %v733
        %v1727 = vunpack.c.l.bf16 %v734
        %v1728 = vunpack.c.h.bf16 %v734
        %v1729 = vunpack.c.l.bf16 %v735
        %v1730 = vunpack.c.h.bf16 %v735
        %v1731 = vunpack.c.l.bf16 %v736
        %v1732 = vunpack.c.h.bf16 %v736
        %v1733 = vunpack.c.l.bf16 %v737
        %v1734 = vunpack.c.h.bf16 %v737
        %v1735 = vunpack.c.l.bf16 %v738
        %v1736 = vunpack.c.h.bf16 %v738
        %v1737 = vunpack.c.l.bf16 %v739
        %v1738 = vunpack.c.h.bf16 %v739
        %v1739 = vunpack.c.l.bf16 %v740
        %v1740 = vunpack.c.h.bf16 %v740
        %v1741 = vunpack.c.l.bf16 %v741
        %v1742 = vunpack.c.h.bf16 %v741
        %v1743 = vunpack.c.l.bf16 %v742
        %v1744 = vunpack.c.h.bf16 %v742
        %v1745 = vunpack.c.l.bf16 %v743
        %v1746 = vunpack.c.h.bf16 %v743
        %v1747 = vunpack.c.l.bf16 %v744
        %v1748 = vunpack.c.h.bf16 %v744
        %v1749 = vunpack.c.l.bf16 %v745
        %v1750 = vunpack.c.h.bf16 %v745
        %v1751 = vunpack.c.l.bf16 %v746
        %v1752 = vunpack.c.h.bf16 %v746
        %v1753 = vunpack.c.l.bf16 %v747
        %v1754 = vunpack.c.h.bf16 %v747
        %v1755 = vunpack.c.l.bf16 %v748
        %v1756 = vunpack.c.h.bf16 %v748
        %v1757 = vld [vmem:[#allocation2] sm:$0xff]
        %v1758 = vld [vmem:[#allocation2 + $0x8] sm:$0xff]
        %v1759 = vld [vmem:[%s213] sm:$0xf]
        %v1762 = vperm.slane %v1757, 0
        %v1763 = vperm.slane %v1757, 1
        %v1764 = vperm.slane %v1757, 2
        %v1765 = vperm.slane %v1757, 3
        %v1766 = vperm.slane %v1757, 4
        %v1767 = vperm.slane %v1757, 5
        %v1768 = vperm.slane %v1757, 6
        %v1769 = vperm.slane %v1757, 7
        %v1770 = vperm.slane %v1758, 0
        %v1771 = vperm.slane %v1758, 1
        %v1772 = vperm.slane %v1758, 2
        %v1773 = vperm.slane %v1758, 3
        %v1774 = vperm.slane %v1758, 4
        %v1775 = vperm.slane %v1758, 5
        %v1776 = vperm.slane %v1758, 6
        %v1777 = vperm.slane %v1758, 7
        %v1794 = vperm.slane %v1759, 0
        %v1795 = vperm.slane %v1759, 1
        %v1796 = vperm.slane %v1759, 2
        %v1797 = vperm.slane %v1759, 3
        %vm1802 = vcmask 785408
        %v1803 = vsel %vm1802, %v1777, 0
        %1805 = vmatpush.msra.mxu0 %v809
        %1806 = vmatpush.msra.mxu0 %v805
        %1807 = vmatpush.msra.mxu0 %v801
        %1808 = vmatpush.msra.mxu0 %v797
        %1809 = vmatpush.msra.mxu0 %v793
        %1810 = vmatpush.msra.mxu0 %v789
        %1811 = vmatpush.msra.mxu0 %v785
        %1812 = vmatpush.msra.mxu0 %v781
        %1813 = vmatpush.msra.mxu0 %v777
        %1814 = vmatpush.msra.mxu0 %v773
        %1815 = vmatpush.msra.mxu0 %v769
        %1816 = vmatpush.msra.mxu0 %v765
        %1817 = vmatpush.msra.mxu0 %v761
        %1818 = vmatpush.msra.mxu0 %v757
        %1819 = vmatpush.msra.mxu0 %v753
        %1820 = vmatpush.msra.mxu0 %v749
        %1821 = vmatmul.f32.gmra.mxu0 %v1762
        %v1822 = vpop.f32.mrf.mxu0
        %v1823 = vadd.f32 %v1794, %v1822
        %1824 = vdwg.mxu0
        %1825 = vmatpush.msra.mxu0 %v873
        %1826 = vmatpush.msra.mxu0 %v869
        %1827 = vmatpush.msra.mxu0 %v865
        %1828 = vmatpush.msra.mxu0 %v861
        %1829 = vmatpush.msra.mxu0 %v857
        %1830 = vmatpush.msra.mxu0 %v853
        %1831 = vmatpush.msra.mxu0 %v849
        %1832 = vmatpush.msra.mxu0 %v845
        %1833 = vmatpush.msra.mxu0 %v841
        %1834 = vmatpush.msra.mxu0 %v837
        %1835 = vmatpush.msra.mxu0 %v833
        %1836 = vmatpush.msra.mxu0 %v829
        %1837 = vmatpush.msra.mxu0 %v825
        %1838 = vmatpush.msra.mxu0 %v821
        %1839 = vmatpush.msra.mxu0 %v817
        %1840 = vmatpush.msra.mxu0 %v813
        %1841 = vmatmul.f32.gmra.mxu0 %v1763
        %v1842 = vpop.f32.mrf.mxu0
        %v1843 = vadd.f32 %v1823, %v1842
        %1844 = vdwg.mxu0
        %1845 = vmatpush.msra.mxu0 %v937
        %1846 = vmatpush.msra.mxu0 %v933
        %1847 = vmatpush.msra.mxu0 %v929
        %1848 = vmatpush.msra.mxu0 %v925
        %1849 = vmatpush.msra.mxu0 %v921
        %1850 = vmatpush.msra.mxu0 %v917
        %1851 = vmatpush.msra.mxu0 %v913
        %1852 = vmatpush.msra.mxu0 %v909
        %1853 = vmatpush.msra.mxu0 %v905
        %1854 = vmatpush.msra.mxu0 %v901
        %1855 = vmatpush.msra.mxu0 %v897
        %1856 = vmatpush.msra.mxu0 %v893
        %1857 = vmatpush.msra.mxu0 %v889
        %1858 = vmatpush.msra.mxu0 %v885
        %1859 = vmatpush.msra.mxu0 %v881
        %1860 = vmatpush.msra.mxu0 %v877
        %1861 = vmatmul.f32.gmra.mxu0 %v1764
        %v1862 = vpop.f32.mrf.mxu0
        %v1863 = vadd.f32 %v1843, %v1862
        %1864 = vdwg.mxu0
        %1865 = vmatpush.msra.mxu0 %v1001
        %1866 = vmatpush.msra.mxu0 %v997
        %1867 = vmatpush.msra.mxu0 %v993
        %1868 = vmatpush.msra.mxu0 %v989
        %1869 = vmatpush.msra.mxu0 %v985
        %1870 = vmatpush.msra.mxu0 %v981
        %1871 = vmatpush.msra.mxu0 %v977
        %1872 = vmatpush.msra.mxu0 %v973
        %1873 = vmatpush.msra.mxu0 %v969
        %1874 = vmatpush.msra.mxu0 %v965
        %1875 = vmatpush.msra.mxu0 %v961
        %1876 = vmatpush.msra.mxu0 %v957
        %1877 = vmatpush.msra.mxu0 %v953
        %1878 = vmatpush.msra.mxu0 %v949
        %1879 = vmatpush.msra.mxu0 %v945
        %1880 = vmatpush.msra.mxu0 %v941
        %1881 = vmatmul.f32.gmra.mxu0 %v1765
        %v1882 = vpop.f32.mrf.mxu0
        %v1883 = vadd.f32 %v1863, %v1882
        %1884 = vdwg.mxu0
        %1885 = vmatpush.msra.mxu0 %v1065
        %1886 = vmatpush.msra.mxu0 %v1061
        %1887 = vmatpush.msra.mxu0 %v1057
        %1888 = vmatpush.msra.mxu0 %v1053
        %1889 = vmatpush.msra.mxu0 %v1049
        %1890 = vmatpush.msra.mxu0 %v1045
        %1891 = vmatpush.msra.mxu0 %v1041
        %1892 = vmatpush.msra.mxu0 %v1037
        %1893 = vmatpush.msra.mxu0 %v1033
        %1894 = vmatpush.msra.mxu0 %v1029
        %1895 = vmatpush.msra.mxu0 %v1025
        %1896 = vmatpush.msra.mxu0 %v1021
        %1897 = vmatpush.msra.mxu0 %v1017
        %1898 = vmatpush.msra.mxu0 %v1013
        %1899 = vmatpush.msra.mxu0 %v1009
        %1900 = vmatpush.msra.mxu0 %v1005
        %1901 = vmatmul.f32.gmra.mxu0 %v1766
        %v1902 = vpop.f32.mrf.mxu0
        %v1903 = vadd.f32 %v1883, %v1902
        %1904 = vdwg.mxu0
        %1905 = vmatpush.msra.mxu0 %v1129
        %1906 = vmatpush.msra.mxu0 %v1125
        %1907 = vmatpush.msra.mxu0 %v1121
        %1908 = vmatpush.msra.mxu0 %v1117
        %1909 = vmatpush.msra.mxu0 %v1113
        %1910 = vmatpush.msra.mxu0 %v1109
        %1911 = vmatpush.msra.mxu0 %v1105
        %1912 = vmatpush.msra.mxu0 %v1101
        %1913 = vmatpush.msra.mxu0 %v1097
        %1914 = vmatpush.msra.mxu0 %v1093
        %1915 = vmatpush.msra.mxu0 %v1089
        %1916 = vmatpush.msra.mxu0 %v1085
        %1917 = vmatpush.msra.mxu0 %v1081
        %1918 = vmatpush.msra.mxu0 %v1077
        %1919 = vmatpush.msra.mxu0 %v1073
        %1920 = vmatpush.msra.mxu0 %v1069
        %1921 = vmatmul.f32.gmra.mxu0 %v1767
        %v1922 = vpop.f32.mrf.mxu0
        %v1923 = vadd.f32 %v1903, %v1922
        %1924 = vdwg.mxu0
        %1925 = vmatpush.msra.mxu0 %v1193
        %1926 = vmatpush.msra.mxu0 %v1189
        %1927 = vmatpush.msra.mxu0 %v1185
        %1928 = vmatpush.msra.mxu0 %v1181
        %1929 = vmatpush.msra.mxu0 %v1177
        %1930 = vmatpush.msra.mxu0 %v1173
        %1931 = vmatpush.msra.mxu0 %v1169
        %1932 = vmatpush.msra.mxu0 %v1165
        %1933 = vmatpush.msra.mxu0 %v1161
        %1934 = vmatpush.msra.mxu0 %v1157
        %1935 = vmatpush.msra.mxu0 %v1153
        %1936 = vmatpush.msra.mxu0 %v1149
        %1937 = vmatpush.msra.mxu0 %v1145
        %1938 = vmatpush.msra.mxu0 %v1141
        %1939 = vmatpush.msra.mxu0 %v1137
        %1940 = vmatpush.msra.mxu0 %v1133
        %1941 = vmatmul.f32.gmra.mxu0 %v1768
        %v1942 = vpop.f32.mrf.mxu0
        %v1943 = vadd.f32 %v1923, %v1942
        %1944 = vdwg.mxu0
        %1945 = vmatpush.msra.mxu0 %v1257
        %1946 = vmatpush.msra.mxu0 %v1253
        %1947 = vmatpush.msra.mxu0 %v1249
        %1948 = vmatpush.msra.mxu0 %v1245
        %1949 = vmatpush.msra.mxu0 %v1241
        %1950 = vmatpush.msra.mxu0 %v1237
        %1951 = vmatpush.msra.mxu0 %v1233
        %1952 = vmatpush.msra.mxu0 %v1229
        %1953 = vmatpush.msra.mxu0 %v1225
        %1954 = vmatpush.msra.mxu0 %v1221
        %1955 = vmatpush.msra.mxu0 %v1217
        %1956 = vmatpush.msra.mxu0 %v1213
        %1957 = vmatpush.msra.mxu0 %v1209
        %1958 = vmatpush.msra.mxu0 %v1205
        %1959 = vmatpush.msra.mxu0 %v1201
        %1960 = vmatpush.msra.mxu0 %v1197
        %1961 = vmatmul.f32.gmra.mxu0 %v1769
        %v1962 = vpop.f32.mrf.mxu0
        %v1963 = vadd.f32 %v1943, %v1962
        %1964 = vdwg.mxu0
        %1965 = vmatpush.msra.mxu0 %v1321
        %1966 = vmatpush.msra.mxu0 %v1317
        %1967 = vmatpush.msra.mxu0 %v1313
        %1968 = vmatpush.msra.mxu0 %v1309
        %1969 = vmatpush.msra.mxu0 %v1305
        %1970 = vmatpush.msra.mxu0 %v1301
        %1971 = vmatpush.msra.mxu0 %v1297
        %1972 = vmatpush.msra.mxu0 %v1293
        %1973 = vmatpush.msra.mxu0 %v1289
        %1974 = vmatpush.msra.mxu0 %v1285
        %1975 = vmatpush.msra.mxu0 %v1281
        %1976 = vmatpush.msra.mxu0 %v1277
        %1977 = vmatpush.msra.mxu0 %v1273
        %1978 = vmatpush.msra.mxu0 %v1269
        %1979 = vmatpush.msra.mxu0 %v1265
        %1980 = vmatpush.msra.mxu0 %v1261
        %1981 = vmatmul.f32.gmra.mxu0 %v1770
        %v1982 = vpop.f32.mrf.mxu0
        %v1983 = vadd.f32 %v1963, %v1982
        %1984 = vdwg.mxu0
        %1985 = vmatpush.msra.mxu0 %v1385
        %1986 = vmatpush.msra.mxu0 %v1381
        %1987 = vmatpush.msra.mxu0 %v1377
        %1988 = vmatpush.msra.mxu0 %v1373
        %1989 = vmatpush.msra.mxu0 %v1369
        %1990 = vmatpush.msra.mxu0 %v1365
        %1991 = vmatpush.msra.mxu0 %v1361
        %1992 = vmatpush.msra.mxu0 %v1357
        %1993 = vmatpush.msra.mxu0 %v1353
        %1994 = vmatpush.msra.mxu0 %v1349
        %1995 = vmatpush.msra.mxu0 %v1345
        %1996 = vmatpush.msra.mxu0 %v1341
        %1997 = vmatpush.msra.mxu0 %v1337
        %1998 = vmatpush.msra.mxu0 %v1333
        %1999 = vmatpush.msra.mxu0 %v1329
        %2000 = vmatpush.msra.mxu0 %v1325
        %2001 = vmatmul.f32.gmra.mxu0 %v1771
        %v2002 = vpop.f32.mrf.mxu0
        %v2003 = vadd.f32 %v1983, %v2002
        %2004 = vdwg.mxu0
        %2005 = vmatpush.msra.mxu0 %v1449
        %2006 = vmatpush.msra.mxu0 %v1445
        %2007 = vmatpush.msra.mxu0 %v1441
        %2008 = vmatpush.msra.mxu0 %v1437
        %2009 = vmatpush.msra.mxu0 %v1433
        %2010 = vmatpush.msra.mxu0 %v1429
        %2011 = vmatpush.msra.mxu0 %v1425
        %2012 = vmatpush.msra.mxu0 %v1421
        %2013 = vmatpush.msra.mxu0 %v1417
        %2014 = vmatpush.msra.mxu0 %v1413
        %2015 = vmatpush.msra.mxu0 %v1409
        %2016 = vmatpush.msra.mxu0 %v1405
        %2017 = vmatpush.msra.mxu0 %v1401
        %2018 = vmatpush.msra.mxu0 %v1397
        %2019 = vmatpush.msra.mxu0 %v1393
        %2020 = vmatpush.msra.mxu0 %v1389
        %2021 = vmatmul.f32.gmra.mxu0 %v1772
        %v2022 = vpop.f32.mrf.mxu0
        %v2023 = vadd.f32 %v2003, %v2022
        %2024 = vdwg.mxu0
        %2025 = vmatpush.msra.mxu0 %v1513
        %2026 = vmatpush.msra.mxu0 %v1509
        %2027 = vmatpush.msra.mxu0 %v1505
        %2028 = vmatpush.msra.mxu0 %v1501
        %2029 = vmatpush.msra.mxu0 %v1497
        %2030 = vmatpush.msra.mxu0 %v1493
        %2031 = vmatpush.msra.mxu0 %v1489
        %2032 = vmatpush.msra.mxu0 %v1485
        %2033 = vmatpush.msra.mxu0 %v1481
        %2034 = vmatpush.msra.mxu0 %v1477
        %2035 = vmatpush.msra.mxu0 %v1473
        %2036 = vmatpush.msra.mxu0 %v1469
        %2037 = vmatpush.msra.mxu0 %v1465
        %2038 = vmatpush.msra.mxu0 %v1461
        %2039 = vmatpush.msra.mxu0 %v1457
        %2040 = vmatpush.msra.mxu0 %v1453
        %2041 = vmatmul.f32.gmra.mxu0 %v1773
        %v2042 = vpop.f32.mrf.mxu0
        %v2043 = vadd.f32 %v2023, %v2042
        %2044 = vdwg.mxu0
        %2045 = vmatpush.msra.mxu0 %v1577
        %2046 = vmatpush.msra.mxu0 %v1573
        %2047 = vmatpush.msra.mxu0 %v1569
        %2048 = vmatpush.msra.mxu0 %v1565
        %2049 = vmatpush.msra.mxu0 %v1561
        %2050 = vmatpush.msra.mxu0 %v1557
        %2051 = vmatpush.msra.mxu0 %v1553
        %2052 = vmatpush.msra.mxu0 %v1549
        %2053 = vmatpush.msra.mxu0 %v1545
        %2054 = vmatpush.msra.mxu0 %v1541
        %2055 = vmatpush.msra.mxu0 %v1537
        %2056 = vmatpush.msra.mxu0 %v1533
        %2057 = vmatpush.msra.mxu0 %v1529
        %2058 = vmatpush.msra.mxu0 %v1525
        %2059 = vmatpush.msra.mxu0 %v1521
        %2060 = vmatpush.msra.mxu0 %v1517
        %2061 = vmatmul.f32.gmra.mxu0 %v1774
        %v2062 = vpop.f32.mrf.mxu0
        %v2063 = vadd.f32 %v2043, %v2062
        %2064 = vdwg.mxu0
        %2065 = vmatpush.msra.mxu0 %v1641
        %2066 = vmatpush.msra.mxu0 %v1637
        %2067 = vmatpush.msra.mxu0 %v1633
        %2068 = vmatpush.msra.mxu0 %v1629
        %2069 = vmatpush.msra.mxu0 %v1625
        %2070 = vmatpush.msra.mxu0 %v1621
        %2071 = vmatpush.msra.mxu0 %v1617
        %2072 = vmatpush.msra.mxu0 %v1613
        %2073 = vmatpush.msra.mxu0 %v1609
        %2074 = vmatpush.msra.mxu0 %v1605
        %2075 = vmatpush.msra.mxu0 %v1601
        %2076 = vmatpush.msra.mxu0 %v1597
        %2077 = vmatpush.msra.mxu0 %v1593
        %2078 = vmatpush.msra.mxu0 %v1589
        %2079 = vmatpush.msra.mxu0 %v1585
        %2080 = vmatpush.msra.mxu0 %v1581
        %2081 = vmatmul.f32.gmra.mxu0 %v1775
        %v2082 = vpop.f32.mrf.mxu0
        %v2083 = vadd.f32 %v2063, %v2082
        %2084 = vdwg.mxu0
        %2085 = vmatpush.msra.mxu0 %v1705
        %2086 = vmatpush.msra.mxu0 %v1701
        %2087 = vmatpush.msra.mxu0 %v1697
        %2088 = vmatpush.msra.mxu0 %v1693
        %2089 = vmatpush.msra.mxu0 %v1689
        %2090 = vmatpush.msra.mxu0 %v1685
        %2091 = vmatpush.msra.mxu0 %v1681
        %2092 = vmatpush.msra.mxu0 %v1677
        %2093 = vmatpush.msra.mxu0 %v1673
        %2094 = vmatpush.msra.mxu0 %v1669
        %2095 = vmatpush.msra.mxu0 %v1665
        %2096 = vmatpush.msra.mxu0 %v1661
        %2097 = vmatpush.msra.mxu0 %v1657
        %2098 = vmatpush.msra.mxu0 %v1653
        %2099 = vmatpush.msra.mxu0 %v1649
        %2100 = vmatpush.msra.mxu0 %v1645
        %2101 = vmatmul.f32.gmra.mxu0 %v1776
        %v2102 = vpop.f32.mrf.mxu0
        %v2103 = vadd.f32 %v2083, %v2102
        %2104 = vdwg.mxu0
        %2105 = vmatpush.msra.mxu0 0.0
        %2106 = vmatpush.msra.mxu0 0.0
        %2107 = vmatpush.msra.mxu0 0.0
        %2108 = vmatpush.msra.mxu0 0.0
        %2109 = vmatpush.msra.mxu0 %v1753
        %2110 = vmatpush.msra.mxu0 %v1749
        %2111 = vmatpush.msra.mxu0 %v1745
        %2112 = vmatpush.msra.mxu0 %v1741
        %2113 = vmatpush.msra.mxu0 %v1737
        %2114 = vmatpush.msra.mxu0 %v1733
        %2115 = vmatpush.msra.mxu0 %v1729
        %2116 = vmatpush.msra.mxu0 %v1725
        %2117 = vmatpush.msra.mxu0 %v1721
        %2118 = vmatpush.msra.mxu0 %v1717
        %2119 = vmatpush.msra.mxu0 %v1713
        %2120 = vmatpush.msra.mxu0 %v1709
        %2121 = vmatmul.f32.gmra.mxu0 %v1803
        %v2122 = vpop.f32.mrf.mxu0
        %v2123 = vadd.f32 %v2103, %v2122
        %2124 = vdwg.mxu0
        %2125 = vmatpush.msra.mxu0 %v810
        %2126 = vmatpush.msra.mxu0 %v806
        %2127 = vmatpush.msra.mxu0 %v802
        %2128 = vmatpush.msra.mxu0 %v798
        %2129 = vmatpush.msra.mxu0 %v794
        %2130 = vmatpush.msra.mxu0 %v790
        %2131 = vmatpush.msra.mxu0 %v786
        %2132 = vmatpush.msra.mxu0 %v782
        %2133 = vmatpush.msra.mxu0 %v778
        %2134 = vmatpush.msra.mxu0 %v774
        %2135 = vmatpush.msra.mxu0 %v770
        %2136 = vmatpush.msra.mxu0 %v766
        %2137 = vmatpush.msra.mxu0 %v762
        %2138 = vmatpush.msra.mxu0 %v758
        %2139 = vmatpush.msra.mxu0 %v754
        %2140 = vmatpush.msra.mxu0 %v750
        %2141 = vmatmul.f32.gmra.mxu0 %v1762
        %v2142 = vpop.f32.mrf.mxu0
        %v2143 = vadd.f32 %v1795, %v2142
        %2144 = vdwg.mxu0
        %2145 = vmatpush.msra.mxu0 %v874
        %2146 = vmatpush.msra.mxu0 %v870
        %2147 = vmatpush.msra.mxu0 %v866
        %2148 = vmatpush.msra.mxu0 %v862
        %2149 = vmatpush.msra.mxu0 %v858
        %2150 = vmatpush.msra.mxu0 %v854
        %2151 = vmatpush.msra.mxu0 %v850
        %2152 = vmatpush.msra.mxu0 %v846
        %2153 = vmatpush.msra.mxu0 %v842
        %2154 = vmatpush.msra.mxu0 %v838
        %2155 = vmatpush.msra.mxu0 %v834
        %2156 = vmatpush.msra.mxu0 %v830
        %2157 = vmatpush.msra.mxu0 %v826
        %2158 = vmatpush.msra.mxu0 %v822
        %2159 = vmatpush.msra.mxu0 %v818
        %2160 = vmatpush.msra.mxu0 %v814
        %2161 = vmatmul.f32.gmra.mxu0 %v1763
        %v2162 = vpop.f32.mrf.mxu0
        %v2163 = vadd.f32 %v2143, %v2162
        %2164 = vdwg.mxu0
        %2165 = vmatpush.msra.mxu0 %v938
        %2166 = vmatpush.msra.mxu0 %v934
        %2167 = vmatpush.msra.mxu0 %v930
        %2168 = vmatpush.msra.mxu0 %v926
        %2169 = vmatpush.msra.mxu0 %v922
        %2170 = vmatpush.msra.mxu0 %v918
        %2171 = vmatpush.msra.mxu0 %v914
        %2172 = vmatpush.msra.mxu0 %v910
        %2173 = vmatpush.msra.mxu0 %v906
        %2174 = vmatpush.msra.mxu0 %v902
        %2175 = vmatpush.msra.mxu0 %v898
        %2176 = vmatpush.msra.mxu0 %v894
        %2177 = vmatpush.msra.mxu0 %v890
        %2178 = vmatpush.msra.mxu0 %v886
        %2179 = vmatpush.msra.mxu0 %v882
        %2180 = vmatpush.msra.mxu0 %v878
        %2181 = vmatmul.f32.gmra.mxu0 %v1764
        %v2182 = vpop.f32.mrf.mxu0
        %v2183 = vadd.f32 %v2163, %v2182
        %2184 = vdwg.mxu0
        %2185 = vmatpush.msra.mxu0 %v1002
        %2186 = vmatpush.msra.mxu0 %v998
        %2187 = vmatpush.msra.mxu0 %v994
        %2188 = vmatpush.msra.mxu0 %v990
        %2189 = vmatpush.msra.mxu0 %v986
        %2190 = vmatpush.msra.mxu0 %v982
        %2191 = vmatpush.msra.mxu0 %v978
        %2192 = vmatpush.msra.mxu0 %v974
        %2193 = vmatpush.msra.mxu0 %v970
        %2194 = vmatpush.msra.mxu0 %v966
        %2195 = vmatpush.msra.mxu0 %v962
        %2196 = vmatpush.msra.mxu0 %v958
        %2197 = vmatpush.msra.mxu0 %v954
        %2198 = vmatpush.msra.mxu0 %v950
        %2199 = vmatpush.msra.mxu0 %v946
        %2200 = vmatpush.msra.mxu0 %v942
        %2201 = vmatmul.f32.gmra.mxu0 %v1765
        %v2202 = vpop.f32.mrf.mxu0
        %v2203 = vadd.f32 %v2183, %v2202
        %2204 = vdwg.mxu0
        %2205 = vmatpush.msra.mxu0 %v1066
        %2206 = vmatpush.msra.mxu0 %v1062
        %2207 = vmatpush.msra.mxu0 %v1058
        %2208 = vmatpush.msra.mxu0 %v1054
        %2209 = vmatpush.msra.mxu0 %v1050
        %2210 = vmatpush.msra.mxu0 %v1046
        %2211 = vmatpush.msra.mxu0 %v1042
        %2212 = vmatpush.msra.mxu0 %v1038
        %2213 = vmatpush.msra.mxu0 %v1034
        %2214 = vmatpush.msra.mxu0 %v1030
        %2215 = vmatpush.msra.mxu0 %v1026
        %2216 = vmatpush.msra.mxu0 %v1022
        %2217 = vmatpush.msra.mxu0 %v1018
        %2218 = vmatpush.msra.mxu0 %v1014
        %2219 = vmatpush.msra.mxu0 %v1010
        %2220 = vmatpush.msra.mxu0 %v1006
        %2221 = vmatmul.f32.gmra.mxu0 %v1766
        %v2222 = vpop.f32.mrf.mxu0
        %v2223 = vadd.f32 %v2203, %v2222
        %2224 = vdwg.mxu0
        %2225 = vmatpush.msra.mxu0 %v1130
        %2226 = vmatpush.msra.mxu0 %v1126
        %2227 = vmatpush.msra.mxu0 %v1122
        %2228 = vmatpush.msra.mxu0 %v1118
        %2229 = vmatpush.msra.mxu0 %v1114
        %2230 = vmatpush.msra.mxu0 %v1110
        %2231 = vmatpush.msra.mxu0 %v1106
        %2232 = vmatpush.msra.mxu0 %v1102
        %2233 = vmatpush.msra.mxu0 %v1098
        %2234 = vmatpush.msra.mxu0 %v1094
        %2235 = vmatpush.msra.mxu0 %v1090
        %2236 = vmatpush.msra.mxu0 %v1086
        %2237 = vmatpush.msra.mxu0 %v1082
        %2238 = vmatpush.msra.mxu0 %v1078
        %2239 = vmatpush.msra.mxu0 %v1074
        %2240 = vmatpush.msra.mxu0 %v1070
        %2241 = vmatmul.f32.gmra.mxu0 %v1767
        %v2242 = vpop.f32.mrf.mxu0
        %v2243 = vadd.f32 %v2223, %v2242
        %2244 = vdwg.mxu0
        %2245 = vmatpush.msra.mxu0 %v1194
        %2246 = vmatpush.msra.mxu0 %v1190
        %2247 = vmatpush.msra.mxu0 %v1186
        %2248 = vmatpush.msra.mxu0 %v1182
        %2249 = vmatpush.msra.mxu0 %v1178
        %2250 = vmatpush.msra.mxu0 %v1174
        %2251 = vmatpush.msra.mxu0 %v1170
        %2252 = vmatpush.msra.mxu0 %v1166
        %2253 = vmatpush.msra.mxu0 %v1162
        %2254 = vmatpush.msra.mxu0 %v1158
        %2255 = vmatpush.msra.mxu0 %v1154
        %2256 = vmatpush.msra.mxu0 %v1150
        %2257 = vmatpush.msra.mxu0 %v1146
        %2258 = vmatpush.msra.mxu0 %v1142
        %2259 = vmatpush.msra.mxu0 %v1138
        %2260 = vmatpush.msra.mxu0 %v1134
        %2261 = vmatmul.f32.gmra.mxu0 %v1768
        %v2262 = vpop.f32.mrf.mxu0
        %v2263 = vadd.f32 %v2243, %v2262
        %2264 = vdwg.mxu0
        %2265 = vmatpush.msra.mxu0 %v1258
        %2266 = vmatpush.msra.mxu0 %v1254
        %2267 = vmatpush.msra.mxu0 %v1250
        %2268 = vmatpush.msra.mxu0 %v1246
        %2269 = vmatpush.msra.mxu0 %v1242
        %2270 = vmatpush.msra.mxu0 %v1238
        %2271 = vmatpush.msra.mxu0 %v1234
        %2272 = vmatpush.msra.mxu0 %v1230
        %2273 = vmatpush.msra.mxu0 %v1226
        %2274 = vmatpush.msra.mxu0 %v1222
        %2275 = vmatpush.msra.mxu0 %v1218
        %2276 = vmatpush.msra.mxu0 %v1214
        %2277 = vmatpush.msra.mxu0 %v1210
        %2278 = vmatpush.msra.mxu0 %v1206
        %2279 = vmatpush.msra.mxu0 %v1202
        %2280 = vmatpush.msra.mxu0 %v1198
        %2281 = vmatmul.f32.gmra.mxu0 %v1769
        %v2282 = vpop.f32.mrf.mxu0
        %v2283 = vadd.f32 %v2263, %v2282
        %2284 = vdwg.mxu0
        %2285 = vmatpush.msra.mxu0 %v1322
        %2286 = vmatpush.msra.mxu0 %v1318
        %2287 = vmatpush.msra.mxu0 %v1314
        %2288 = vmatpush.msra.mxu0 %v1310
        %2289 = vmatpush.msra.mxu0 %v1306
        %2290 = vmatpush.msra.mxu0 %v1302
        %2291 = vmatpush.msra.mxu0 %v1298
        %2292 = vmatpush.msra.mxu0 %v1294
        %2293 = vmatpush.msra.mxu0 %v1290
        %2294 = vmatpush.msra.mxu0 %v1286
        %2295 = vmatpush.msra.mxu0 %v1282
        %2296 = vmatpush.msra.mxu0 %v1278
        %2297 = vmatpush.msra.mxu0 %v1274
        %2298 = vmatpush.msra.mxu0 %v1270
        %2299 = vmatpush.msra.mxu0 %v1266
        %2300 = vmatpush.msra.mxu0 %v1262
        %2301 = vmatmul.f32.gmra.mxu0 %v1770
        %v2302 = vpop.f32.mrf.mxu0
        %v2303 = vadd.f32 %v2283, %v2302
        %2304 = vdwg.mxu0
        %2305 = vmatpush.msra.mxu0 %v1386
        %2306 = vmatpush.msra.mxu0 %v1382
        %2307 = vmatpush.msra.mxu0 %v1378
        %2308 = vmatpush.msra.mxu0 %v1374
        %2309 = vmatpush.msra.mxu0 %v1370
        %2310 = vmatpush.msra.mxu0 %v1366
        %2311 = vmatpush.msra.mxu0 %v1362
        %2312 = vmatpush.msra.mxu0 %v1358
        %2313 = vmatpush.msra.mxu0 %v1354
        %2314 = vmatpush.msra.mxu0 %v1350
        %2315 = vmatpush.msra.mxu0 %v1346
        %2316 = vmatpush.msra.mxu0 %v1342
        %2317 = vmatpush.msra.mxu0 %v1338
        %2318 = vmatpush.msra.mxu0 %v1334
        %2319 = vmatpush.msra.mxu0 %v1330
        %2320 = vmatpush.msra.mxu0 %v1326
        %2321 = vmatmul.f32.gmra.mxu0 %v1771
        %v2322 = vpop.f32.mrf.mxu0
        %v2323 = vadd.f32 %v2303, %v2322
        %2324 = vdwg.mxu0
        %2325 = vmatpush.msra.mxu0 %v1450
        %2326 = vmatpush.msra.mxu0 %v1446
        %2327 = vmatpush.msra.mxu0 %v1442
        %2328 = vmatpush.msra.mxu0 %v1438
        %2329 = vmatpush.msra.mxu0 %v1434
        %2330 = vmatpush.msra.mxu0 %v1430
        %2331 = vmatpush.msra.mxu0 %v1426
        %2332 = vmatpush.msra.mxu0 %v1422
        %2333 = vmatpush.msra.mxu0 %v1418
        %2334 = vmatpush.msra.mxu0 %v1414
        %2335 = vmatpush.msra.mxu0 %v1410
        %2336 = vmatpush.msra.mxu0 %v1406
        %2337 = vmatpush.msra.mxu0 %v1402
        %2338 = vmatpush.msra.mxu0 %v1398
        %2339 = vmatpush.msra.mxu0 %v1394
        %2340 = vmatpush.msra.mxu0 %v1390
        %2341 = vmatmul.f32.gmra.mxu0 %v1772
        %v2342 = vpop.f32.mrf.mxu0
        %v2343 = vadd.f32 %v2323, %v2342
        %2344 = vdwg.mxu0
        %2345 = vmatpush.msra.mxu0 %v1514
        %2346 = vmatpush.msra.mxu0 %v1510
        %2347 = vmatpush.msra.mxu0 %v1506
        %2348 = vmatpush.msra.mxu0 %v1502
        %2349 = vmatpush.msra.mxu0 %v1498
        %2350 = vmatpush.msra.mxu0 %v1494
        %2351 = vmatpush.msra.mxu0 %v1490
        %2352 = vmatpush.msra.mxu0 %v1486
        %2353 = vmatpush.msra.mxu0 %v1482
        %2354 = vmatpush.msra.mxu0 %v1478
        %2355 = vmatpush.msra.mxu0 %v1474
        %2356 = vmatpush.msra.mxu0 %v1470
        %2357 = vmatpush.msra.mxu0 %v1466
        %2358 = vmatpush.msra.mxu0 %v1462
        %2359 = vmatpush.msra.mxu0 %v1458
        %2360 = vmatpush.msra.mxu0 %v1454
        %2361 = vmatmul.f32.gmra.mxu0 %v1773
        %v2362 = vpop.f32.mrf.mxu0
        %v2363 = vadd.f32 %v2343, %v2362
        %2364 = vdwg.mxu0
        %2365 = vmatpush.msra.mxu0 %v1578
        %2366 = vmatpush.msra.mxu0 %v1574
        %2367 = vmatpush.msra.mxu0 %v1570
        %2368 = vmatpush.msra.mxu0 %v1566
        %2369 = vmatpush.msra.mxu0 %v1562
        %2370 = vmatpush.msra.mxu0 %v1558
        %2371 = vmatpush.msra.mxu0 %v1554
        %2372 = vmatpush.msra.mxu0 %v1550
        %2373 = vmatpush.msra.mxu0 %v1546
        %2374 = vmatpush.msra.mxu0 %v1542
        %2375 = vmatpush.msra.mxu0 %v1538
        %2376 = vmatpush.msra.mxu0 %v1534
        %2377 = vmatpush.msra.mxu0 %v1530
        %2378 = vmatpush.msra.mxu0 %v1526
        %2379 = vmatpush.msra.mxu0 %v1522
        %2380 = vmatpush.msra.mxu0 %v1518
        %2381 = vmatmul.f32.gmra.mxu0 %v1774
        %v2382 = vpop.f32.mrf.mxu0
        %v2383 = vadd.f32 %v2363, %v2382
        %2384 = vdwg.mxu0
        %2385 = vmatpush.msra.mxu0 %v1642
        %2386 = vmatpush.msra.mxu0 %v1638
        %2387 = vmatpush.msra.mxu0 %v1634
        %2388 = vmatpush.msra.mxu0 %v1630
        %2389 = vmatpush.msra.mxu0 %v1626
        %2390 = vmatpush.msra.mxu0 %v1622
        %2391 = vmatpush.msra.mxu0 %v1618
        %2392 = vmatpush.msra.mxu0 %v1614
        %2393 = vmatpush.msra.mxu0 %v1610
        %2394 = vmatpush.msra.mxu0 %v1606
        %2395 = vmatpush.msra.mxu0 %v1602
        %2396 = vmatpush.msra.mxu0 %v1598
        %2397 = vmatpush.msra.mxu0 %v1594
        %2398 = vmatpush.msra.mxu0 %v1590
        %2399 = vmatpush.msra.mxu0 %v1586
        %2400 = vmatpush.msra.mxu0 %v1582
        %2401 = vmatmul.f32.gmra.mxu0 %v1775
        %v2402 = vpop.f32.mrf.mxu0
        %v2403 = vadd.f32 %v2383, %v2402
        %2404 = vdwg.mxu0
        %2405 = vmatpush.msra.mxu0 %v1706
        %2406 = vmatpush.msra.mxu0 %v1702
        %2407 = vmatpush.msra.mxu0 %v1698
        %2408 = vmatpush.msra.mxu0 %v1694
        %2409 = vmatpush.msra.mxu0 %v1690
        %2410 = vmatpush.msra.mxu0 %v1686
        %2411 = vmatpush.msra.mxu0 %v1682
        %2412 = vmatpush.msra.mxu0 %v1678
        %2413 = vmatpush.msra.mxu0 %v1674
        %2414 = vmatpush.msra.mxu0 %v1670
        %2415 = vmatpush.msra.mxu0 %v1666
        %2416 = vmatpush.msra.mxu0 %v1662
        %2417 = vmatpush.msra.mxu0 %v1658
        %2418 = vmatpush.msra.mxu0 %v1654
        %2419 = vmatpush.msra.mxu0 %v1650
        %2420 = vmatpush.msra.mxu0 %v1646
        %2421 = vmatmul.f32.gmra.mxu0 %v1776
        %v2422 = vpop.f32.mrf.mxu0
        %v2423 = vadd.f32 %v2403, %v2422
        %2424 = vdwg.mxu0
        %2425 = vmatpush.msra.mxu0 0.0
        %2426 = vmatpush.msra.mxu0 0.0
        %2427 = vmatpush.msra.mxu0 0.0
        %2428 = vmatpush.msra.mxu0 0.0
        %2429 = vmatpush.msra.mxu0 %v1754
        %2430 = vmatpush.msra.mxu0 %v1750
        %2431 = vmatpush.msra.mxu0 %v1746
        %2432 = vmatpush.msra.mxu0 %v1742
        %2433 = vmatpush.msra.mxu0 %v1738
        %2434 = vmatpush.msra.mxu0 %v1734
        %2435 = vmatpush.msra.mxu0 %v1730
        %2436 = vmatpush.msra.mxu0 %v1726
        %2437 = vmatpush.msra.mxu0 %v1722
        %2438 = vmatpush.msra.mxu0 %v1718
        %2439 = vmatpush.msra.mxu0 %v1714
        %2440 = vmatpush.msra.mxu0 %v1710
        %2441 = vmatmul.f32.gmra.mxu0 %v1803
        %v2442 = vpop.f32.mrf.mxu0
        %v2443 = vadd.f32 %v2423, %v2442
        %2444 = vdwg.mxu0
        %2445 = vmatpush.msra.mxu0 %v811
        %2446 = vmatpush.msra.mxu0 %v807
        %2447 = vmatpush.msra.mxu0 %v803
        %2448 = vmatpush.msra.mxu0 %v799
        %2449 = vmatpush.msra.mxu0 %v795
        %2450 = vmatpush.msra.mxu0 %v791
        %2451 = vmatpush.msra.mxu0 %v787
        %2452 = vmatpush.msra.mxu0 %v783
        %2453 = vmatpush.msra.mxu0 %v779
        %2454 = vmatpush.msra.mxu0 %v775
        %2455 = vmatpush.msra.mxu0 %v771
        %2456 = vmatpush.msra.mxu0 %v767
        %2457 = vmatpush.msra.mxu0 %v763
        %2458 = vmatpush.msra.mxu0 %v759
        %2459 = vmatpush.msra.mxu0 %v755
        %2460 = vmatpush.msra.mxu0 %v751
        %2461 = vmatmul.f32.gmra.mxu0 %v1762
        %v2462 = vpop.f32.mrf.mxu0
        %v2463 = vadd.f32 %v1796, %v2462
        %2464 = vdwg.mxu0
        %2465 = vmatpush.msra.mxu0 %v875
        %2466 = vmatpush.msra.mxu0 %v871
        %2467 = vmatpush.msra.mxu0 %v867
        %2468 = vmatpush.msra.mxu0 %v863
        %2469 = vmatpush.msra.mxu0 %v859
        %2470 = vmatpush.msra.mxu0 %v855
        %2471 = vmatpush.msra.mxu0 %v851
        %2472 = vmatpush.msra.mxu0 %v847
        %2473 = vmatpush.msra.mxu0 %v843
        %2474 = vmatpush.msra.mxu0 %v839
        %2475 = vmatpush.msra.mxu0 %v835
        %2476 = vmatpush.msra.mxu0 %v831
        %2477 = vmatpush.msra.mxu0 %v827
        %2478 = vmatpush.msra.mxu0 %v823
        %2479 = vmatpush.msra.mxu0 %v819
        %2480 = vmatpush.msra.mxu0 %v815
        %2481 = vmatmul.f32.gmra.mxu0 %v1763
        %v2482 = vpop.f32.mrf.mxu0
        %v2483 = vadd.f32 %v2463, %v2482
        %2484 = vdwg.mxu0
        %2485 = vmatpush.msra.mxu0 %v939
        %2486 = vmatpush.msra.mxu0 %v935
        %2487 = vmatpush.msra.mxu0 %v931
        %2488 = vmatpush.msra.mxu0 %v927
        %2489 = vmatpush.msra.mxu0 %v923
        %2490 = vmatpush.msra.mxu0 %v919
        %2491 = vmatpush.msra.mxu0 %v915
        %2492 = vmatpush.msra.mxu0 %v911
        %2493 = vmatpush.msra.mxu0 %v907
        %2494 = vmatpush.msra.mxu0 %v903
        %2495 = vmatpush.msra.mxu0 %v899
        %2496 = vmatpush.msra.mxu0 %v895
        %2497 = vmatpush.msra.mxu0 %v891
        %2498 = vmatpush.msra.mxu0 %v887
        %2499 = vmatpush.msra.mxu0 %v883
        %2500 = vmatpush.msra.mxu0 %v879
        %2501 = vmatmul.f32.gmra.mxu0 %v1764
        %v2502 = vpop.f32.mrf.mxu0
        %v2503 = vadd.f32 %v2483, %v2502
        %2504 = vdwg.mxu0
        %2505 = vmatpush.msra.mxu0 %v1003
        %2506 = vmatpush.msra.mxu0 %v999
        %2507 = vmatpush.msra.mxu0 %v995
        %2508 = vmatpush.msra.mxu0 %v991
        %2509 = vmatpush.msra.mxu0 %v987
        %2510 = vmatpush.msra.mxu0 %v983
        %2511 = vmatpush.msra.mxu0 %v979
        %2512 = vmatpush.msra.mxu0 %v975
        %2513 = vmatpush.msra.mxu0 %v971
        %2514 = vmatpush.msra.mxu0 %v967
        %2515 = vmatpush.msra.mxu0 %v963
        %2516 = vmatpush.msra.mxu0 %v959
        %2517 = vmatpush.msra.mxu0 %v955
        %2518 = vmatpush.msra.mxu0 %v951
        %2519 = vmatpush.msra.mxu0 %v947
        %2520 = vmatpush.msra.mxu0 %v943
        %2521 = vmatmul.f32.gmra.mxu0 %v1765
        %v2522 = vpop.f32.mrf.mxu0
        %v2523 = vadd.f32 %v2503, %v2522
        %2524 = vdwg.mxu0
        %2525 = vmatpush.msra.mxu0 %v1067
        %2526 = vmatpush.msra.mxu0 %v1063
        %2527 = vmatpush.msra.mxu0 %v1059
        %2528 = vmatpush.msra.mxu0 %v1055
        %2529 = vmatpush.msra.mxu0 %v1051
        %2530 = vmatpush.msra.mxu0 %v1047
        %2531 = vmatpush.msra.mxu0 %v1043
        %2532 = vmatpush.msra.mxu0 %v1039
        %2533 = vmatpush.msra.mxu0 %v1035
        %2534 = vmatpush.msra.mxu0 %v1031
        %2535 = vmatpush.msra.mxu0 %v1027
        %2536 = vmatpush.msra.mxu0 %v1023
        %2537 = vmatpush.msra.mxu0 %v1019
        %2538 = vmatpush.msra.mxu0 %v1015
        %2539 = vmatpush.msra.mxu0 %v1011
        %2540 = vmatpush.msra.mxu0 %v1007
        %2541 = vmatmul.f32.gmra.mxu0 %v1766
        %v2542 = vpop.f32.mrf.mxu0
        %v2543 = vadd.f32 %v2523, %v2542
        %2544 = vdwg.mxu0
        %2545 = vmatpush.msra.mxu0 %v1131
        %2546 = vmatpush.msra.mxu0 %v1127
        %2547 = vmatpush.msra.mxu0 %v1123
        %2548 = vmatpush.msra.mxu0 %v1119
        %2549 = vmatpush.msra.mxu0 %v1115
        %2550 = vmatpush.msra.mxu0 %v1111
        %2551 = vmatpush.msra.mxu0 %v1107
        %2552 = vmatpush.msra.mxu0 %v1103
        %2553 = vmatpush.msra.mxu0 %v1099
        %2554 = vmatpush.msra.mxu0 %v1095
        %2555 = vmatpush.msra.mxu0 %v1091
        %2556 = vmatpush.msra.mxu0 %v1087
        %2557 = vmatpush.msra.mxu0 %v1083
        %2558 = vmatpush.msra.mxu0 %v1079
        %2559 = vmatpush.msra.mxu0 %v1075
        %2560 = vmatpush.msra.mxu0 %v1071
        %2561 = vmatmul.f32.gmra.mxu0 %v1767
        %v2562 = vpop.f32.mrf.mxu0
        %v2563 = vadd.f32 %v2543, %v2562
        %2564 = vdwg.mxu0
        %2565 = vmatpush.msra.mxu0 %v1195
        %2566 = vmatpush.msra.mxu0 %v1191
        %2567 = vmatpush.msra.mxu0 %v1187
        %2568 = vmatpush.msra.mxu0 %v1183
        %2569 = vmatpush.msra.mxu0 %v1179
        %2570 = vmatpush.msra.mxu0 %v1175
        %2571 = vmatpush.msra.mxu0 %v1171
        %2572 = vmatpush.msra.mxu0 %v1167
        %2573 = vmatpush.msra.mxu0 %v1163
        %2574 = vmatpush.msra.mxu0 %v1159
        %2575 = vmatpush.msra.mxu0 %v1155
        %2576 = vmatpush.msra.mxu0 %v1151
        %2577 = vmatpush.msra.mxu0 %v1147
        %2578 = vmatpush.msra.mxu0 %v1143
        %2579 = vmatpush.msra.mxu0 %v1139
        %2580 = vmatpush.msra.mxu0 %v1135
        %2581 = vmatmul.f32.gmra.mxu0 %v1768
        %v2582 = vpop.f32.mrf.mxu0
        %v2583 = vadd.f32 %v2563, %v2582
        %2584 = vdwg.mxu0
        %2585 = vmatpush.msra.mxu0 %v1259
        %2586 = vmatpush.msra.mxu0 %v1255
        %2587 = vmatpush.msra.mxu0 %v1251
        %2588 = vmatpush.msra.mxu0 %v1247
        %2589 = vmatpush.msra.mxu0 %v1243
        %2590 = vmatpush.msra.mxu0 %v1239
        %2591 = vmatpush.msra.mxu0 %v1235
        %2592 = vmatpush.msra.mxu0 %v1231
        %2593 = vmatpush.msra.mxu0 %v1227
        %2594 = vmatpush.msra.mxu0 %v1223
        %2595 = vmatpush.msra.mxu0 %v1219
        %2596 = vmatpush.msra.mxu0 %v1215
        %2597 = vmatpush.msra.mxu0 %v1211
        %2598 = vmatpush.msra.mxu0 %v1207
        %2599 = vmatpush.msra.mxu0 %v1203
        %2600 = vmatpush.msra.mxu0 %v1199
        %2601 = vmatmul.f32.gmra.mxu0 %v1769
        %v2602 = vpop.f32.mrf.mxu0
        %v2603 = vadd.f32 %v2583, %v2602
        %2604 = vdwg.mxu0
        %2605 = vmatpush.msra.mxu0 %v1323
        %2606 = vmatpush.msra.mxu0 %v1319
        %2607 = vmatpush.msra.mxu0 %v1315
        %2608 = vmatpush.msra.mxu0 %v1311
        %2609 = vmatpush.msra.mxu0 %v1307
        %2610 = vmatpush.msra.mxu0 %v1303
        %2611 = vmatpush.msra.mxu0 %v1299
        %2612 = vmatpush.msra.mxu0 %v1295
        %2613 = vmatpush.msra.mxu0 %v1291
        %2614 = vmatpush.msra.mxu0 %v1287
        %2615 = vmatpush.msra.mxu0 %v1283
        %2616 = vmatpush.msra.mxu0 %v1279
        %2617 = vmatpush.msra.mxu0 %v1275
        %2618 = vmatpush.msra.mxu0 %v1271
        %2619 = vmatpush.msra.mxu0 %v1267
        %2620 = vmatpush.msra.mxu0 %v1263
        %2621 = vmatmul.f32.gmra.mxu0 %v1770
        %v2622 = vpop.f32.mrf.mxu0
        %v2623 = vadd.f32 %v2603, %v2622
        %2624 = vdwg.mxu0
        %2625 = vmatpush.msra.mxu0 %v1387
        %2626 = vmatpush.msra.mxu0 %v1383
        %2627 = vmatpush.msra.mxu0 %v1379
        %2628 = vmatpush.msra.mxu0 %v1375
        %2629 = vmatpush.msra.mxu0 %v1371
        %2630 = vmatpush.msra.mxu0 %v1367
        %2631 = vmatpush.msra.mxu0 %v1363
        %2632 = vmatpush.msra.mxu0 %v1359
        %2633 = vmatpush.msra.mxu0 %v1355
        %2634 = vmatpush.msra.mxu0 %v1351
        %2635 = vmatpush.msra.mxu0 %v1347
        %2636 = vmatpush.msra.mxu0 %v1343
        %2637 = vmatpush.msra.mxu0 %v1339
        %2638 = vmatpush.msra.mxu0 %v1335
        %2639 = vmatpush.msra.mxu0 %v1331
        %2640 = vmatpush.msra.mxu0 %v1327
        %2641 = vmatmul.f32.gmra.mxu0 %v1771
        %v2642 = vpop.f32.mrf.mxu0
        %v2643 = vadd.f32 %v2623, %v2642
        %2644 = vdwg.mxu0
        %2645 = vmatpush.msra.mxu0 %v1451
        %2646 = vmatpush.msra.mxu0 %v1447
        %2647 = vmatpush.msra.mxu0 %v1443
        %2648 = vmatpush.msra.mxu0 %v1439
        %2649 = vmatpush.msra.mxu0 %v1435
        %2650 = vmatpush.msra.mxu0 %v1431
        %2651 = vmatpush.msra.mxu0 %v1427
        %2652 = vmatpush.msra.mxu0 %v1423
        %2653 = vmatpush.msra.mxu0 %v1419
        %2654 = vmatpush.msra.mxu0 %v1415
        %2655 = vmatpush.msra.mxu0 %v1411
        %2656 = vmatpush.msra.mxu0 %v1407
        %2657 = vmatpush.msra.mxu0 %v1403
        %2658 = vmatpush.msra.mxu0 %v1399
        %2659 = vmatpush.msra.mxu0 %v1395
        %2660 = vmatpush.msra.mxu0 %v1391
        %2661 = vmatmul.f32.gmra.mxu0 %v1772
        %v2662 = vpop.f32.mrf.mxu0
        %v2663 = vadd.f32 %v2643, %v2662
        %2664 = vdwg.mxu0
        %2665 = vmatpush.msra.mxu0 %v1515
        %2666 = vmatpush.msra.mxu0 %v1511
        %2667 = vmatpush.msra.mxu0 %v1507
        %2668 = vmatpush.msra.mxu0 %v1503
        %2669 = vmatpush.msra.mxu0 %v1499
        %2670 = vmatpush.msra.mxu0 %v1495
        %2671 = vmatpush.msra.mxu0 %v1491
        %2672 = vmatpush.msra.mxu0 %v1487
        %2673 = vmatpush.msra.mxu0 %v1483
        %2674 = vmatpush.msra.mxu0 %v1479
        %2675 = vmatpush.msra.mxu0 %v1475
        %2676 = vmatpush.msra.mxu0 %v1471
        %2677 = vmatpush.msra.mxu0 %v1467
        %2678 = vmatpush.msra.mxu0 %v1463
        %2679 = vmatpush.msra.mxu0 %v1459
        %2680 = vmatpush.msra.mxu0 %v1455
        %2681 = vmatmul.f32.gmra.mxu0 %v1773
        %v2682 = vpop.f32.mrf.mxu0
        %v2683 = vadd.f32 %v2663, %v2682
        %2684 = vdwg.mxu0
        %2685 = vmatpush.msra.mxu0 %v1579
        %2686 = vmatpush.msra.mxu0 %v1575
        %2687 = vmatpush.msra.mxu0 %v1571
        %2688 = vmatpush.msra.mxu0 %v1567
        %2689 = vmatpush.msra.mxu0 %v1563
        %2690 = vmatpush.msra.mxu0 %v1559
        %2691 = vmatpush.msra.mxu0 %v1555
        %2692 = vmatpush.msra.mxu0 %v1551
        %2693 = vmatpush.msra.mxu0 %v1547
        %2694 = vmatpush.msra.mxu0 %v1543
        %2695 = vmatpush.msra.mxu0 %v1539
        %2696 = vmatpush.msra.mxu0 %v1535
        %2697 = vmatpush.msra.mxu0 %v1531
        %2698 = vmatpush.msra.mxu0 %v1527
        %2699 = vmatpush.msra.mxu0 %v1523
        %2700 = vmatpush.msra.mxu0 %v1519
        %2701 = vmatmul.f32.gmra.mxu0 %v1774
        %v2702 = vpop.f32.mrf.mxu0
        %v2703 = vadd.f32 %v2683, %v2702
        %2704 = vdwg.mxu0
        %2705 = vmatpush.msra.mxu0 %v1643
        %2706 = vmatpush.msra.mxu0 %v1639
        %2707 = vmatpush.msra.mxu0 %v1635
        %2708 = vmatpush.msra.mxu0 %v1631
        %2709 = vmatpush.msra.mxu0 %v1627
        %2710 = vmatpush.msra.mxu0 %v1623
        %2711 = vmatpush.msra.mxu0 %v1619
        %2712 = vmatpush.msra.mxu0 %v1615
        %2713 = vmatpush.msra.mxu0 %v1611
        %2714 = vmatpush.msra.mxu0 %v1607
        %2715 = vmatpush.msra.mxu0 %v1603
        %2716 = vmatpush.msra.mxu0 %v1599
        %2717 = vmatpush.msra.mxu0 %v1595
        %2718 = vmatpush.msra.mxu0 %v1591
        %2719 = vmatpush.msra.mxu0 %v1587
        %2720 = vmatpush.msra.mxu0 %v1583
        %2721 = vmatmul.f32.gmra.mxu0 %v1775
        %v2722 = vpop.f32.mrf.mxu0
        %v2723 = vadd.f32 %v2703, %v2722
        %2724 = vdwg.mxu0
        %2725 = vmatpush.msra.mxu0 %v1707
        %2726 = vmatpush.msra.mxu0 %v1703
        %2727 = vmatpush.msra.mxu0 %v1699
        %2728 = vmatpush.msra.mxu0 %v1695
        %2729 = vmatpush.msra.mxu0 %v1691
        %2730 = vmatpush.msra.mxu0 %v1687
        %2731 = vmatpush.msra.mxu0 %v1683
        %2732 = vmatpush.msra.mxu0 %v1679
        %2733 = vmatpush.msra.mxu0 %v1675
        %2734 = vmatpush.msra.mxu0 %v1671
        %2735 = vmatpush.msra.mxu0 %v1667
        %2736 = vmatpush.msra.mxu0 %v1663
        %2737 = vmatpush.msra.mxu0 %v1659
        %2738 = vmatpush.msra.mxu0 %v1655
        %2739 = vmatpush.msra.mxu0 %v1651
        %2740 = vmatpush.msra.mxu0 %v1647
        %2741 = vmatmul.f32.gmra.mxu0 %v1776
        %v2742 = vpop.f32.mrf.mxu0
        %v2743 = vadd.f32 %v2723, %v2742
        %2744 = vdwg.mxu0
        %2745 = vmatpush.msra.mxu0 0.0
        %2746 = vmatpush.msra.mxu0 0.0
        %2747 = vmatpush.msra.mxu0 0.0
        %2748 = vmatpush.msra.mxu0 0.0
        %2749 = vmatpush.msra.mxu0 %v1755
        %2750 = vmatpush.msra.mxu0 %v1751
        %2751 = vmatpush.msra.mxu0 %v1747
        %2752 = vmatpush.msra.mxu0 %v1743
        %2753 = vmatpush.msra.mxu0 %v1739
        %2754 = vmatpush.msra.mxu0 %v1735
        %2755 = vmatpush.msra.mxu0 %v1731
        %2756 = vmatpush.msra.mxu0 %v1727
        %2757 = vmatpush.msra.mxu0 %v1723
        %2758 = vmatpush.msra.mxu0 %v1719
        %2759 = vmatpush.msra.mxu0 %v1715
        %2760 = vmatpush.msra.mxu0 %v1711
        %2761 = vmatmul.f32.gmra.mxu0 %v1803
        %v2762 = vpop.f32.mrf.mxu0
        %v2763 = vadd.f32 %v2743, %v2762
        %2764 = vdwg.mxu0
        %2765 = vmatpush.msra.mxu0 %v812
        %2766 = vmatpush.msra.mxu0 %v808
        %2767 = vmatpush.msra.mxu0 %v804
        %2768 = vmatpush.msra.mxu0 %v800
        %2769 = vmatpush.msra.mxu0 %v796
        %2770 = vmatpush.msra.mxu0 %v792
        %2771 = vmatpush.msra.mxu0 %v788
        %2772 = vmatpush.msra.mxu0 %v784
        %2773 = vmatpush.msra.mxu0 %v780
        %2774 = vmatpush.msra.mxu0 %v776
        %2775 = vmatpush.msra.mxu0 %v772
        %2776 = vmatpush.msra.mxu0 %v768
        %2777 = vmatpush.msra.mxu0 %v764
        %2778 = vmatpush.msra.mxu0 %v760
        %2779 = vmatpush.msra.mxu0 %v756
        %2780 = vmatpush.msra.mxu0 %v752
        %2781 = vmatmul.f32.gmra.mxu0 %v1762
        %v2782 = vpop.f32.mrf.mxu0
        %v2783 = vadd.f32 %v1797, %v2782
        %2784 = vdwg.mxu0
        %2785 = vmatpush.msra.mxu0 %v876
        %2786 = vmatpush.msra.mxu0 %v872
        %2787 = vmatpush.msra.mxu0 %v868
        %2788 = vmatpush.msra.mxu0 %v864
        %2789 = vmatpush.msra.mxu0 %v860
        %2790 = vmatpush.msra.mxu0 %v856
        %2791 = vmatpush.msra.mxu0 %v852
        %2792 = vmatpush.msra.mxu0 %v848
        %2793 = vmatpush.msra.mxu0 %v844
        %2794 = vmatpush.msra.mxu0 %v840
        %2795 = vmatpush.msra.mxu0 %v836
        %2796 = vmatpush.msra.mxu0 %v832
        %2797 = vmatpush.msra.mxu0 %v828
        %2798 = vmatpush.msra.mxu0 %v824
        %2799 = vmatpush.msra.mxu0 %v820
        %2800 = vmatpush.msra.mxu0 %v816
        %2801 = vmatmul.f32.gmra.mxu0 %v1763
        %v2802 = vpop.f32.mrf.mxu0
        %v2803 = vadd.f32 %v2783, %v2802
        %2804 = vdwg.mxu0
        %2805 = vmatpush.msra.mxu0 %v940
        %2806 = vmatpush.msra.mxu0 %v936
        %2807 = vmatpush.msra.mxu0 %v932
        %2808 = vmatpush.msra.mxu0 %v928
        %2809 = vmatpush.msra.mxu0 %v924
        %2810 = vmatpush.msra.mxu0 %v920
        %2811 = vmatpush.msra.mxu0 %v916
        %2812 = vmatpush.msra.mxu0 %v912
        %2813 = vmatpush.msra.mxu0 %v908
        %2814 = vmatpush.msra.mxu0 %v904
        %2815 = vmatpush.msra.mxu0 %v900
        %2816 = vmatpush.msra.mxu0 %v896
        %2817 = vmatpush.msra.mxu0 %v892
        %2818 = vmatpush.msra.mxu0 %v888
        %2819 = vmatpush.msra.mxu0 %v884
        %2820 = vmatpush.msra.mxu0 %v880
        %2821 = vmatmul.f32.gmra.mxu0 %v1764
        %v2822 = vpop.f32.mrf.mxu0
        %v2823 = vadd.f32 %v2803, %v2822
        %2824 = vdwg.mxu0
        %2825 = vmatpush.msra.mxu0 %v1004
        %2826 = vmatpush.msra.mxu0 %v1000
        %2827 = vmatpush.msra.mxu0 %v996
        %2828 = vmatpush.msra.mxu0 %v992
        %2829 = vmatpush.msra.mxu0 %v988
        %2830 = vmatpush.msra.mxu0 %v984
        %2831 = vmatpush.msra.mxu0 %v980
        %2832 = vmatpush.msra.mxu0 %v976
        %2833 = vmatpush.msra.mxu0 %v972
        %2834 = vmatpush.msra.mxu0 %v968
        %2835 = vmatpush.msra.mxu0 %v964
        %2836 = vmatpush.msra.mxu0 %v960
        %2837 = vmatpush.msra.mxu0 %v956
        %2838 = vmatpush.msra.mxu0 %v952
        %2839 = vmatpush.msra.mxu0 %v948
        %2840 = vmatpush.msra.mxu0 %v944
        %2841 = vmatmul.f32.gmra.mxu0 %v1765
        %v2842 = vpop.f32.mrf.mxu0
        %v2843 = vadd.f32 %v2823, %v2842
        %2844 = vdwg.mxu0
        %2845 = vmatpush.msra.mxu0 %v1068
        %2846 = vmatpush.msra.mxu0 %v1064
        %2847 = vmatpush.msra.mxu0 %v1060
        %2848 = vmatpush.msra.mxu0 %v1056
        %2849 = vmatpush.msra.mxu0 %v1052
        %2850 = vmatpush.msra.mxu0 %v1048
        %2851 = vmatpush.msra.mxu0 %v1044
        %2852 = vmatpush.msra.mxu0 %v1040
        %2853 = vmatpush.msra.mxu0 %v1036
        %2854 = vmatpush.msra.mxu0 %v1032
        %2855 = vmatpush.msra.mxu0 %v1028
        %2856 = vmatpush.msra.mxu0 %v1024
        %2857 = vmatpush.msra.mxu0 %v1020
        %2858 = vmatpush.msra.mxu0 %v1016
        %2859 = vmatpush.msra.mxu0 %v1012
        %2860 = vmatpush.msra.mxu0 %v1008
        %2861 = vmatmul.f32.gmra.mxu0 %v1766
        %v2862 = vpop.f32.mrf.mxu0
        %v2863 = vadd.f32 %v2843, %v2862
        %2864 = vdwg.mxu0
        %2865 = vmatpush.msra.mxu0 %v1132
        %2866 = vmatpush.msra.mxu0 %v1128
        %2867 = vmatpush.msra.mxu0 %v1124
        %2868 = vmatpush.msra.mxu0 %v1120
        %2869 = vmatpush.msra.mxu0 %v1116
        %2870 = vmatpush.msra.mxu0 %v1112
        %2871 = vmatpush.msra.mxu0 %v1108
        %2872 = vmatpush.msra.mxu0 %v1104
        %2873 = vmatpush.msra.mxu0 %v1100
        %2874 = vmatpush.msra.mxu0 %v1096
        %2875 = vmatpush.msra.mxu0 %v1092
        %2876 = vmatpush.msra.mxu0 %v1088
        %2877 = vmatpush.msra.mxu0 %v1084
        %2878 = vmatpush.msra.mxu0 %v1080
        %2879 = vmatpush.msra.mxu0 %v1076
        %2880 = vmatpush.msra.mxu0 %v1072
        %2881 = vmatmul.f32.gmra.mxu0 %v1767
        %v2882 = vpop.f32.mrf.mxu0
        %v2883 = vadd.f32 %v2863, %v2882
        %2884 = vdwg.mxu0
        %2885 = vmatpush.msra.mxu0 %v1196
        %2886 = vmatpush.msra.mxu0 %v1192
        %2887 = vmatpush.msra.mxu0 %v1188
        %2888 = vmatpush.msra.mxu0 %v1184
        %2889 = vmatpush.msra.mxu0 %v1180
        %2890 = vmatpush.msra.mxu0 %v1176
        %2891 = vmatpush.msra.mxu0 %v1172
        %2892 = vmatpush.msra.mxu0 %v1168
        %2893 = vmatpush.msra.mxu0 %v1164
        %2894 = vmatpush.msra.mxu0 %v1160
        %2895 = vmatpush.msra.mxu0 %v1156
        %2896 = vmatpush.msra.mxu0 %v1152
        %2897 = vmatpush.msra.mxu0 %v1148
        %2898 = vmatpush.msra.mxu0 %v1144
        %2899 = vmatpush.msra.mxu0 %v1140
        %2900 = vmatpush.msra.mxu0 %v1136
        %2901 = vmatmul.f32.gmra.mxu0 %v1768
        %v2902 = vpop.f32.mrf.mxu0
        %v2903 = vadd.f32 %v2883, %v2902
        %2904 = vdwg.mxu0
        %2905 = vmatpush.msra.mxu0 %v1260
        %2906 = vmatpush.msra.mxu0 %v1256
        %2907 = vmatpush.msra.mxu0 %v1252
        %2908 = vmatpush.msra.mxu0 %v1248
        %2909 = vmatpush.msra.mxu0 %v1244
        %2910 = vmatpush.msra.mxu0 %v1240
        %2911 = vmatpush.msra.mxu0 %v1236
        %2912 = vmatpush.msra.mxu0 %v1232
        %2913 = vmatpush.msra.mxu0 %v1228
        %2914 = vmatpush.msra.mxu0 %v1224
        %2915 = vmatpush.msra.mxu0 %v1220
        %2916 = vmatpush.msra.mxu0 %v1216
        %2917 = vmatpush.msra.mxu0 %v1212
        %2918 = vmatpush.msra.mxu0 %v1208
        %2919 = vmatpush.msra.mxu0 %v1204
        %2920 = vmatpush.msra.mxu0 %v1200
        %2921 = vmatmul.f32.gmra.mxu0 %v1769
        %v2922 = vpop.f32.mrf.mxu0
        %v2923 = vadd.f32 %v2903, %v2922
        %2924 = vdwg.mxu0
        %2925 = vmatpush.msra.mxu0 %v1324
        %2926 = vmatpush.msra.mxu0 %v1320
        %2927 = vmatpush.msra.mxu0 %v1316
        %2928 = vmatpush.msra.mxu0 %v1312
        %2929 = vmatpush.msra.mxu0 %v1308
        %2930 = vmatpush.msra.mxu0 %v1304
        %2931 = vmatpush.msra.mxu0 %v1300
        %2932 = vmatpush.msra.mxu0 %v1296
        %2933 = vmatpush.msra.mxu0 %v1292
        %2934 = vmatpush.msra.mxu0 %v1288
        %2935 = vmatpush.msra.mxu0 %v1284
        %2936 = vmatpush.msra.mxu0 %v1280
        %2937 = vmatpush.msra.mxu0 %v1276
        %2938 = vmatpush.msra.mxu0 %v1272
        %2939 = vmatpush.msra.mxu0 %v1268
        %2940 = vmatpush.msra.mxu0 %v1264
        %2941 = vmatmul.f32.gmra.mxu0 %v1770
        %v2942 = vpop.f32.mrf.mxu0
        %v2943 = vadd.f32 %v2923, %v2942
        %2944 = vdwg.mxu0
        %2945 = vmatpush.msra.mxu0 %v1388
        %2946 = vmatpush.msra.mxu0 %v1384
        %2947 = vmatpush.msra.mxu0 %v1380
        %2948 = vmatpush.msra.mxu0 %v1376
        %2949 = vmatpush.msra.mxu0 %v1372
        %2950 = vmatpush.msra.mxu0 %v1368
        %2951 = vmatpush.msra.mxu0 %v1364
        %2952 = vmatpush.msra.mxu0 %v1360
        %2953 = vmatpush.msra.mxu0 %v1356
        %2954 = vmatpush.msra.mxu0 %v1352
        %2955 = vmatpush.msra.mxu0 %v1348
        %2956 = vmatpush.msra.mxu0 %v1344
        %2957 = vmatpush.msra.mxu0 %v1340
        %2958 = vmatpush.msra.mxu0 %v1336
        %2959 = vmatpush.msra.mxu0 %v1332
        %2960 = vmatpush.msra.mxu0 %v1328
        %2961 = vmatmul.f32.gmra.mxu0 %v1771
        %v2962 = vpop.f32.mrf.mxu0
        %v2963 = vadd.f32 %v2943, %v2962
        %2964 = vdwg.mxu0
        %2965 = vmatpush.msra.mxu0 %v1452
        %2966 = vmatpush.msra.mxu0 %v1448
        %2967 = vmatpush.msra.mxu0 %v1444
        %2968 = vmatpush.msra.mxu0 %v1440
        %2969 = vmatpush.msra.mxu0 %v1436
        %2970 = vmatpush.msra.mxu0 %v1432
        %2971 = vmatpush.msra.mxu0 %v1428
        %2972 = vmatpush.msra.mxu0 %v1424
        %2973 = vmatpush.msra.mxu0 %v1420
        %2974 = vmatpush.msra.mxu0 %v1416
        %2975 = vmatpush.msra.mxu0 %v1412
        %2976 = vmatpush.msra.mxu0 %v1408
        %2977 = vmatpush.msra.mxu0 %v1404
        %2978 = vmatpush.msra.mxu0 %v1400
        %2979 = vmatpush.msra.mxu0 %v1396
        %2980 = vmatpush.msra.mxu0 %v1392
        %2981 = vmatmul.f32.gmra.mxu0 %v1772
        %v2982 = vpop.f32.mrf.mxu0
        %v2983 = vadd.f32 %v2963, %v2982
        %2984 = vdwg.mxu0
        %2985 = vmatpush.msra.mxu0 %v1516
        %2986 = vmatpush.msra.mxu0 %v1512
        %2987 = vmatpush.msra.mxu0 %v1508
        %2988 = vmatpush.msra.mxu0 %v1504
        %2989 = vmatpush.msra.mxu0 %v1500
        %2990 = vmatpush.msra.mxu0 %v1496
        %2991 = vmatpush.msra.mxu0 %v1492
        %2992 = vmatpush.msra.mxu0 %v1488
        %2993 = vmatpush.msra.mxu0 %v1484
        %2994 = vmatpush.msra.mxu0 %v1480
        %2995 = vmatpush.msra.mxu0 %v1476
        %2996 = vmatpush.msra.mxu0 %v1472
        %2997 = vmatpush.msra.mxu0 %v1468
        %2998 = vmatpush.msra.mxu0 %v1464
        %2999 = vmatpush.msra.mxu0 %v1460
        %3000 = vmatpush.msra.mxu0 %v1456
        %3001 = vmatmul.f32.gmra.mxu0 %v1773
        %v3002 = vpop.f32.mrf.mxu0
        %v3003 = vadd.f32 %v2983, %v3002
        %3004 = vdwg.mxu0
        %3005 = vmatpush.msra.mxu0 %v1580
        %3006 = vmatpush.msra.mxu0 %v1576
        %3007 = vmatpush.msra.mxu0 %v1572
        %3008 = vmatpush.msra.mxu0 %v1568
        %3009 = vmatpush.msra.mxu0 %v1564
        %3010 = vmatpush.msra.mxu0 %v1560
        %3011 = vmatpush.msra.mxu0 %v1556
        %3012 = vmatpush.msra.mxu0 %v1552
        %3013 = vmatpush.msra.mxu0 %v1548
        %3014 = vmatpush.msra.mxu0 %v1544
        %3015 = vmatpush.msra.mxu0 %v1540
        %3016 = vmatpush.msra.mxu0 %v1536
        %3017 = vmatpush.msra.mxu0 %v1532
        %3018 = vmatpush.msra.mxu0 %v1528
        %3019 = vmatpush.msra.mxu0 %v1524
        %3020 = vmatpush.msra.mxu0 %v1520
        %3021 = vmatmul.f32.gmra.mxu0 %v1774
        %v3022 = vpop.f32.mrf.mxu0
        %v3023 = vadd.f32 %v3003, %v3022
        %3024 = vdwg.mxu0
        %3025 = vmatpush.msra.mxu0 %v1644
        %3026 = vmatpush.msra.mxu0 %v1640
        %3027 = vmatpush.msra.mxu0 %v1636
        %3028 = vmatpush.msra.mxu0 %v1632
        %3029 = vmatpush.msra.mxu0 %v1628
        %3030 = vmatpush.msra.mxu0 %v1624
        %3031 = vmatpush.msra.mxu0 %v1620
        %3032 = vmatpush.msra.mxu0 %v1616
        %3033 = vmatpush.msra.mxu0 %v1612
        %3034 = vmatpush.msra.mxu0 %v1608
        %3035 = vmatpush.msra.mxu0 %v1604
        %3036 = vmatpush.msra.mxu0 %v1600
        %3037 = vmatpush.msra.mxu0 %v1596
        %3038 = vmatpush.msra.mxu0 %v1592
        %3039 = vmatpush.msra.mxu0 %v1588
        %3040 = vmatpush.msra.mxu0 %v1584
        %3041 = vmatmul.f32.gmra.mxu0 %v1775
        %v3042 = vpop.f32.mrf.mxu0
        %v3043 = vadd.f32 %v3023, %v3042
        %3044 = vdwg.mxu0
        %3045 = vmatpush.msra.mxu0 %v1708
        %3046 = vmatpush.msra.mxu0 %v1704
        %3047 = vmatpush.msra.mxu0 %v1700
        %3048 = vmatpush.msra.mxu0 %v1696
        %3049 = vmatpush.msra.mxu0 %v1692
        %3050 = vmatpush.msra.mxu0 %v1688
        %3051 = vmatpush.msra.mxu0 %v1684
        %3052 = vmatpush.msra.mxu0 %v1680
        %3053 = vmatpush.msra.mxu0 %v1676
        %3054 = vmatpush.msra.mxu0 %v1672
        %3055 = vmatpush.msra.mxu0 %v1668
        %3056 = vmatpush.msra.mxu0 %v1664
        %3057 = vmatpush.msra.mxu0 %v1660
        %3058 = vmatpush.msra.mxu0 %v1656
        %3059 = vmatpush.msra.mxu0 %v1652
        %3060 = vmatpush.msra.mxu0 %v1648
        %3061 = vmatmul.f32.gmra.mxu0 %v1776
        %v3062 = vpop.f32.mrf.mxu0
        %v3063 = vadd.f32 %v3043, %v3062
        %3064 = vdwg.mxu0
        %3065 = vmatpush.msra.mxu0 0.0
        %3066 = vmatpush.msra.mxu0 0.0
        %3067 = vmatpush.msra.mxu0 0.0
        %3068 = vmatpush.msra.mxu0 0.0
        %3069 = vmatpush.msra.mxu0 %v1756
        %3070 = vmatpush.msra.mxu0 %v1752
        %3071 = vmatpush.msra.mxu0 %v1748
        %3072 = vmatpush.msra.mxu0 %v1744
        %3073 = vmatpush.msra.mxu0 %v1740
        %3074 = vmatpush.msra.mxu0 %v1736
        %3075 = vmatpush.msra.mxu0 %v1732
        %3076 = vmatpush.msra.mxu0 %v1728
        %3077 = vmatpush.msra.mxu0 %v1724
        %3078 = vmatpush.msra.mxu0 %v1720
        %3079 = vmatpush.msra.mxu0 %v1716
        %3080 = vmatpush.msra.mxu0 %v1712
        %3081 = vmatmul.f32.gmra.mxu0 %v1803
        %v3082 = vpop.f32.mrf.mxu0
        %v3083 = vadd.f32 %v3063, %v3082
        %3084 = vdwg.mxu0
        %v3089 = vrot.slane %v2443, 7
        %v3090 = vrot.slane %v2763, 6
        %v3091 = vrot.slane %v3083, 5
        %vm3092 = vcmask 1040384
        %v3093 = vsel %vm3092, %v2123, %v3089
        %vm3094 = vcmask 1042434
        %v3095 = vsel %vm3094, %v3090, %v3091
        %vm3096 = vcmask 1041408
        %v3097 = vsel %vm3096, %v3093, %v3095
        %v3099 = vlaneseq
        %vm3100 = vcmp.ge.s32.totalorder %v3099, 0
        %vm3101 = vcmp.lt.s32.totalorder %v3099, 512
        %vm3102 = vmand %vm3100, %vm3101
        %3103 = vst.msk [vmem:[%s241] sm:$0xf] %vm3102, %v3097
        %s3104 = sand.u32 %s102, 1
        %s3105 = scalar_lea.sflag [#allocation4], %s3104
        %s3106 = sand.u32 %s102, 1
        %s3107 = smul.addr %s3106, 4
        %s3108 = scalar_lea.vmem [#allocation8], %s3107
        // Predicated region
        $region45: #{tpu_custom_call.1} parent=31 // pred_check
          %p3109 = pneg %p112
        $region46: #{tpu_custom_call.1} parent=31 // pred_check_branch
          %3111 = sbr.rel (%p3109) target = $region48
        $region47: #{tpu_custom_call.1} parent=31 // pred_region
          %s3112 = smul.u32 4, %s21
          %3114 = vsyncadd %s3105, 0
          %s3115 = scalar_lea.hbm %s3, %s3112
          %s3117 = sshll.u32 %s3108, 4
          %s3118 = int_to_ptr.vmem [resolvable:$true] %s3117
          %s3119 = sshll.u32 %s3115, 4
          %s3120 = int_to_ptr.hbm [resolvable:$true] %s3119
          %3122 = dma.vmem_to_hbm [thread:$0]  %s3118, 64, %s3120, %s3105
        $region48: #{tpu_custom_call.1} parent=31 // pred_fallthru
          _
      $region32: #{tpu_custom_call.1} parent=5 // pred_fallthru
        _
      %p3123 = scmp.le.s32.totalorder 2, %s16
      // Predicated region
      $region49: #{tpu_custom_call.1} parent=5 // pred_check
        %p3124 = pneg %p3123
      $region50: #{tpu_custom_call.1} parent=5 // pred_check_branch
        %3126 = sbr.rel (%p3124) target = $region52
      $region51: #{tpu_custom_call.1} parent=5 // pred_region
        %s3127 = ssub.s32 %s16, 2
        // Predicated region
        $region53: #{tpu_custom_call.1} parent=51 // pred_check
          %p3128 = pneg %p118
        $region54: #{tpu_custom_call.1} parent=51 // pred_check_branch
          %3130 = sbr.rel (%p3128) target = $region56
        $region55: #{tpu_custom_call.1} parent=51 // pred_region
          %s3131 = sand.u32 %s103, 1
          %s3132 = scalar_lea.sflag [#allocation4], %s3131
          %s3133 = sand.u32 %s103, 1
          %s3134 = smul.addr %s3133, 4
          %s3135 = scalar_lea.vmem [#allocation8], %s3134
          %3137 = dma.done %s3132, 64
        $region56: #{tpu_custom_call.1} parent=51 // pred_fallthru
          _
      $region52: #{tpu_custom_call.1} parent=5 // pred_fallthru
        _
    $region6: #{tpu_custom_call.1} parent=1 // loop_footer
      %s20 = sadd.s32 1, %s16
    $region7: #{tpu_custom_call.1} parent=1 // loop_footer_branch
      %15 = sbr.rel target = $region3
    $region8: #{tpu_custom_call.1} parent=1 // loop_exit
      _
    %3138 = vsyncpa [#allocation3], 1
    %s3139 = scalar_lea.sflag [#allocation3], 1
    %3140 = vsyncpa %s3139, 1
    %3141 = vsyncpa [#allocation6], 1
    %s3142 = scalar_lea.sflag [#allocation6], 1
    %3143 = vsyncpa %s3142, 1
    %3144 = vsyncpa [#allocation4], 1
    %s3145 = scalar_lea.sflag [#allocation4], 1
    %3146 = vsyncpa %s3145, 1

</llo_original>
